<compile_context>
chip_gen: v5e
topology: v5e:2x2
jax: 0.10.0
libtpu: 0.0.40
codegen_flags: <defaults>
</compile_context>

<pallas_src>
import jax
import jax.numpy as jnp
from jax.experimental import pallas as pl
from jax.experimental.pallas import tpu as pltpu


# ------------------------- static network geometry -------------------------

_W0 = 28                         # canvas width, fixed through the whole network
_LCAN = 896                      # flat canvas length (28*28 = 784 padded to 7*128)
_KMAX = 72                       # max fused contraction depth (3*3*8)
_CMAX = 16                       # max channel count

# (cin, cout, ksize, canvas-dilation) for convblock1..7.  After the 2x2
# maxpool the feature map is kept in a "dilation-2" representation on the same
# 28-wide canvas, so later 3x3 convs use canvas-dilation 2.
_LAYERS = [
    (1,   8, 3, 1),
    (8,   8, 3, 1),
    (8,  16, 3, 1),
    (16,  8, 1, 2),
    (8,   8, 3, 2),
    (8,  16, 3, 2),
    (16, 10, 1, 2),
]


# ----------------------------- in-kernel helpers -----------------------------

def _conv_bn_relu(x, w, b, scratch, *, cin, cout, ksize, dil):
    """Valid conv (+folded BN bias, ReLU) on the fixed 896-lane canvas.

    x:       (cin, _LCAN) activation value
    w:       (16, 72) packed folded-weight slab for this layer
    b:       (16, 1) packed folded-bias slab for this layer
    scratch: (72, _LCAN) VMEM scratch used to stack shifted taps
    """
    kk = ksize * ksize
    offs = [dil * (dy * _W0 + dx) for dy in range(ksize) for dx in range(ksize)]

    if cin == 1:
        # Single input channel (layer 1): 9 broadcast multiply-adds on the VPU.
        # Tiny fraction of total work; avoids sub-tile scratch stores.
        acc = None
        for t, off in enumerate(offs):
            tap = x if off == 0 else pltpu.roll(x, _LCAN - off, axis=1)
            term = w[0:cout, t:t + 1] * tap                    # (cout,1)*(1,L)
            acc = term if acc is None else acc + term
        y = acc
    elif ksize == 1:
        y = jnp.dot(w[0:cout, 0:cin], x,
                    preferred_element_type=jnp.float32)        # (cout, L)
    else:
        # Stack the k*k shifted taps into VMEM scratch (aligned 8-row stores),
        # then ONE MXU matmul with K = k*k*cin = 72.
        for t, off in enumerate(offs):
            tap = x if off == 0 else pltpu.roll(x, _LCAN - off, axis=1)
            scratch[t * cin:(t + 1) * cin, :] = tap
        xs = scratch[0:kk * cin, :]                            # (72, L)
        y = jnp.dot(w[0:cout, 0:kk * cin], xs,
                    preferred_element_type=jnp.float32)        # (cout, L)

    return jnp.maximum(y + b[0:cout], 0.0)


def _maxpool2x2(x):
    """2x2/stride-2 maxpool; result kept in a dilation-2 canvas representation."""
    m = jnp.maximum(x, pltpu.roll(x, _LCAN - 1, axis=1))        # x[p+1]
    m = jnp.maximum(m, pltpu.roll(x, _LCAN - _W0, axis=1))      # x[p+28]
    return jnp.maximum(m, pltpu.roll(x, _LCAN - _W0 - 1, axis=1))  # x[p+29]


def _net2_kernel(x_ref, mask_ref, w_ref, b_ref, o_ref, scratch):
    bsz = x_ref.shape[0]                                        # images per block

    def body(img, carry):
        x = x_ref[img]                                          # (1, _LCAN)
        for li, (cin, cout, k, dil) in enumerate(_LAYERS):
            x = _conv_bn_relu(x, w_ref[li], b_ref[li], scratch,
                              cin=cin, cout=cout, ksize=k, dil=dil)
            if li == 2:                                         # pool1 after convblock3
                x = _maxpool2x2(x)

        # Global average pool over the 49 valid (dilation-2) 7x7 positions.
        # mask holds 1/49 on those lanes; contracting lane-against-lane puts
        # the 10 channels on lanes: (1, L) x (10, L)^T -> (1, 10).
        gap = jax.lax.dot_general(
            mask_ref[...], x,
            dimension_numbers=(((1,), (1,)), ((), ())),
            preferred_element_type=jnp.float32)
        z = gap - jnp.max(gap, axis=-1, keepdims=True)
        logp = z - jnp.log(jnp.sum(jnp.exp(z), axis=-1, keepdims=True))
        o_ref[img] = logp                                       # (1, 10)
        return carry

    jax.lax.fori_loop(0, bsz, body, 0)


# ----------------------------- parameters -----------------------------

def init_params(key):
    params = []
    for (cin, cout, k, _) in _LAYERS:
        key, kw, k1, k2, k3, k4 = jax.random.split(key, 6)
        fan_in = cin * k * k
        w = jax.random.normal(kw, (cout, cin, k, k), jnp.float32) * (2.0 / fan_in) ** 0.5
        # Deterministic (inference-mode) BatchNorm parameters, folded later.
        gamma = 1.0 + 0.1 * jax.random.normal(k1, (cout,), jnp.float32)
        beta = 0.1 * jax.random.normal(k2, (cout,), jnp.float32)
        mean = 0.1 * jax.random.normal(k3, (cout,), jnp.float32)
        var = 0.5 + jax.random.uniform(k4, (cout,), jnp.float32)
        eps = 1e-5
        scale = gamma / jnp.sqrt(var + eps)
        bias = beta - mean * scale
        params.append((w, scale, bias))
    return params


def _fold_and_pack(params):
    """Fold BN into conv weights and pack all 7 layers into two slabs."""
    w_slab = jnp.zeros((len(_LAYERS), _CMAX, _KMAX), jnp.float32)
    b_slab = jnp.zeros((len(_LAYERS), _CMAX, 1), jnp.float32)
    for li, ((w, scale, bias), (cin, cout, k, _)) in enumerate(zip(params, _LAYERS)):
        wf = w * scale[:, None, None, None]                     # fold BN scale
        # column ordering = (dy, dx, cin)  <->  scratch row t*cin + ci
        wf = jnp.transpose(wf, (0, 2, 3, 1)).reshape(cout, k * k * cin)
        w_slab = w_slab.at[li, :cout, :k * k * cin].set(wf)
        b_slab = b_slab.at[li, :cout, 0].set(bias)
    return w_slab, b_slab


# ----------------------------- forward (wrapper) -----------------------------

def net2_forward(params, x_nchw, *, block_images=8):
    """Net2.forward.  x_nchw: (N, 1, 28, 28) float32.  Returns (N, 10) log-probs."""
    N = x_nchw.shape[0]
    B = max(1, min(block_images, N))
    n_blocks = -(-N // B)
    N_pad = n_blocks * B

    # Input -> zero-padded flat canvas (N_pad, 1, _LCAN).
    x = x_nchw.reshape(N, _W0 * _W0).astype(jnp.float32)
    x = jnp.pad(x, ((0, N_pad - N), (0, _LCAN - _W0 * _W0))).reshape(N_pad, 1, _LCAN)

    # GAP mask: 1/49 at the 49 valid (dilation-2) positions of the final 7x7 map.
    p = jnp.arange(_LCAN)
    r, c = p // _W0, p % _W0
    mask = (((r % 2 == 0) & (r < 14) & (c % 2 == 0) & (c < 14))
            .astype(jnp.float32) / 49.0).reshape(1, _LCAN)

    w_slab, b_slab = _fold_and_pack(params)

    out = pl.pallas_call(
        _net2_kernel,
        out_shape=jax.ShapeDtypeStruct((N_pad, 1, 10), jnp.float32),
        grid=(n_blocks,),
        in_specs=[
            pl.BlockSpec((B, 1, _LCAN), lambda n: (n, 0, 0)),
            pl.BlockSpec((1, _LCAN), lambda n: (0, 0)),
            pl.BlockSpec((len(_LAYERS), _CMAX, _KMAX), lambda n: (0, 0, 0)),
            pl.BlockSpec((len(_LAYERS), _CMAX, 1), lambda n: (0, 0, 0)),
        ],
        out_specs=pl.BlockSpec((B, 1, 10), lambda n: (n, 0, 0)),
        scratch_shapes=[pltpu.VMEM((_KMAX, _LCAN), jnp.float32)],
        compiler_params=pltpu.CompilerParams(
            dimension_semantics=("parallel",)),
    )(x, mask, w_slab, b_slab)
    return out.reshape(N_pad, 10)[:N]


# ----------------------------- pure-XLA reference -----------------------------

def net2_reference(params, x_nchw):
    """Pure-JAX reference with identical (inference-mode) semantics."""
    x = jnp.transpose(x_nchw, (0, 2, 3, 1))                     # NCHW -> NHWC
    for li, (w, scale, bias) in enumerate(params):
        cout, cin, kh, kw = w.shape
        N, H, W, _ = x.shape
        Ho, Wo = H - kh + 1, W - kw + 1
        patches = [x[:, dy:dy + Ho, dx:dx + Wo, :]
                   for dy in range(kh) for dx in range(kw)]
        cols = jnp.concatenate(patches, axis=-1).reshape(N * Ho * Wo, kh * kw * cin)
        wmat = jnp.transpose(w, (2, 3, 1, 0)).reshape(kh * kw * cin, cout)
        y = jnp.maximum((cols @ wmat) * scale + bias, 0.0)
        x = y.reshape(N, Ho, Wo, cout)
        if li == 2:                                             # MaxPool2d(2, 2)
            N_, H_, W_, C_ = x.shape
            x = jnp.max(x.reshape(N_, H_ // 2, 2, W_ // 2, 2, C_), axis=(2, 4))
    m = jnp.mean(x.reshape(x.shape[0], -1, x.shape[-1]), axis=1)   # AvgPool2d(7)
    z = m - jnp.max(m, axis=-1, keepdims=True)
    return z - jnp.log(jnp.sum(jnp.exp(z), axis=-1, keepdims=True))


# ----------------------------- main -----------------------------

if __name__ == "__main__":
    key = jax.random.PRNGKey(0)
    kp, kx = jax.random.split(key)
    params = init_params(kp)
    x = jax.random.normal(kx, (8, 1, 28, 28), jnp.float32)

    fwd = jax.jit(lambda prm, xx: net2_forward(prm, xx, block_images=4))
    out = jax.block_until_ready(fwd(params, x))

    assert out.shape == (8, 10), out.shape
    # log_softmax rows should sum (in prob space) to ~1
    assert bool(jnp.all(jnp.abs(jnp.sum(jnp.exp(out), axis=-1) - 1.0) < 1e-4))
    # match the pure-XLA reference of the same inference-mode network
    ref = net2_reference(params, x)
    assert bool(jnp.allclose(out, ref, atol=3e-3, rtol=3e-3)), \
        float(jnp.max(jnp.abs(out - ref)))
    # TODO(synk): Dropout (p=0.01) is identity at inference and therefore omitted.
    print("KERNEL_OK")
</pallas_src>

<mosaic_0001>
module attributes {stable_mosaic.version = 11 : i64} {
  func.func @_net2_kernel(%arg0: i32, %arg1: memref<4x1x896xf32, #tpu.memory_space<vmem>>, %arg2: memref<1x896xf32, #tpu.memory_space<vmem>>, %arg3: memref<7x16x72xf32, #tpu.memory_space<vmem>>, %arg4: memref<7x16x1xf32, #tpu.memory_space<vmem>>, %arg5: memref<4x1x10xf32, #tpu.memory_space<vmem>>, %arg6: memref<72x896xf32, #tpu.memory_space<vmem>>) attributes {dimension_semantics = [#tpu.dimension_semantics<parallel>], iteration_bounds = array<i64: 2>, scalar_prefetch = 0 : i64, scratch_operands = 1 : i64, tpu.core_type = #tpu.core_type<tc>, window_params = [{transform_indices = @transform_0, window_bounds = array<i64: 4, 1, 896>}, {pipeline_mode = #tpu.pipeline_mode<synchronous>, transform_indices = @transform_1, window_bounds = array<i64: 1, 896>}, {pipeline_mode = #tpu.pipeline_mode<synchronous>, transform_indices = @transform_2, window_bounds = array<i64: 7, 16, 72>}, {pipeline_mode = #tpu.pipeline_mode<synchronous>, transform_indices = @transform_3, window_bounds = array<i64: 7, 16, 1>}, {transform_indices = @transform_4, window_bounds = array<i64: 4, 1, 10>}]} {
    %c0_i32 = arith.constant 0 : i32
    %c4_i32 = arith.constant 4 : i32
    %0 = arith.addi %c0_i32, %c4_i32 : i32
    %c1_i32 = arith.constant 1 : i32
    scf.for %arg7 = %c0_i32 to %0 step %c1_i32  : i32 {
      %1 = arith.index_cast %arg7 : i32 to index
      %c0 = arith.constant 0 : index
      %c0_1 = arith.constant 0 : index
      %2 = vector.load %arg1[%1, %c0, %c0_1] : memref<4x1x896xf32, #tpu.memory_space<vmem>>, vector<1x1x896xf32>
      %3 = vector.shape_cast %2 : vector<1x1x896xf32> to vector<1x896xf32>
      %c0_2 = arith.constant 0 : index
      %c0_3 = arith.constant 0 : index
      %c0_4 = arith.constant 0 : index
      %4 = vector.load %arg3[%c0_2, %c0_3, %c0_4] : memref<7x16x72xf32, #tpu.memory_space<vmem>>, vector<1x16x72xf32>
      %5 = vector.shape_cast %4 : vector<1x16x72xf32> to vector<16x72xf32>
      %c0_5 = arith.constant 0 : index
      %c0_6 = arith.constant 0 : index
      %c0_7 = arith.constant 0 : index
      %6 = vector.load %arg4[%c0_5, %c0_6, %c0_7] : memref<7x16x1xf32, #tpu.memory_space<vmem>>, vector<1x16x1xf32>
      %7 = vector.shape_cast %6 : vector<1x16x1xf32> to vector<16x1xf32>
      %8 = vector.extract_strided_slice %5 {offsets = [0, 0], sizes = [8, 1], strides = [1, 1]} : vector<16x72xf32> to vector<8x1xf32>
      %9 = vector.broadcast %8 : vector<8x1xf32> to vector<8x896xf32>
      %10 = vector.broadcast %3 : vector<1x896xf32> to vector<8x896xf32>
      %11 = arith.mulf %9, %10 : vector<8x896xf32>
      %c895_i32 = arith.constant 895 : i32
      %12 = tpu.dynamic_rotate %3 by %c895_i32 dim 1 : vector<1x896xf32>, i32 -> vector<1x896xf32>
      %13 = vector.extract_strided_slice %5 {offsets = [0, 1], sizes = [8, 1], strides = [1, 1]} : vector<16x72xf32> to vector<8x1xf32>
      %14 = vector.broadcast %13 : vector<8x1xf32> to vector<8x896xf32>
      %15 = vector.broadcast %12 : vector<1x896xf32> to vector<8x896xf32>
      %16 = arith.mulf %14, %15 : vector<8x896xf32>
      %17 = arith.addf %11, %16 : vector<8x896xf32>
      %c894_i32 = arith.constant 894 : i32
      %18 = tpu.dynamic_rotate %3 by %c894_i32 dim 1 : vector<1x896xf32>, i32 -> vector<1x896xf32>
      %19 = vector.extract_strided_slice %5 {offsets = [0, 2], sizes = [8, 1], strides = [1, 1]} : vector<16x72xf32> to vector<8x1xf32>
      %20 = vector.broadcast %19 : vector<8x1xf32> to vector<8x896xf32>
      %21 = vector.broadcast %18 : vector<1x896xf32> to vector<8x896xf32>
      %22 = arith.mulf %20, %21 : vector<8x896xf32>
      %23 = arith.addf %17, %22 : vector<8x896xf32>
      %c868_i32 = arith.constant 868 : i32
      %24 = tpu.dynamic_rotate %3 by %c868_i32 dim 1 : vector<1x896xf32>, i32 -> vector<1x896xf32>
      %25 = vector.extract_strided_slice %5 {offsets = [0, 3], sizes = [8, 1], strides = [1, 1]} : vector<16x72xf32> to vector<8x1xf32>
      %26 = vector.broadcast %25 : vector<8x1xf32> to vector<8x896xf32>
      %27 = vector.broadcast %24 : vector<1x896xf32> to vector<8x896xf32>
      %28 = arith.mulf %26, %27 : vector<8x896xf32>
      %29 = arith.addf %23, %28 : vector<8x896xf32>
      %c867_i32 = arith.constant 867 : i32
      %30 = tpu.dynamic_rotate %3 by %c867_i32 dim 1 : vector<1x896xf32>, i32 -> vector<1x896xf32>
      %31 = vector.extract_strided_slice %5 {offsets = [0, 4], sizes = [8, 1], strides = [1, 1]} : vector<16x72xf32> to vector<8x1xf32>
      %32 = vector.broadcast %31 : vector<8x1xf32> to vector<8x896xf32>
      %33 = vector.broadcast %30 : vector<1x896xf32> to vector<8x896xf32>
      %34 = arith.mulf %32, %33 : vector<8x896xf32>
      %35 = arith.addf %29, %34 : vector<8x896xf32>
      %c866_i32 = arith.constant 866 : i32
      %36 = tpu.dynamic_rotate %3 by %c866_i32 dim 1 : vector<1x896xf32>, i32 -> vector<1x896xf32>
      %37 = vector.extract_strided_slice %5 {offsets = [0, 5], sizes = [8, 1], strides = [1, 1]} : vector<16x72xf32> to vector<8x1xf32>
      %38 = vector.broadcast %37 : vector<8x1xf32> to vector<8x896xf32>
      %39 = vector.broadcast %36 : vector<1x896xf32> to vector<8x896xf32>
      %40 = arith.mulf %38, %39 : vector<8x896xf32>
      %41 = arith.addf %35, %40 : vector<8x896xf32>
      %c840_i32 = arith.constant 840 : i32
      %42 = tpu.dynamic_rotate %3 by %c840_i32 dim 1 : vector<1x896xf32>, i32 -> vector<1x896xf32>
      %43 = vector.extract_strided_slice %5 {offsets = [0, 6], sizes = [8, 1], strides = [1, 1]} : vector<16x72xf32> to vector<8x1xf32>
      %44 = vector.broadcast %43 : vector<8x1xf32> to vector<8x896xf32>
      %45 = vector.broadcast %42 : vector<1x896xf32> to vector<8x896xf32>
      %46 = arith.mulf %44, %45 : vector<8x896xf32>
      %47 = arith.addf %41, %46 : vector<8x896xf32>
      %c839_i32 = arith.constant 839 : i32
      %48 = tpu.dynamic_rotate %3 by %c839_i32 dim 1 : vector<1x896xf32>, i32 -> vector<1x896xf32>
      %49 = vector.extract_strided_slice %5 {offsets = [0, 7], sizes = [8, 1], strides = [1, 1]} : vector<16x72xf32> to vector<8x1xf32>
      %50 = vector.broadcast %49 : vector<8x1xf32> to vector<8x896xf32>
      %51 = vector.broadcast %48 : vector<1x896xf32> to vector<8x896xf32>
      %52 = arith.mulf %50, %51 : vector<8x896xf32>
      %53 = arith.addf %47, %52 : vector<8x896xf32>
      %c838_i32 = arith.constant 838 : i32
      %54 = tpu.dynamic_rotate %3 by %c838_i32 dim 1 : vector<1x896xf32>, i32 -> vector<1x896xf32>
      %55 = vector.extract_strided_slice %5 {offsets = [0, 8], sizes = [8, 1], strides = [1, 1]} : vector<16x72xf32> to vector<8x1xf32>
      %56 = vector.broadcast %55 : vector<8x1xf32> to vector<8x896xf32>
      %57 = vector.broadcast %54 : vector<1x896xf32> to vector<8x896xf32>
      %58 = arith.mulf %56, %57 : vector<8x896xf32>
      %59 = arith.addf %53, %58 : vector<8x896xf32>
      %60 = vector.extract_strided_slice %7 {offsets = [0, 0], sizes = [8, 1], strides = [1, 1]} : vector<16x1xf32> to vector<8x1xf32>
      %61 = vector.broadcast %60 : vector<8x1xf32> to vector<8x896xf32>
      %62 = arith.addf %59, %61 : vector<8x896xf32>
      %cst = arith.constant 0.000000e+00 : f32
      %63 = vector.broadcast %cst : f32 to vector<8x896xf32>
      %64 = arith.maximumf %62, %63 : vector<8x896xf32>
      %c1 = arith.constant 1 : index
      %c0_8 = arith.constant 0 : index
      %c0_9 = arith.constant 0 : index
      %65 = vector.load %arg3[%c1, %c0_8, %c0_9] : memref<7x16x72xf32, #tpu.memory_space<vmem>>, vector<1x16x72xf32>
      %66 = vector.shape_cast %65 : vector<1x16x72xf32> to vector<16x72xf32>
      %c1_10 = arith.constant 1 : index
      %c0_11 = arith.constant 0 : index
      %c0_12 = arith.constant 0 : index
      %67 = vector.load %arg4[%c1_10, %c0_11, %c0_12] : memref<7x16x1xf32, #tpu.memory_space<vmem>>, vector<1x16x1xf32>
      %68 = vector.shape_cast %67 : vector<1x16x1xf32> to vector<16x1xf32>
      %c0_13 = arith.constant 0 : index
      %c0_14 = arith.constant 0 : index
      %69 = vector.load %arg6[%c0_13, %c0_14] : memref<72x896xf32, #tpu.memory_space<vmem>>, vector<8x896xf32>
      tpu.vector_store %arg6[%c0_13, %c0_14], %64 {strides = array<i32>} : memref<72x896xf32, #tpu.memory_space<vmem>>, vector<8x896xf32>,
      %c895_i32_15 = arith.constant 895 : i32
      %70 = tpu.dynamic_rotate %64 by %c895_i32_15 dim 1 : vector<8x896xf32>, i32 -> vector<8x896xf32>
      %c8 = arith.constant 8 : index
      %c0_16 = arith.constant 0 : index
      %71 = vector.load %arg6[%c8, %c0_16] : memref<72x896xf32, #tpu.memory_space<vmem>>, vector<8x896xf32>
      tpu.vector_store %arg6[%c8, %c0_16], %70 {strides = array<i32>} : memref<72x896xf32, #tpu.memory_space<vmem>>, vector<8x896xf32>,
      %c894_i32_17 = arith.constant 894 : i32
      %72 = tpu.dynamic_rotate %64 by %c894_i32_17 dim 1 : vector<8x896xf32>, i32 -> vector<8x896xf32>
      %c16 = arith.constant 16 : index
      %c0_18 = arith.constant 0 : index
      %73 = vector.load %arg6[%c16, %c0_18] : memref<72x896xf32, #tpu.memory_space<vmem>>, vector<8x896xf32>
      tpu.vector_store %arg6[%c16, %c0_18], %72 {strides = array<i32>} : memref<72x896xf32, #tpu.memory_space<vmem>>, vector<8x896xf32>,
      %c868_i32_19 = arith.constant 868 : i32
      %74 = tpu.dynamic_rotate %64 by %c868_i32_19 dim 1 : vector<8x896xf32>, i32 -> vector<8x896xf32>
      %c24 = arith.constant 24 : index
      %c0_20 = arith.constant 0 : index
      %75 = vector.load %arg6[%c24, %c0_20] : memref<72x896xf32, #tpu.memory_space<vmem>>, vector<8x896xf32>
      tpu.vector_store %arg6[%c24, %c0_20], %74 {strides = array<i32>} : memref<72x896xf32, #tpu.memory_space<vmem>>, vector<8x896xf32>,
      %c867_i32_21 = arith.constant 867 : i32
      %76 = tpu.dynamic_rotate %64 by %c867_i32_21 dim 1 : vector<8x896xf32>, i32 -> vector<8x896xf32>
      %c32 = arith.constant 32 : index
      %c0_22 = arith.constant 0 : index
      %77 = vector.load %arg6[%c32, %c0_22] : memref<72x896xf32, #tpu.memory_space<vmem>>, vector<8x896xf32>
      tpu.vector_store %arg6[%c32, %c0_22], %76 {strides = array<i32>} : memref<72x896xf32, #tpu.memory_space<vmem>>, vector<8x896xf32>,
      %c866_i32_23 = arith.constant 866 : i32
      %78 = tpu.dynamic_rotate %64 by %c866_i32_23 dim 1 : vector<8x896xf32>, i32 -> vector<8x896xf32>
      %c40 = arith.constant 40 : index
      %c0_24 = arith.constant 0 : index
      %79 = vector.load %arg6[%c40, %c0_24] : memref<72x896xf32, #tpu.memory_space<vmem>>, vector<8x896xf32>
      tpu.vector_store %arg6[%c40, %c0_24], %78 {strides = array<i32>} : memref<72x896xf32, #tpu.memory_space<vmem>>, vector<8x896xf32>,
      %c840_i32_25 = arith.constant 840 : i32
      %80 = tpu.dynamic_rotate %64 by %c840_i32_25 dim 1 : vector<8x896xf32>, i32 -> vector<8x896xf32>
      %c48 = arith.constant 48 : index
      %c0_26 = arith.constant 0 : index
      %81 = vector.load %arg6[%c48, %c0_26] : memref<72x896xf32, #tpu.memory_space<vmem>>, vector<8x896xf32>
      tpu.vector_store %arg6[%c48, %c0_26], %80 {strides = array<i32>} : memref<72x896xf32, #tpu.memory_space<vmem>>, vector<8x896xf32>,
      %c839_i32_27 = arith.constant 839 : i32
      %82 = tpu.dynamic_rotate %64 by %c839_i32_27 dim 1 : vector<8x896xf32>, i32 -> vector<8x896xf32>
      %c56 = arith.constant 56 : index
      %c0_28 = arith.constant 0 : index
      %83 = vector.load %arg6[%c56, %c0_28] : memref<72x896xf32, #tpu.memory_space<vmem>>, vector<8x896xf32>
      tpu.vector_store %arg6[%c56, %c0_28], %82 {strides = array<i32>} : memref<72x896xf32, #tpu.memory_space<vmem>>, vector<8x896xf32>,
      %c838_i32_29 = arith.constant 838 : i32
      %84 = tpu.dynamic_rotate %64 by %c838_i32_29 dim 1 : vector<8x896xf32>, i32 -> vector<8x896xf32>
      %c64 = arith.constant 64 : index
      %c0_30 = arith.constant 0 : index
      %85 = vector.load %arg6[%c64, %c0_30] : memref<72x896xf32, #tpu.memory_space<vmem>>, vector<8x896xf32>
      tpu.vector_store %arg6[%c64, %c0_30], %84 {strides = array<i32>} : memref<72x896xf32, #tpu.memory_space<vmem>>, vector<8x896xf32>,
      %c0_31 = arith.constant 0 : index
      %c0_32 = arith.constant 0 : index
      %86 = vector.load %arg6[%c0_31, %c0_32] : memref<72x896xf32, #tpu.memory_space<vmem>>, vector<72x896xf32>
      %87 = vector.extract_strided_slice %66 {offsets = [0, 0], sizes = [8, 72], strides = [1, 1]} : vector<16x72xf32> to vector<8x72xf32>
      %cst_33 = arith.constant dense<0.000000e+00> : vector<8x896xf32>
      %88 = tpu.matmul %87, %86, %cst_33 {dimension_numbers = #tpu.dot_dimension_numbers<[1], [0], [0], [1], [0, 0, 1, 1], [], []>} : vector<8x72xf32>, vector<72x896xf32>, vector<8x896xf32> -> vector<8x896xf32>
      %89 = vector.extract_strided_slice %68 {offsets = [0, 0], sizes = [8, 1], strides = [1, 1]} : vector<16x1xf32> to vector<8x1xf32>
      %90 = vector.broadcast %89 : vector<8x1xf32> to vector<8x896xf32>
      %91 = arith.addf %88, %90 : vector<8x896xf32>
      %cst_34 = arith.constant 0.000000e+00 : f32
      %92 = vector.broadcast %cst_34 : f32 to vector<8x896xf32>
      %93 = arith.maximumf %91, %92 : vector<8x896xf32>
      %c2 = arith.constant 2 : index
      %c0_35 = arith.constant 0 : index
      %c0_36 = arith.constant 0 : index
      %94 = vector.load %arg3[%c2, %c0_35, %c0_36] : memref<7x16x72xf32, #tpu.memory_space<vmem>>, vector<1x16x72xf32>
      %95 = vector.shape_cast %94 : vector<1x16x72xf32> to vector<16x72xf32>
      %c2_37 = arith.constant 2 : index
      %c0_38 = arith.constant 0 : index
      %c0_39 = arith.constant 0 : index
      %96 = vector.load %arg4[%c2_37, %c0_38, %c0_39] : memref<7x16x1xf32, #tpu.memory_space<vmem>>, vector<1x16x1xf32>
      %97 = vector.shape_cast %96 : vector<1x16x1xf32> to vector<16x1xf32>
      %c0_40 = arith.constant 0 : index
      %c0_41 = arith.constant 0 : index
      %98 = vector.load %arg6[%c0_40, %c0_41] : memref<72x896xf32, #tpu.memory_space<vmem>>, vector<8x896xf32>
      tpu.vector_store %arg6[%c0_40, %c0_41], %93 {strides = array<i32>} : memref<72x896xf32, #tpu.memory_space<vmem>>, vector<8x896xf32>,
      %c895_i32_42 = arith.constant 895 : i32
      %99 = tpu.dynamic_rotate %93 by %c895_i32_42 dim 1 : vector<8x896xf32>, i32 -> vector<8x896xf32>
      %c8_43 = arith.constant 8 : index
      %c0_44 = arith.constant 0 : index
      %100 = vector.load %arg6[%c8_43, %c0_44] : memref<72x896xf32, #tpu.memory_space<vmem>>, vector<8x896xf32>
      tpu.vector_store %arg6[%c8_43, %c0_44], %99 {strides = array<i32>} : memref<72x896xf32, #tpu.memory_space<vmem>>, vector<8x896xf32>,
      %c894_i32_45 = arith.constant 894 : i32
      %101 = tpu.dynamic_rotate %93 by %c894_i32_45 dim 1 : vector<8x896xf32>, i32 -> vector<8x896xf32>
      %c16_46 = arith.constant 16 : index
      %c0_47 = arith.constant 0 : index
      %102 = vector.load %arg6[%c16_46, %c0_47] : memref<72x896xf32, #tpu.memory_space<vmem>>, vector<8x896xf32>
      tpu.vector_store %arg6[%c16_46, %c0_47], %101 {strides = array<i32>} : memref<72x896xf32, #tpu.memory_space<vmem>>, vector<8x896xf32>,
      %c868_i32_48 = arith.constant 868 : i32
      %103 = tpu.dynamic_rotate %93 by %c868_i32_48 dim 1 : vector<8x896xf32>, i32 -> vector<8x896xf32>
      %c24_49 = arith.constant 24 : index
      %c0_50 = arith.constant 0 : index
      %104 = vector.load %arg6[%c24_49, %c0_50] : memref<72x896xf32, #tpu.memory_space<vmem>>, vector<8x896xf32>
      tpu.vector_store %arg6[%c24_49, %c0_50], %103 {strides = array<i32>} : memref<72x896xf32, #tpu.memory_space<vmem>>, vector<8x896xf32>,
      %c867_i32_51 = arith.constant 867 : i32
      %105 = tpu.dynamic_rotate %93 by %c867_i32_51 dim 1 : vector<8x896xf32>, i32 -> vector<8x896xf32>
      %c32_52 = arith.constant 32 : index
      %c0_53 = arith.constant 0 : index
      %106 = vector.load %arg6[%c32_52, %c0_53] : memref<72x896xf32, #tpu.memory_space<vmem>>, vector<8x896xf32>
      tpu.vector_store %arg6[%c32_52, %c0_53], %105 {strides = array<i32>} : memref<72x896xf32, #tpu.memory_space<vmem>>, vector<8x896xf32>,
      %c866_i32_54 = arith.constant 866 : i32
      %107 = tpu.dynamic_rotate %93 by %c866_i32_54 dim 1 : vector<8x896xf32>, i32 -> vector<8x896xf32>
      %c40_55 = arith.constant 40 : index
      %c0_56 = arith.constant 0 : index
      %108 = vector.load %arg6[%c40_55, %c0_56] : memref<72x896xf32, #tpu.memory_space<vmem>>, vector<8x896xf32>
      tpu.vector_store %arg6[%c40_55, %c0_56], %107 {strides = array<i32>} : memref<72x896xf32, #tpu.memory_space<vmem>>, vector<8x896xf32>,
      %c840_i32_57 = arith.constant 840 : i32
      %109 = tpu.dynamic_rotate %93 by %c840_i32_57 dim 1 : vector<8x896xf32>, i32 -> vector<8x896xf32>
      %c48_58 = arith.constant 48 : index
      %c0_59 = arith.constant 0 : index
      %110 = vector.load %arg6[%c48_58, %c0_59] : memref<72x896xf32, #tpu.memory_space<vmem>>, vector<8x896xf32>
      tpu.vector_store %arg6[%c48_58, %c0_59], %109 {strides = array<i32>} : memref<72x896xf32, #tpu.memory_space<vmem>>, vector<8x896xf32>,
      %c839_i32_60 = arith.constant 839 : i32
      %111 = tpu.dynamic_rotate %93 by %c839_i32_60 dim 1 : vector<8x896xf32>, i32 -> vector<8x896xf32>
      %c56_61 = arith.constant 56 : index
      %c0_62 = arith.constant 0 : index
      %112 = vector.load %arg6[%c56_61, %c0_62] : memref<72x896xf32, #tpu.memory_space<vmem>>, vector<8x896xf32>
      tpu.vector_store %arg6[%c56_61, %c0_62], %111 {strides = array<i32>} : memref<72x896xf32, #tpu.memory_space<vmem>>, vector<8x896xf32>,
      %c838_i32_63 = arith.constant 838 : i32
      %113 = tpu.dynamic_rotate %93 by %c838_i32_63 dim 1 : vector<8x896xf32>, i32 -> vector<8x896xf32>
      %c64_64 = arith.constant 64 : index
      %c0_65 = arith.constant 0 : index
      %114 = vector.load %arg6[%c64_64, %c0_65] : memref<72x896xf32, #tpu.memory_space<vmem>>, vector<8x896xf32>
      tpu.vector_store %arg6[%c64_64, %c0_65], %113 {strides = array<i32>} : memref<72x896xf32, #tpu.memory_space<vmem>>, vector<8x896xf32>,
      %c0_66 = arith.constant 0 : index
      %c0_67 = arith.constant 0 : index
      %115 = vector.load %arg6[%c0_66, %c0_67] : memref<72x896xf32, #tpu.memory_space<vmem>>, vector<72x896xf32>
      %cst_68 = arith.constant dense<0.000000e+00> : vector<16x896xf32>
      %116 = tpu.matmul %95, %115, %cst_68 {dimension_numbers = #tpu.dot_dimension_numbers<[1], [0], [0], [1], [0, 0, 1, 1], [], []>} : vector<16x72xf32>, vector<72x896xf32>, vector<16x896xf32> -> vector<16x896xf32>
      %117 = vector.broadcast %97 : vector<16x1xf32> to vector<16x896xf32>
      %118 = arith.addf %116, %117 : vector<16x896xf32>
      %cst_69 = arith.constant 0.000000e+00 : f32
      %119 = vector.broadcast %cst_69 : f32 to vector<16x896xf32>
      %120 = arith.maximumf %118, %119 : vector<16x896xf32>
      %c895_i32_70 = arith.constant 895 : i32
      %121 = tpu.dynamic_rotate %120 by %c895_i32_70 dim 1 : vector<16x896xf32>, i32 -> vector<16x896xf32>
      %122 = arith.maximumf %120, %121 : vector<16x896xf32>
      %c868_i32_71 = arith.constant 868 : i32
      %123 = tpu.dynamic_rotate %120 by %c868_i32_71 dim 1 : vector<16x896xf32>, i32 -> vector<16x896xf32>
      %124 = arith.maximumf %122, %123 : vector<16x896xf32>
      %c867_i32_72 = arith.constant 867 : i32
      %125 = tpu.dynamic_rotate %120 by %c867_i32_72 dim 1 : vector<16x896xf32>, i32 -> vector<16x896xf32>
      %126 = arith.maximumf %124, %125 : vector<16x896xf32>
      %c3 = arith.constant 3 : index
      %c0_73 = arith.constant 0 : index
      %c0_74 = arith.constant 0 : index
      %127 = vector.load %arg3[%c3, %c0_73, %c0_74] : memref<7x16x72xf32, #tpu.memory_space<vmem>>, vector<1x16x72xf32>
      %128 = vector.shape_cast %127 : vector<1x16x72xf32> to vector<16x72xf32>
      %c3_75 = arith.constant 3 : index
      %c0_76 = arith.constant 0 : index
      %c0_77 = arith.constant 0 : index
      %129 = vector.load %arg4[%c3_75, %c0_76, %c0_77] : memref<7x16x1xf32, #tpu.memory_space<vmem>>, vector<1x16x1xf32>
      %130 = vector.shape_cast %129 : vector<1x16x1xf32> to vector<16x1xf32>
      %131 = vector.extract_strided_slice %128 {offsets = [0, 0], sizes = [8, 16], strides = [1, 1]} : vector<16x72xf32> to vector<8x16xf32>
      %cst_78 = arith.constant dense<0.000000e+00> : vector<8x896xf32>
      %132 = tpu.matmul %131, %126, %cst_78 {dimension_numbers = #tpu.dot_dimension_numbers<[1], [0], [0], [1], [0, 0, 1, 1], [], []>} : vector<8x16xf32>, vector<16x896xf32>, vector<8x896xf32> -> vector<8x896xf32>
      %133 = vector.extract_strided_slice %130 {offsets = [0, 0], sizes = [8, 1], strides = [1, 1]} : vector<16x1xf32> to vector<8x1xf32>
      %134 = vector.broadcast %133 : vector<8x1xf32> to vector<8x896xf32>
      %135 = arith.addf %132, %134 : vector<8x896xf32>
      %cst_79 = arith.constant 0.000000e+00 : f32
      %136 = vector.broadcast %cst_79 : f32 to vector<8x896xf32>
      %137 = arith.maximumf %135, %136 : vector<8x896xf32>
      %c4 = arith.constant 4 : index
      %c0_80 = arith.constant 0 : index
      %c0_81 = arith.constant 0 : index
      %138 = vector.load %arg3[%c4, %c0_80, %c0_81] : memref<7x16x72xf32, #tpu.memory_space<vmem>>, vector<1x16x72xf32>
      %139 = vector.shape_cast %138 : vector<1x16x72xf32> to vector<16x72xf32>
      %c4_82 = arith.constant 4 : index
      %c0_83 = arith.constant 0 : index
      %c0_84 = arith.constant 0 : index
      %140 = vector.load %arg4[%c4_82, %c0_83, %c0_84] : memref<7x16x1xf32, #tpu.memory_space<vmem>>, vector<1x16x1xf32>
      %141 = vector.shape_cast %140 : vector<1x16x1xf32> to vector<16x1xf32>
      %c0_85 = arith.constant 0 : index
      %c0_86 = arith.constant 0 : index
      %142 = vector.load %arg6[%c0_85, %c0_86] : memref<72x896xf32, #tpu.memory_space<vmem>>, vector<8x896xf32>
      tpu.vector_store %arg6[%c0_85, %c0_86], %137 {strides = array<i32>} : memref<72x896xf32, #tpu.memory_space<vmem>>, vector<8x896xf32>,
      %c894_i32_87 = arith.constant 894 : i32
      %143 = tpu.dynamic_rotate %137 by %c894_i32_87 dim 1 : vector<8x896xf32>, i32 -> vector<8x896xf32>
      %c8_88 = arith.constant 8 : index
      %c0_89 = arith.constant 0 : index
      %144 = vector.load %arg6[%c8_88, %c0_89] : memref<72x896xf32, #tpu.memory_space<vmem>>, vector<8x896xf32>
      tpu.vector_store %arg6[%c8_88, %c0_89], %143 {strides = array<i32>} : memref<72x896xf32, #tpu.memory_space<vmem>>, vector<8x896xf32>,
      %c892_i32 = arith.constant 892 : i32
      %145 = tpu.dynamic_rotate %137 by %c892_i32 dim 1 : vector<8x896xf32>, i32 -> vector<8x896xf32>
      %c16_90 = arith.constant 16 : index
      %c0_91 = arith.constant 0 : index
      %146 = vector.load %arg6[%c16_90, %c0_91] : memref<72x896xf32, #tpu.memory_space<vmem>>, vector<8x896xf32>
      tpu.vector_store %arg6[%c16_90, %c0_91], %145 {strides = array<i32>} : memref<72x896xf32, #tpu.memory_space<vmem>>, vector<8x896xf32>,
      %c840_i32_92 = arith.constant 840 : i32
      %147 = tpu.dynamic_rotate %137 by %c840_i32_92 dim 1 : vector<8x896xf32>, i32 -> vector<8x896xf32>
      %c24_93 = arith.constant 24 : index
      %c0_94 = arith.constant 0 : index
      %148 = vector.load %arg6[%c24_93, %c0_94] : memref<72x896xf32, #tpu.memory_space<vmem>>, vector<8x896xf32>
      tpu.vector_store %arg6[%c24_93, %c0_94], %147 {strides = array<i32>} : memref<72x896xf32, #tpu.memory_space<vmem>>, vector<8x896xf32>,
      %c838_i32_95 = arith.constant 838 : i32
      %149 = tpu.dynamic_rotate %137 by %c838_i32_95 dim 1 : vector<8x896xf32>, i32 -> vector<8x896xf32>
      %c32_96 = arith.constant 32 : index
      %c0_97 = arith.constant 0 : index
      %150 = vector.load %arg6[%c32_96, %c0_97] : memref<72x896xf32, #tpu.memory_space<vmem>>, vector<8x896xf32>
      tpu.vector_store %arg6[%c32_96, %c0_97], %149 {strides = array<i32>} : memref<72x896xf32, #tpu.memory_space<vmem>>, vector<8x896xf32>,
      %c836_i32 = arith.constant 836 : i32
      %151 = tpu.dynamic_rotate %137 by %c836_i32 dim 1 : vector<8x896xf32>, i32 -> vector<8x896xf32>
      %c40_98 = arith.constant 40 : index
      %c0_99 = arith.constant 0 : index
      %152 = vector.load %arg6[%c40_98, %c0_99] : memref<72x896xf32, #tpu.memory_space<vmem>>, vector<8x896xf32>
      tpu.vector_store %arg6[%c40_98, %c0_99], %151 {strides = array<i32>} : memref<72x896xf32, #tpu.memory_space<vmem>>, vector<8x896xf32>,
      %c784_i32 = arith.constant 784 : i32
      %153 = tpu.dynamic_rotate %137 by %c784_i32 dim 1 : vector<8x896xf32>, i32 -> vector<8x896xf32>
      %c48_100 = arith.constant 48 : index
      %c0_101 = arith.constant 0 : index
      %154 = vector.load %arg6[%c48_100, %c0_101] : memref<72x896xf32, #tpu.memory_space<vmem>>, vector<8x896xf32>
      tpu.vector_store %arg6[%c48_100, %c0_101], %153 {strides = array<i32>} : memref<72x896xf32, #tpu.memory_space<vmem>>, vector<8x896xf32>,
      %c782_i32 = arith.constant 782 : i32
      %155 = tpu.dynamic_rotate %137 by %c782_i32 dim 1 : vector<8x896xf32>, i32 -> vector<8x896xf32>
      %c56_102 = arith.constant 56 : index
      %c0_103 = arith.constant 0 : index
      %156 = vector.load %arg6[%c56_102, %c0_103] : memref<72x896xf32, #tpu.memory_space<vmem>>, vector<8x896xf32>
      tpu.vector_store %arg6[%c56_102, %c0_103], %155 {strides = array<i32>} : memref<72x896xf32, #tpu.memory_space<vmem>>, vector<8x896xf32>,
      %c780_i32 = arith.constant 780 : i32
      %157 = tpu.dynamic_rotate %137 by %c780_i32 dim 1 : vector<8x896xf32>, i32 -> vector<8x896xf32>
      %c64_104 = arith.constant 64 : index
      %c0_105 = arith.constant 0 : index
      %158 = vector.load %arg6[%c64_104, %c0_105] : memref<72x896xf32, #tpu.memory_space<vmem>>, vector<8x896xf32>
      tpu.vector_store %arg6[%c64_104, %c0_105], %157 {strides = array<i32>} : memref<72x896xf32, #tpu.memory_space<vmem>>, vector<8x896xf32>,
      %c0_106 = arith.constant 0 : index
      %c0_107 = arith.constant 0 : index
      %159 = vector.load %arg6[%c0_106, %c0_107] : memref<72x896xf32, #tpu.memory_space<vmem>>, vector<72x896xf32>
      %160 = vector.extract_strided_slice %139 {offsets = [0, 0], sizes = [8, 72], strides = [1, 1]} : vector<16x72xf32> to vector<8x72xf32>
      %cst_108 = arith.constant dense<0.000000e+00> : vector<8x896xf32>
      %161 = tpu.matmul %160, %159, %cst_108 {dimension_numbers = #tpu.dot_dimension_numbers<[1], [0], [0], [1], [0, 0, 1, 1], [], []>} : vector<8x72xf32>, vector<72x896xf32>, vector<8x896xf32> -> vector<8x896xf32>
      %162 = vector.extract_strided_slice %141 {offsets = [0, 0], sizes = [8, 1], strides = [1, 1]} : vector<16x1xf32> to vector<8x1xf32>
      %163 = vector.broadcast %162 : vector<8x1xf32> to vector<8x896xf32>
      %164 = arith.addf %161, %163 : vector<8x896xf32>
      %cst_109 = arith.constant 0.000000e+00 : f32
      %165 = vector.broadcast %cst_109 : f32 to vector<8x896xf32>
      %166 = arith.maximumf %164, %165 : vector<8x896xf32>
      %c5 = arith.constant 5 : index
      %c0_110 = arith.constant 0 : index
      %c0_111 = arith.constant 0 : index
      %167 = vector.load %arg3[%c5, %c0_110, %c0_111] : memref<7x16x72xf32, #tpu.memory_space<vmem>>, vector<1x16x72xf32>
      %168 = vector.shape_cast %167 : vector<1x16x72xf32> to vector<16x72xf32>
      %c5_112 = arith.constant 5 : index
      %c0_113 = arith.constant 0 : index
      %c0_114 = arith.constant 0 : index
      %169 = vector.load %arg4[%c5_112, %c0_113, %c0_114] : memref<7x16x1xf32, #tpu.memory_space<vmem>>, vector<1x16x1xf32>
      %170 = vector.shape_cast %169 : vector<1x16x1xf32> to vector<16x1xf32>
      %c0_115 = arith.constant 0 : index
      %c0_116 = arith.constant 0 : index
      %171 = vector.load %arg6[%c0_115, %c0_116] : memref<72x896xf32, #tpu.memory_space<vmem>>, vector<8x896xf32>
      tpu.vector_store %arg6[%c0_115, %c0_116], %166 {strides = array<i32>} : memref<72x896xf32, #tpu.memory_space<vmem>>, vector<8x896xf32>,
      %c894_i32_117 = arith.constant 894 : i32
      %172 = tpu.dynamic_rotate %166 by %c894_i32_117 dim 1 : vector<8x896xf32>, i32 -> vector<8x896xf32>
      %c8_118 = arith.constant 8 : index
      %c0_119 = arith.constant 0 : index
      %173 = vector.load %arg6[%c8_118, %c0_119] : memref<72x896xf32, #tpu.memory_space<vmem>>, vector<8x896xf32>
      tpu.vector_store %arg6[%c8_118, %c0_119], %172 {strides = array<i32>} : memref<72x896xf32, #tpu.memory_space<vmem>>, vector<8x896xf32>,
      %c892_i32_120 = arith.constant 892 : i32
      %174 = tpu.dynamic_rotate %166 by %c892_i32_120 dim 1 : vector<8x896xf32>, i32 -> vector<8x896xf32>
      %c16_121 = arith.constant 16 : index
      %c0_122 = arith.constant 0 : index
      %175 = vector.load %arg6[%c16_121, %c0_122] : memref<72x896xf32, #tpu.memory_space<vmem>>, vector<8x896xf32>
      tpu.vector_store %arg6[%c16_121, %c0_122], %174 {strides = array<i32>} : memref<72x896xf32, #tpu.memory_space<vmem>>, vector<8x896xf32>,
      %c840_i32_123 = arith.constant 840 : i32
      %176 = tpu.dynamic_rotate %166 by %c840_i32_123 dim 1 : vector<8x896xf32>, i32 -> vector<8x896xf32>
      %c24_124 = arith.constant 24 : index
      %c0_125 = arith.constant 0 : index
      %177 = vector.load %arg6[%c24_124, %c0_125] : memref<72x896xf32, #tpu.memory_space<vmem>>, vector<8x896xf32>
      tpu.vector_store %arg6[%c24_124, %c0_125], %176 {strides = array<i32>} : memref<72x896xf32, #tpu.memory_space<vmem>>, vector<8x896xf32>,
      %c838_i32_126 = arith.constant 838 : i32
      %178 = tpu.dynamic_rotate %166 by %c838_i32_126 dim 1 : vector<8x896xf32>, i32 -> vector<8x896xf32>
      %c32_127 = arith.constant 32 : index
      %c0_128 = arith.constant 0 : index
      %179 = vector.load %arg6[%c32_127, %c0_128] : memref<72x896xf32, #tpu.memory_space<vmem>>, vector<8x896xf32>
      tpu.vector_store %arg6[%c32_127, %c0_128], %178 {strides = array<i32>} : memref<72x896xf32, #tpu.memory_space<vmem>>, vector<8x896xf32>,
      %c836_i32_129 = arith.constant 836 : i32
      %180 = tpu.dynamic_rotate %166 by %c836_i32_129 dim 1 : vector<8x896xf32>, i32 -> vector<8x896xf32>
      %c40_130 = arith.constant 40 : index
      %c0_131 = arith.constant 0 : index
      %181 = vector.load %arg6[%c40_130, %c0_131] : memref<72x896xf32, #tpu.memory_space<vmem>>, vector<8x896xf32>
      tpu.vector_store %arg6[%c40_130, %c0_131], %180 {strides = array<i32>} : memref<72x896xf32, #tpu.memory_space<vmem>>, vector<8x896xf32>,
      %c784_i32_132 = arith.constant 784 : i32
      %182 = tpu.dynamic_rotate %166 by %c784_i32_132 dim 1 : vector<8x896xf32>, i32 -> vector<8x896xf32>
      %c48_133 = arith.constant 48 : index
      %c0_134 = arith.constant 0 : index
      %183 = vector.load %arg6[%c48_133, %c0_134] : memref<72x896xf32, #tpu.memory_space<vmem>>, vector<8x896xf32>
      tpu.vector_store %arg6[%c48_133, %c0_134], %182 {strides = array<i32>} : memref<72x896xf32, #tpu.memory_space<vmem>>, vector<8x896xf32>,
      %c782_i32_135 = arith.constant 782 : i32
      %184 = tpu.dynamic_rotate %166 by %c782_i32_135 dim 1 : vector<8x896xf32>, i32 -> vector<8x896xf32>
      %c56_136 = arith.constant 56 : index
      %c0_137 = arith.constant 0 : index
      %185 = vector.load %arg6[%c56_136, %c0_137] : memref<72x896xf32, #tpu.memory_space<vmem>>, vector<8x896xf32>
      tpu.vector_store %arg6[%c56_136, %c0_137], %184 {strides = array<i32>} : memref<72x896xf32, #tpu.memory_space<vmem>>, vector<8x896xf32>,
      %c780_i32_138 = arith.constant 780 : i32
      %186 = tpu.dynamic_rotate %166 by %c780_i32_138 dim 1 : vector<8x896xf32>, i32 -> vector<8x896xf32>
      %c64_139 = arith.constant 64 : index
      %c0_140 = arith.constant 0 : index
      %187 = vector.load %arg6[%c64_139, %c0_140] : memref<72x896xf32, #tpu.memory_space<vmem>>, vector<8x896xf32>
      tpu.vector_store %arg6[%c64_139, %c0_140], %186 {strides = array<i32>} : memref<72x896xf32, #tpu.memory_space<vmem>>, vector<8x896xf32>,
      %c0_141 = arith.constant 0 : index
      %c0_142 = arith.constant 0 : index
      %188 = vector.load %arg6[%c0_141, %c0_142] : memref<72x896xf32, #tpu.memory_space<vmem>>, vector<72x896xf32>
      %cst_143 = arith.constant dense<0.000000e+00> : vector<16x896xf32>
      %189 = tpu.matmul %168, %188, %cst_143 {dimension_numbers = #tpu.dot_dimension_numbers<[1], [0], [0], [1], [0, 0, 1, 1], [], []>} : vector<16x72xf32>, vector<72x896xf32>, vector<16x896xf32> -> vector<16x896xf32>
      %190 = vector.broadcast %170 : vector<16x1xf32> to vector<16x896xf32>
      %191 = arith.addf %189, %190 : vector<16x896xf32>
      %cst_144 = arith.constant 0.000000e+00 : f32
      %192 = vector.broadcast %cst_144 : f32 to vector<16x896xf32>
      %193 = arith.maximumf %191, %192 : vector<16x896xf32>
      %c6 = arith.constant 6 : index
      %c0_145 = arith.constant 0 : index
      %c0_146 = arith.constant 0 : index
      %194 = vector.load %arg3[%c6, %c0_145, %c0_146] : memref<7x16x72xf32, #tpu.memory_space<vmem>>, vector<1x16x72xf32>
      %195 = vector.shape_cast %194 : vector<1x16x72xf32> to vector<16x72xf32>
      %c6_147 = arith.constant 6 : index
      %c0_148 = arith.constant 0 : index
      %c0_149 = arith.constant 0 : index
      %196 = vector.load %arg4[%c6_147, %c0_148, %c0_149] : memref<7x16x1xf32, #tpu.memory_space<vmem>>, vector<1x16x1xf32>
      %197 = vector.shape_cast %196 : vector<1x16x1xf32> to vector<16x1xf32>
      %198 = vector.extract_strided_slice %195 {offsets = [0, 0], sizes = [10, 16], strides = [1, 1]} : vector<16x72xf32> to vector<10x16xf32>
      %cst_150 = arith.constant dense<0.000000e+00> : vector<10x896xf32>
      %199 = tpu.matmul %198, %193, %cst_150 {dimension_numbers = #tpu.dot_dimension_numbers<[1], [0], [0], [1], [0, 0, 1, 1], [], []>} : vector<10x16xf32>, vector<16x896xf32>, vector<10x896xf32> -> vector<10x896xf32>
      %200 = vector.extract_strided_slice %197 {offsets = [0, 0], sizes = [10, 1], strides = [1, 1]} : vector<16x1xf32> to vector<10x1xf32>
      %201 = vector.broadcast %200 : vector<10x1xf32> to vector<10x896xf32>
      %202 = arith.addf %199, %201 : vector<10x896xf32>
      %cst_151 = arith.constant 0.000000e+00 : f32
      %203 = vector.broadcast %cst_151 : f32 to vector<10x896xf32>
      %204 = arith.maximumf %202, %203 : vector<10x896xf32>
      %c0_152 = arith.constant 0 : index
      %c0_153 = arith.constant 0 : index
      %205 = vector.load %arg2[%c0_152, %c0_153] : memref<1x896xf32, #tpu.memory_space<vmem>>, vector<1x896xf32>
      %cst_154 = arith.constant dense<0.000000e+00> : vector<1x10xf32>
      %206 = tpu.matmul %205, %204, %cst_154 {dimension_numbers = #tpu.dot_dimension_numbers<[1], [1], [0], [0], [0, 0, 1, 0], [], []>} : vector<1x896xf32>, vector<10x896xf32>, vector<1x10xf32> -> vector<1x10xf32>
      %cst_155 = arith.constant dense<0xFF800000> : vector<1xf32>
      %207 = vector.multi_reduction <maximumf>, %206, %cst_155 [1] : vector<1x10xf32> to vector<1xf32>
      %208 = vector.shape_cast %207 : vector<1xf32> to vector<1x1xf32>
      %209 = vector.broadcast %208 : vector<1x1xf32> to vector<1x10xf32>
      %210 = arith.subf %206, %209 : vector<1x10xf32>
      %211 = math.exp %210 : vector<1x10xf32>
      %cst_156 = arith.constant dense<0.000000e+00> : vector<1xf32>
      %212 = vector.multi_reduction <add>, %211, %cst_156 [1] : vector<1x10xf32> to vector<1xf32>
      %213 = vector.shape_cast %212 : vector<1xf32> to vector<1x1xf32>
      %214 = math.log %213 : vector<1x1xf32>
      %215 = vector.broadcast %214 : vector<1x1xf32> to vector<1x10xf32>
      %216 = arith.subf %210, %215 : vector<1x10xf32>
      %217 = arith.index_cast %arg7 : i32 to index
      %c0_157 = arith.constant 0 : index
      %c0_158 = arith.constant 0 : index
      %218 = vector.load %arg5[%217, %c0_157, %c0_158] : memref<4x1x10xf32, #tpu.memory_space<vmem>>, vector<1x1x10xf32>
      %219 = vector.shape_cast %218 : vector<1x1x10xf32> to vector<1x10xf32>
      %220 = vector.shape_cast %216 : vector<1x10xf32> to vector<1x1x10xf32>
      tpu.vector_store %arg5[%217, %c0_157, %c0_158], %220 {strides = array<i32>} : memref<4x1x10xf32, #tpu.memory_space<vmem>>, vector<1x1x10xf32>,
    }
    %c4_i32_0 = arith.constant 4 : i32
    return
  }
  func.func @transform_0(%arg0: i32) -> (i32, i32, i32) {
    %c0_i32 = arith.constant 0 : i32
    %c0_i32_0 = arith.constant 0 : i32
    %c0_i32_1 = arith.constant 0 : i32
    return %arg0, %c0_i32, %c0_i32_0 : i32, i32, i32
  }
  func.func @transform_1(%arg0: i32) -> (i32, i32) {
    %c0_i32 = arith.constant 0 : i32
    %c0_i32_0 = arith.constant 0 : i32
    %c0_i32_1 = arith.constant 0 : i32
    return %c0_i32, %c0_i32_0 : i32, i32
  }
  func.func @transform_2(%arg0: i32) -> (i32, i32, i32) {
    %c0_i32 = arith.constant 0 : i32
    %c0_i32_0 = arith.constant 0 : i32
    %c0_i32_1 = arith.constant 0 : i32
    %c0_i32_2 = arith.constant 0 : i32
    return %c0_i32, %c0_i32_0, %c0_i32_1 : i32, i32, i32
  }
  func.func @transform_3(%arg0: i32) -> (i32, i32, i32) {
    %c0_i32 = arith.constant 0 : i32
    %c0_i32_0 = arith.constant 0 : i32
    %c0_i32_1 = arith.constant 0 : i32
    %c0_i32_2 = arith.constant 0 : i32
    return %c0_i32, %c0_i32_0, %c0_i32_1 : i32, i32, i32
  }
  func.func @transform_4(%arg0: i32) -> (i32, i32, i32) {
    %c0_i32 = arith.constant 0 : i32
    %c0_i32_0 = arith.constant 0 : i32
    %c0_i32_1 = arith.constant 0 : i32
    return %arg0, %c0_i32, %c0_i32_0 : i32, i32, i32
  }
}

</mosaic_0001>

<llo_original>
// kernel: _lambda_.1
$region0: #{_lambda_.1}
  #allocation0 [shape = 'u32[]', space=smem, size = 0x4, offset = 0x4, fixed_abs, tag = 'smem constant byte address 0x4 - core index']
  #allocation1 [shape = 'u32[72,128]{1,0:T(1,128)}', space=vmem, size = 0x9000, scoped, tag = 'internal scratch']
  #allocation2 [shape = 'f32[72,896]{1,0:T(8,128)}', space=vmem, size = 0x3f000, scoped, tag = 'scratch operand']
  %s0 = inlined_call_operand.vmem [shape: f32[8,1,896], index: 0, kind: input, shape index: {}]
  %s1 = inlined_call_operand.vmem [shape: f32[1,896], index: 1, kind: input, shape index: {}]
  %s2 = inlined_call_operand.vmem [shape: f32[7,16,72], index: 2, kind: input, shape index: {}]
  %s3 = inlined_call_operand.vmem [shape: f32[7,16,1], index: 3, kind: input, shape index: {}]
  %s4 = inlined_call_operand.hbm [shape: f32[8,1,10], index: 4, kind: output, shape index: {}]
  %s5 = sld [smem:[#allocation0]]
  $region56: #{_lambda_.1} parent=0
    _
  %s7 = ssub.s32 1, %s5
  %s8 = scalar_select 0, %s7, %s5
  $region1: #{_lambda_.1} parent=0
    #allocation3 [shape = 'u8[4096]{0}', space=vmem, size = 0x1000, scoped, tag = 'output window, operand 0']
    #allocation4 [shape = 's32[2]{0}', space=sflag, size = 0x8, scoped, tag = 'scoped memory for _lambda_.1']
    %9 = vsyncpa [#allocation4], 0
    %s10 = scalar_lea.sflag [#allocation4], 1
    %11 = vsyncpa %s10, 0
    loop: start=0, step=1, limit=4
    $region2: #{_lambda_.1} parent=1 // loop_pre_header
      _
    $region3: #{_lambda_.1} parent=1 // loop_header
      %s13 = sphi 0, %s17
      %p14 = scmp.ge.s32.totalorder %s13, 4
      %s23 = sphi 0, %s25
      %s26 = sphi 0, %s23
      %s27 = sphi 0, %s26
      %s43 = sphi 0, %s27
      %s47 = sphi 0, %s47
      %s49 = sphi 0, %s47
      %s50 = sphi 0, %s49
      %s64 = sphi 0, %s50
      %s68 = sphi 0, %s68
      %s70 = sphi 0, %s68
      %s71 = sphi 0, %s70
      %s85 = sphi 0, %s71
      %s89 = sphi 0, %s89
      %s91 = sphi 0, %s89
      %s92 = sphi 0, %s91
      %s106 = sphi 0, %s92
      %s112 = sphi 0, %s114
      %s115 = sphi 0, %s112
      %s116 = sphi 0, %s115
      %s132 = sphi 0, %s116
    $region4: #{_lambda_.1} parent=1 // loop_header_branch
      %16 = sbr.rel (%p14) target = $region8
    $region5: #{_lambda_.1} parent=1 // loop_body
      %s18 = ssub.s32 %s13, 1
      %s19 = ssub.s32 %s13, 2
      %s20 = sadd.s32 %s13, 1
      %s21 = ssub.s32 %s13, %s20
      %p22 = scmp.eq.s32.totalorder %s21, 0
      %s24 = sadd.s32 %s23, 1
      %s25 = scalar_select %p22, %s23, %s24
      %p28 = pneg %p22
      %p29 = scmp.eq.s32.totalorder %s13, 1
      %p30 = por %p28, %p29
      %p31 = scmp.ne.s32.totalorder %s23, %s26
      %p32 = scmp.eq.s32.totalorder %s13, 0
      %p33 = por %p31, %p32
      %p34 = scmp.ne.s32.totalorder %s23, %s26
      %p35 = scmp.eq.s32.totalorder %s18, 1
      %p36 = por %p34, %p35
      %p37 = scmp.ne.s32.totalorder %s26, %s27
      %p38 = scmp.eq.s32.totalorder %s18, 0
      %p39 = por %p37, %p38
      %p40 = scmp.ne.s32.totalorder %s26, %s27
      %p41 = scmp.eq.s32.totalorder %s19, 1
      %p42 = por %p40, %p41
      %p44 = scmp.ne.s32.totalorder %s27, %s43
      %p45 = scmp.eq.s32.totalorder %s19, 0
      %p46 = por %p44, %p45
      %s48 = sadd.s32 %s47, 1
      %p51 = scmp.eq.s32.totalorder %s13, 1
      %p52 = scmp.ne.s32.totalorder %s47, %s49
      %p53 = scmp.eq.s32.totalorder %s13, 0
      %p54 = por %p52, %p53
      %p55 = scmp.ne.s32.totalorder %s47, %s49
      %p56 = scmp.eq.s32.totalorder %s18, 1
      %p57 = por %p55, %p56
      %p58 = scmp.ne.s32.totalorder %s49, %s50
      %p59 = scmp.eq.s32.totalorder %s18, 0
      %p60 = por %p58, %p59
      %p61 = scmp.ne.s32.totalorder %s49, %s50
      %p62 = scmp.eq.s32.totalorder %s19, 1
      %p63 = por %p61, %p62
      %p65 = scmp.ne.s32.totalorder %s50, %s64
      %p66 = scmp.eq.s32.totalorder %s19, 0
      %p67 = por %p65, %p66
      %s69 = sadd.s32 %s68, 1
      %p72 = scmp.eq.s32.totalorder %s13, 1
      %p73 = scmp.ne.s32.totalorder %s68, %s70
      %p74 = scmp.eq.s32.totalorder %s13, 0
      %p75 = por %p73, %p74
      %p76 = scmp.ne.s32.totalorder %s68, %s70
      %p77 = scmp.eq.s32.totalorder %s18, 1
      %p78 = por %p76, %p77
      %p79 = scmp.ne.s32.totalorder %s70, %s71
      %p80 = scmp.eq.s32.totalorder %s18, 0
      %p81 = por %p79, %p80
      %p82 = scmp.ne.s32.totalorder %s70, %s71
      %p83 = scmp.eq.s32.totalorder %s19, 1
      %p84 = por %p82, %p83
      %p86 = scmp.ne.s32.totalorder %s71, %s85
      %p87 = scmp.eq.s32.totalorder %s19, 0
      %p88 = por %p86, %p87
      %s90 = sadd.s32 %s89, 1
      %p93 = scmp.eq.s32.totalorder %s13, 1
      %p94 = scmp.ne.s32.totalorder %s89, %s91
      %p95 = scmp.eq.s32.totalorder %s13, 0
      %p96 = por %p94, %p95
      %p97 = scmp.ne.s32.totalorder %s89, %s91
      %p98 = scmp.eq.s32.totalorder %s18, 1
      %p99 = por %p97, %p98
      %p100 = scmp.ne.s32.totalorder %s91, %s92
      %p101 = scmp.eq.s32.totalorder %s18, 0
      %p102 = por %p100, %p101
      %p103 = scmp.ne.s32.totalorder %s91, %s92
      %p104 = scmp.eq.s32.totalorder %s19, 1
      %p105 = por %p103, %p104
      %p107 = scmp.ne.s32.totalorder %s92, %s106
      %p108 = scmp.eq.s32.totalorder %s19, 0
      %p109 = por %p107, %p108
      %s110 = ssub.s32 %s13, %s20
      %p111 = scmp.eq.s32.totalorder %s110, 0
      %s113 = sadd.s32 %s112, 1
      %s114 = scalar_select %p111, %s112, %s113
      %p117 = pneg %p111
      %p118 = scmp.eq.s32.totalorder %s13, 1
      %p119 = por %p117, %p118
      %p120 = scmp.ne.s32.totalorder %s112, %s115
      %p121 = scmp.eq.s32.totalorder %s13, 0
      %p122 = por %p120, %p121
      %p123 = scmp.ne.s32.totalorder %s112, %s115
      %p124 = scmp.eq.s32.totalorder %s18, 1
      %p125 = por %p123, %p124
      %p126 = scmp.ne.s32.totalorder %s115, %s116
      %p127 = scmp.eq.s32.totalorder %s18, 0
      %p128 = por %p126, %p127
      %p129 = scmp.ne.s32.totalorder %s115, %s116
      %p130 = scmp.eq.s32.totalorder %s19, 1
      %p131 = por %p129, %p130
      %p133 = scmp.ne.s32.totalorder %s116, %s132
      %p134 = scmp.eq.s32.totalorder %s19, 0
      %p135 = por %p133, %p134
      %p136 = scmp.le.s32.totalorder 1, %s13
      %p137 = scmp.lt.s32.totalorder %s13, 3
      %p138 = pnand %p136, %p137
      %p139 = pneg %p138
      // Predicated region
      $region9: #{_lambda_.1} parent=5 // pred_check
        _
      $region10: #{_lambda_.1} parent=5 // pred_check_branch
        %141 = sbr.rel (%p138) target = $region12
      $region11: #{_lambda_.1} parent=5 // pred_region
        %s142 = ssub.s32 %s13, 1
        // Predicated region
        $region13: #{_lambda_.1} parent=11 // pred_check
          %p143 = pneg %p60
        $region14: #{_lambda_.1} parent=11 // pred_check_branch
          %145 = sbr.rel (%p143) target = $region16
        $region15: #{_lambda_.1} parent=11 // pred_region
          _
        $region16: #{_lambda_.1} parent=11 // pred_fallthru
          _
        // Predicated region
        $region17: #{_lambda_.1} parent=11 // pred_check
          %p146 = pneg %p81
        $region18: #{_lambda_.1} parent=11 // pred_check_branch
          %148 = sbr.rel (%p146) target = $region20
        $region19: #{_lambda_.1} parent=11 // pred_region
          _
        $region20: #{_lambda_.1} parent=11 // pred_fallthru
          _
        // Predicated region
        $region21: #{_lambda_.1} parent=11 // pred_check
          %p149 = pneg %p102
        $region22: #{_lambda_.1} parent=11 // pred_check_branch
          %151 = sbr.rel (%p149) target = $region24
        $region23: #{_lambda_.1} parent=11 // pred_region
          _
        $region24: #{_lambda_.1} parent=11 // pred_fallthru
          _
      $region12: #{_lambda_.1} parent=5 // pred_fallthru
        _
      %p152 = scmp.lt.s32.totalorder %s13, 2
      // Predicated region
      $region25: #{_lambda_.1} parent=5 // pred_check
        %p153 = pneg %p152
      $region26: #{_lambda_.1} parent=5 // pred_check_branch
        %155 = sbr.rel (%p153) target = $region28
      $region27: #{_lambda_.1} parent=5 // pred_region
        // Predicated region
        $region29: #{_lambda_.1} parent=27 // pred_check
          %p156 = pneg %p33
        $region30: #{_lambda_.1} parent=27 // pred_check_branch
          %158 = sbr.rel (%p156) target = $region32
        $region31: #{_lambda_.1} parent=27 // pred_region
          %s159 = smul.u32 4, %s13
          %p160 = scmp.lt.s32.totalorder %s159, 7
          %s161 = scalar_select %p160, %s159, 7
          %s162 = smul.addr %s161, 7
          %s163 = scalar_lea.vmem %s0, %s162
          %s164 = smul.u32 4, %s13
        $region32: #{_lambda_.1} parent=27 // pred_fallthru
          _
      $region28: #{_lambda_.1} parent=5 // pred_fallthru
        _
      %p165 = scmp.le.s32.totalorder 1, %s13
      %p166 = scmp.lt.s32.totalorder %s13, 3
      %p167 = pnand %p165, %p166
      %p168 = pneg %p167
      // Predicated region
      $region33: #{_lambda_.1} parent=5 // pred_check
        _
      $region34: #{_lambda_.1} parent=5 // pred_check_branch
        %170 = sbr.rel (%p167) target = $region36
      $region35: #{_lambda_.1} parent=5 // pred_region
        %s171 = ssub.s32 %s13, 1
        %s172 = smul.u32 4, %s18
        %p173 = scmp.lt.s32.totalorder %s172, 7
        %s174 = scalar_select %p173, %s172, 7
        %s175 = smul.addr %s174, 7
        %s176 = scalar_lea.vmem %s0, %s175
        %p177 = pneg %p39
        %p178 = pneg %p36
        %p179 = pneg %p60
        %p180 = pneg %p57
        %p181 = pneg %p81
        %p182 = pneg %p78
        %p183 = pneg %p102
        %p184 = pneg %p99
        %p185 = pneg %p128
        %p186 = pneg %p125
        %s187 = sand.u32 %s115, 1
        %s188 = scalar_lea.sflag [#allocation4], %s187
        %s189 = sand.u32 %s115, 1
        %s190 = smul.addr %s189, 4
        %s191 = scalar_lea.vmem [#allocation3], %s190
        %s192 = smul.u32 4, %s18
        %p193 = scmp.lt.s32.totalorder %s192, 7
        %s194 = scalar_select %p193, %s192, 7
        %s195 = smul.addr %s194, 7
        %s196 = scalar_lea.vmem %s0, %s195
        %s197 = smul.u32 4, %s18
        %s198 = smul.u32 4, %s18
        loop: start=0, step=1, limit=4
        $region37: #{_lambda_.1} parent=35 // loop_pre_header
          _
        $region38: #{_lambda_.1} parent=35 // loop_header
          %s200 = sphi 0, %s204
          %p201 = scmp.ge.s32.totalorder %s200, 4
        $region39: #{_lambda_.1} parent=35 // loop_header_branch
          %203 = sbr.rel (%p201) target = $region43
        $region40: #{_lambda_.1} parent=35 // loop_body
          %s205 = smul.u32 %s200, 7
          %s206 = scalar_lea.vmem %s196, %s205
          %v207 = vld [vmem:[%s206] sm:$0xff]
          %v208 = vld [vmem:[%s2] sm:$0xff]
          %v209 = vld [vmem:[%s3] sm:$0xff]
          %211 = vset.pattern.permute.xlu0 0
          %212 = vperm.xlu0 %211, %v208
          %v213 = vpop.permute.xlu0 %212
          %v216 = vperm.slane %v207, 0
          %v217 = vperm.slane %v207, 1
          %v218 = vperm.slane %v207, 2
          %v219 = vperm.slane %v207, 3
          %v220 = vperm.slane %v207, 4
          %v221 = vperm.slane %v207, 5
          %v222 = vperm.slane %v207, 6
          %v230 = vmul.f32 %v213, %v216
          %v231 = vmul.f32 %v213, %v217
          %v232 = vmul.f32 %v213, %v218
          %v233 = vmul.f32 %v213, %v219
          %v234 = vmul.f32 %v213, %v220
          %v235 = vmul.f32 %v213, %v221
          %v236 = vmul.f32 %v213, %v222
          %237 = vrot.lane.b32.xlu0 %v216, 127
          %v238 = vpop.permute.xlu0 %237
          %239 = vrot.lane.b32.xlu0 %v217, 127
          %v240 = vpop.permute.xlu0 %239
          %241 = vrot.lane.b32.xlu0 %v218, 127
          %v242 = vpop.permute.xlu0 %241
          %243 = vrot.lane.b32.xlu0 %v219, 127
          %v244 = vpop.permute.xlu0 %243
          %245 = vrot.lane.b32.xlu0 %v220, 127
          %v246 = vpop.permute.xlu0 %245
          %247 = vrot.lane.b32.xlu0 %v221, 127
          %v248 = vpop.permute.xlu0 %247
          %249 = vrot.lane.b32.xlu0 %v222, 127
          %v250 = vpop.permute.xlu0 %249
          %v251 = vlaneseq
          %v252 = vand.u32 %v251, 127
          %vm253 = vcmp.lt.s32.totalorder %v252, 127
          %v254 = vsel %vm253, %v248, %v250
          %v255 = vsel %vm253, %v246, %v248
          %v256 = vsel %vm253, %v244, %v246
          %v257 = vsel %vm253, %v242, %v244
          %v258 = vsel %vm253, %v240, %v242
          %v259 = vsel %vm253, %v238, %v240
          %v260 = vsel %vm253, %v250, %v238
          %261 = vset.pattern.permute.xlu0 1
          %262 = vperm.xlu0 %261, %v208
          %v263 = vpop.permute.xlu0 %262
          %v265 = vperm.slane %v259, 0
          %v266 = vperm.slane %v258, 0
          %v267 = vperm.slane %v257, 0
          %v268 = vperm.slane %v256, 0
          %v269 = vperm.slane %v255, 0
          %v270 = vperm.slane %v254, 0
          %v271 = vperm.slane %v260, 0
          %v272 = vmul.f32 %v263, %v265
          %v273 = vmul.f32 %v263, %v266
          %v274 = vmul.f32 %v263, %v267
          %v275 = vmul.f32 %v263, %v268
          %v276 = vmul.f32 %v263, %v269
          %v277 = vmul.f32 %v263, %v270
          %v278 = vmul.f32 %v263, %v271
          %v279 = vadd.f32 %v230, %v272
          %v280 = vadd.f32 %v231, %v273
          %v281 = vadd.f32 %v232, %v274
          %v282 = vadd.f32 %v233, %v275
          %v283 = vadd.f32 %v234, %v276
          %v284 = vadd.f32 %v235, %v277
          %v285 = vadd.f32 %v236, %v278
          %286 = vrot.lane.b32.xlu0 %v216, 126
          %v287 = vpop.permute.xlu0 %286
          %288 = vrot.lane.b32.xlu0 %v217, 126
          %v289 = vpop.permute.xlu0 %288
          %290 = vrot.lane.b32.xlu0 %v218, 126
          %v291 = vpop.permute.xlu0 %290
          %292 = vrot.lane.b32.xlu0 %v219, 126
          %v293 = vpop.permute.xlu0 %292
          %294 = vrot.lane.b32.xlu0 %v220, 126
          %v295 = vpop.permute.xlu0 %294
          %296 = vrot.lane.b32.xlu0 %v221, 126
          %v297 = vpop.permute.xlu0 %296
          %298 = vrot.lane.b32.xlu0 %v222, 126
          %v299 = vpop.permute.xlu0 %298
          %vm300 = vcmp.lt.s32.totalorder %v252, 126
          %v301 = vsel %vm300, %v297, %v299
          %v302 = vsel %vm300, %v295, %v297
          %v303 = vsel %vm300, %v293, %v295
          %v304 = vsel %vm300, %v291, %v293
          %v305 = vsel %vm300, %v289, %v291
          %v306 = vsel %vm300, %v287, %v289
          %v307 = vsel %vm300, %v299, %v287
          %308 = vset.pattern.permute.xlu0 2
          %309 = vperm.xlu0 %308, %v208
          %v310 = vpop.permute.xlu0 %309
          %v312 = vperm.slane %v306, 0
          %v313 = vperm.slane %v305, 0
          %v314 = vperm.slane %v304, 0
          %v315 = vperm.slane %v303, 0
          %v316 = vperm.slane %v302, 0
          %v317 = vperm.slane %v301, 0
          %v318 = vperm.slane %v307, 0
          %v319 = vmul.f32 %v310, %v312
          %v320 = vmul.f32 %v310, %v313
          %v321 = vmul.f32 %v310, %v314
          %v322 = vmul.f32 %v310, %v315
          %v323 = vmul.f32 %v310, %v316
          %v324 = vmul.f32 %v310, %v317
          %v325 = vmul.f32 %v310, %v318
          %v326 = vadd.f32 %v279, %v319
          %v327 = vadd.f32 %v280, %v320
          %v328 = vadd.f32 %v281, %v321
          %v329 = vadd.f32 %v282, %v322
          %v330 = vadd.f32 %v283, %v323
          %v331 = vadd.f32 %v284, %v324
          %v332 = vadd.f32 %v285, %v325
          %333 = vrot.lane.b32.xlu0 %v216, 100
          %v334 = vpop.permute.xlu0 %333
          %335 = vrot.lane.b32.xlu0 %v217, 100
          %v336 = vpop.permute.xlu0 %335
          %337 = vrot.lane.b32.xlu0 %v218, 100
          %v338 = vpop.permute.xlu0 %337
          %339 = vrot.lane.b32.xlu0 %v219, 100
          %v340 = vpop.permute.xlu0 %339
          %341 = vrot.lane.b32.xlu0 %v220, 100
          %v342 = vpop.permute.xlu0 %341
          %343 = vrot.lane.b32.xlu0 %v221, 100
          %v344 = vpop.permute.xlu0 %343
          %345 = vrot.lane.b32.xlu0 %v222, 100
          %v346 = vpop.permute.xlu0 %345
          %vm347 = vcmp.lt.s32.totalorder %v252, 100
          %v348 = vsel %vm347, %v344, %v346
          %v349 = vsel %vm347, %v342, %v344
          %v350 = vsel %vm347, %v340, %v342
          %v351 = vsel %vm347, %v338, %v340
          %v352 = vsel %vm347, %v336, %v338
          %v353 = vsel %vm347, %v334, %v336
          %v354 = vsel %vm347, %v346, %v334
          %355 = vset.pattern.permute.xlu0 3
          %356 = vperm.xlu0 %355, %v208
          %v357 = vpop.permute.xlu0 %356
          %v359 = vperm.slane %v353, 0
          %v360 = vperm.slane %v352, 0
          %v361 = vperm.slane %v351, 0
          %v362 = vperm.slane %v350, 0
          %v363 = vperm.slane %v349, 0
          %v364 = vperm.slane %v348, 0
          %v365 = vperm.slane %v354, 0
          %v366 = vmul.f32 %v357, %v359
          %v367 = vmul.f32 %v357, %v360
          %v368 = vmul.f32 %v357, %v361
          %v369 = vmul.f32 %v357, %v362
          %v370 = vmul.f32 %v357, %v363
          %v371 = vmul.f32 %v357, %v364
          %v372 = vmul.f32 %v357, %v365
          %v373 = vadd.f32 %v326, %v366
          %v374 = vadd.f32 %v327, %v367
          %v375 = vadd.f32 %v328, %v368
          %v376 = vadd.f32 %v329, %v369
          %v377 = vadd.f32 %v330, %v370
          %v378 = vadd.f32 %v331, %v371
          %v379 = vadd.f32 %v332, %v372
          %380 = vrot.lane.b32.xlu0 %v216, 99
          %v381 = vpop.permute.xlu0 %380
          %382 = vrot.lane.b32.xlu0 %v217, 99
          %v383 = vpop.permute.xlu0 %382
          %384 = vrot.lane.b32.xlu0 %v218, 99
          %v385 = vpop.permute.xlu0 %384
          %386 = vrot.lane.b32.xlu0 %v219, 99
          %v387 = vpop.permute.xlu0 %386
          %388 = vrot.lane.b32.xlu0 %v220, 99
          %v389 = vpop.permute.xlu0 %388
          %390 = vrot.lane.b32.xlu0 %v221, 99
          %v391 = vpop.permute.xlu0 %390
          %392 = vrot.lane.b32.xlu0 %v222, 99
          %v393 = vpop.permute.xlu0 %392
          %vm394 = vcmp.lt.s32.totalorder %v252, 99
          %v395 = vsel %vm394, %v391, %v393
          %v396 = vsel %vm394, %v389, %v391
          %v397 = vsel %vm394, %v387, %v389
          %v398 = vsel %vm394, %v385, %v387
          %v399 = vsel %vm394, %v383, %v385
          %v400 = vsel %vm394, %v381, %v383
          %v401 = vsel %vm394, %v393, %v381
          %402 = vset.pattern.permute.xlu0 4
          %403 = vperm.xlu0 %402, %v208
          %v404 = vpop.permute.xlu0 %403
          %v406 = vperm.slane %v400, 0
          %v407 = vperm.slane %v399, 0
          %v408 = vperm.slane %v398, 0
          %v409 = vperm.slane %v397, 0
          %v410 = vperm.slane %v396, 0
          %v411 = vperm.slane %v395, 0
          %v412 = vperm.slane %v401, 0
          %v413 = vmul.f32 %v404, %v406
          %v414 = vmul.f32 %v404, %v407
          %v415 = vmul.f32 %v404, %v408
          %v416 = vmul.f32 %v404, %v409
          %v417 = vmul.f32 %v404, %v410
          %v418 = vmul.f32 %v404, %v411
          %v419 = vmul.f32 %v404, %v412
          %v420 = vadd.f32 %v373, %v413
          %v421 = vadd.f32 %v374, %v414
          %v422 = vadd.f32 %v375, %v415
          %v423 = vadd.f32 %v376, %v416
          %v424 = vadd.f32 %v377, %v417
          %v425 = vadd.f32 %v378, %v418
          %v426 = vadd.f32 %v379, %v419
          %427 = vrot.lane.b32.xlu0 %v216, 98
          %v428 = vpop.permute.xlu0 %427
          %429 = vrot.lane.b32.xlu0 %v217, 98
          %v430 = vpop.permute.xlu0 %429
          %431 = vrot.lane.b32.xlu0 %v218, 98
          %v432 = vpop.permute.xlu0 %431
          %433 = vrot.lane.b32.xlu0 %v219, 98
          %v434 = vpop.permute.xlu0 %433
          %435 = vrot.lane.b32.xlu0 %v220, 98
          %v436 = vpop.permute.xlu0 %435
          %437 = vrot.lane.b32.xlu0 %v221, 98
          %v438 = vpop.permute.xlu0 %437
          %439 = vrot.lane.b32.xlu0 %v222, 98
          %v440 = vpop.permute.xlu0 %439
          %vm441 = vcmp.lt.s32.totalorder %v252, 98
          %v442 = vsel %vm441, %v438, %v440
          %v443 = vsel %vm441, %v436, %v438
          %v444 = vsel %vm441, %v434, %v436
          %v445 = vsel %vm441, %v432, %v434
          %v446 = vsel %vm441, %v430, %v432
          %v447 = vsel %vm441, %v428, %v430
          %v448 = vsel %vm441, %v440, %v428
          %449 = vset.pattern.permute.xlu0 5
          %450 = vperm.xlu0 %449, %v208
          %v451 = vpop.permute.xlu0 %450
          %v453 = vperm.slane %v447, 0
          %v454 = vperm.slane %v446, 0
          %v455 = vperm.slane %v445, 0
          %v456 = vperm.slane %v444, 0
          %v457 = vperm.slane %v443, 0
          %v458 = vperm.slane %v442, 0
          %v459 = vperm.slane %v448, 0
          %v460 = vmul.f32 %v451, %v453
          %v461 = vmul.f32 %v451, %v454
          %v462 = vmul.f32 %v451, %v455
          %v463 = vmul.f32 %v451, %v456
          %v464 = vmul.f32 %v451, %v457
          %v465 = vmul.f32 %v451, %v458
          %v466 = vmul.f32 %v451, %v459
          %v467 = vadd.f32 %v420, %v460
          %v468 = vadd.f32 %v421, %v461
          %v469 = vadd.f32 %v422, %v462
          %v470 = vadd.f32 %v423, %v463
          %v471 = vadd.f32 %v424, %v464
          %v472 = vadd.f32 %v425, %v465
          %v473 = vadd.f32 %v426, %v466
          %474 = vrot.lane.b32.xlu0 %v216, 72
          %v475 = vpop.permute.xlu0 %474
          %476 = vrot.lane.b32.xlu0 %v217, 72
          %v477 = vpop.permute.xlu0 %476
          %478 = vrot.lane.b32.xlu0 %v218, 72
          %v479 = vpop.permute.xlu0 %478
          %480 = vrot.lane.b32.xlu0 %v219, 72
          %v481 = vpop.permute.xlu0 %480
          %482 = vrot.lane.b32.xlu0 %v220, 72
          %v483 = vpop.permute.xlu0 %482
          %484 = vrot.lane.b32.xlu0 %v221, 72
          %v485 = vpop.permute.xlu0 %484
          %486 = vrot.lane.b32.xlu0 %v222, 72
          %v487 = vpop.permute.xlu0 %486
          %vm488 = vcmp.lt.s32.totalorder %v252, 72
          %v489 = vsel %vm488, %v485, %v487
          %v490 = vsel %vm488, %v483, %v485
          %v491 = vsel %vm488, %v481, %v483
          %v492 = vsel %vm488, %v479, %v481
          %v493 = vsel %vm488, %v477, %v479
          %v494 = vsel %vm488, %v475, %v477
          %v495 = vsel %vm488, %v487, %v475
          %496 = vset.pattern.permute.xlu0 6
          %497 = vperm.xlu0 %496, %v208
          %v498 = vpop.permute.xlu0 %497
          %v500 = vperm.slane %v494, 0
          %v501 = vperm.slane %v493, 0
          %v502 = vperm.slane %v492, 0
          %v503 = vperm.slane %v491, 0
          %v504 = vperm.slane %v490, 0
          %v505 = vperm.slane %v489, 0
          %v506 = vperm.slane %v495, 0
          %v507 = vmul.f32 %v498, %v500
          %v508 = vmul.f32 %v498, %v501
          %v509 = vmul.f32 %v498, %v502
          %v510 = vmul.f32 %v498, %v503
          %v511 = vmul.f32 %v498, %v504
          %v512 = vmul.f32 %v498, %v505
          %v513 = vmul.f32 %v498, %v506
          %v514 = vadd.f32 %v467, %v507
          %v515 = vadd.f32 %v468, %v508
          %v516 = vadd.f32 %v469, %v509
          %v517 = vadd.f32 %v470, %v510
          %v518 = vadd.f32 %v471, %v511
          %v519 = vadd.f32 %v472, %v512
          %v520 = vadd.f32 %v473, %v513
          %521 = vrot.lane.b32.xlu0 %v216, 71
          %v522 = vpop.permute.xlu0 %521
          %523 = vrot.lane.b32.xlu0 %v217, 71
          %v524 = vpop.permute.xlu0 %523
          %525 = vrot.lane.b32.xlu0 %v218, 71
          %v526 = vpop.permute.xlu0 %525
          %527 = vrot.lane.b32.xlu0 %v219, 71
          %v528 = vpop.permute.xlu0 %527
          %529 = vrot.lane.b32.xlu0 %v220, 71
          %v530 = vpop.permute.xlu0 %529
          %531 = vrot.lane.b32.xlu0 %v221, 71
          %v532 = vpop.permute.xlu0 %531
          %533 = vrot.lane.b32.xlu0 %v222, 71
          %v534 = vpop.permute.xlu0 %533
          %vm535 = vcmp.lt.s32.totalorder %v252, 71
          %v536 = vsel %vm535, %v532, %v534
          %v537 = vsel %vm535, %v530, %v532
          %v538 = vsel %vm535, %v528, %v530
          %v539 = vsel %vm535, %v526, %v528
          %v540 = vsel %vm535, %v524, %v526
          %v541 = vsel %vm535, %v522, %v524
          %v542 = vsel %vm535, %v534, %v522
          %543 = vset.pattern.permute.xlu0 7
          %544 = vperm.xlu0 %543, %v208
          %v545 = vpop.permute.xlu0 %544
          %v547 = vperm.slane %v541, 0
          %v548 = vperm.slane %v540, 0
          %v549 = vperm.slane %v539, 0
          %v550 = vperm.slane %v538, 0
          %v551 = vperm.slane %v537, 0
          %v552 = vperm.slane %v536, 0
          %v553 = vperm.slane %v542, 0
          %v554 = vmul.f32 %v545, %v547
          %v555 = vmul.f32 %v545, %v548
          %v556 = vmul.f32 %v545, %v549
          %v557 = vmul.f32 %v545, %v550
          %v558 = vmul.f32 %v545, %v551
          %v559 = vmul.f32 %v545, %v552
          %v560 = vmul.f32 %v545, %v553
          %v561 = vadd.f32 %v514, %v554
          %v562 = vadd.f32 %v515, %v555
          %v563 = vadd.f32 %v516, %v556
          %v564 = vadd.f32 %v517, %v557
          %v565 = vadd.f32 %v518, %v558
          %v566 = vadd.f32 %v519, %v559
          %v567 = vadd.f32 %v520, %v560
          %568 = vrot.lane.b32.xlu0 %v216, 70
          %v569 = vpop.permute.xlu0 %568
          %570 = vrot.lane.b32.xlu0 %v217, 70
          %v571 = vpop.permute.xlu0 %570
          %572 = vrot.lane.b32.xlu0 %v218, 70
          %v573 = vpop.permute.xlu0 %572
          %574 = vrot.lane.b32.xlu0 %v219, 70
          %v575 = vpop.permute.xlu0 %574
          %576 = vrot.lane.b32.xlu0 %v220, 70
          %v577 = vpop.permute.xlu0 %576
          %578 = vrot.lane.b32.xlu0 %v221, 70
          %v579 = vpop.permute.xlu0 %578
          %580 = vrot.lane.b32.xlu0 %v222, 70
          %v581 = vpop.permute.xlu0 %580
          %vm582 = vcmp.lt.s32.totalorder %v252, 70
          %v583 = vsel %vm582, %v579, %v581
          %v584 = vsel %vm582, %v577, %v579
          %v585 = vsel %vm582, %v575, %v577
          %v586 = vsel %vm582, %v573, %v575
          %v587 = vsel %vm582, %v571, %v573
          %v588 = vsel %vm582, %v569, %v571
          %v589 = vsel %vm582, %v581, %v569
          %590 = vset.pattern.permute.xlu0 8
          %591 = vperm.xlu0 %590, %v208
          %v592 = vpop.permute.xlu0 %591
          %v594 = vperm.slane %v588, 0
          %v595 = vperm.slane %v587, 0
          %v596 = vperm.slane %v586, 0
          %v597 = vperm.slane %v585, 0
          %v598 = vperm.slane %v584, 0
          %v599 = vperm.slane %v583, 0
          %v600 = vperm.slane %v589, 0
          %v601 = vmul.f32 %v592, %v594
          %v602 = vmul.f32 %v592, %v595
          %v603 = vmul.f32 %v592, %v596
          %v604 = vmul.f32 %v592, %v597
          %v605 = vmul.f32 %v592, %v598
          %v606 = vmul.f32 %v592, %v599
          %v607 = vmul.f32 %v592, %v600
          %v608 = vadd.f32 %v561, %v601
          %v609 = vadd.f32 %v562, %v602
          %v610 = vadd.f32 %v563, %v603
          %v611 = vadd.f32 %v564, %v604
          %v612 = vadd.f32 %v565, %v605
          %v613 = vadd.f32 %v566, %v606
          %v614 = vadd.f32 %v567, %v607
          %616 = vset.pattern.permute.xlu0 0
          %617 = vperm.xlu0 %616, %v209
          %v618 = vpop.permute.xlu0 %617
          %v620 = vadd.f32 %v608, %v618
          %v621 = vadd.f32 %v609, %v618
          %v622 = vadd.f32 %v610, %v618
          %v623 = vadd.f32 %v611, %v618
          %v624 = vadd.f32 %v612, %v618
          %v625 = vadd.f32 %v613, %v618
          %v626 = vadd.f32 %v614, %v618
          %v627 = vmax.f32 %v620, 0.0
          %v628 = vmax.f32 %v621, 0.0
          %v629 = vmax.f32 %v622, 0.0
          %v630 = vmax.f32 %v623, 0.0
          %v631 = vmax.f32 %v624, 0.0
          %v632 = vmax.f32 %v625, 0.0
          %v633 = vmax.f32 %v626, 0.0
          %s634 = scalar_lea.vmem %s2, 16
          %v635 = vld [vmem:[%s634] sm:$0xff]
          %s636 = scalar_lea.vmem %s3, 16
          %v637 = vld [vmem:[%s636] sm:$0xff]
          %638 = vst [vmem:[#allocation2] sm:$0xff] %v627
          %639 = vst [vmem:[#allocation2 + $0x8] sm:$0xff] %v628
          %640 = vst [vmem:[#allocation2 + $0x10] sm:$0xff] %v629
          %641 = vst [vmem:[#allocation2 + $0x18] sm:$0xff] %v630
          %642 = vst [vmem:[#allocation2 + $0x20] sm:$0xff] %v631
          %643 = vst [vmem:[#allocation2 + $0x28] sm:$0xff] %v632
          %644 = vst [vmem:[#allocation2 + $0x30] sm:$0xff] %v633
          %645 = vrot.lane.b32.xlu0 %v627, 127
          %v646 = vpop.permute.xlu0 %645
          %647 = vrot.lane.b32.xlu0 %v628, 127
          %v648 = vpop.permute.xlu0 %647
          %649 = vrot.lane.b32.xlu0 %v629, 127
          %v650 = vpop.permute.xlu0 %649
          %651 = vrot.lane.b32.xlu0 %v630, 127
          %v652 = vpop.permute.xlu0 %651
          %653 = vrot.lane.b32.xlu0 %v631, 127
          %v654 = vpop.permute.xlu0 %653
          %655 = vrot.lane.b32.xlu0 %v632, 127
          %v656 = vpop.permute.xlu0 %655
          %657 = vrot.lane.b32.xlu0 %v633, 127
          %v658 = vpop.permute.xlu0 %657
          %v659 = vsel %vm253, %v656, %v658
          %v660 = vsel %vm253, %v654, %v656
          %v661 = vsel %vm253, %v652, %v654
          %v662 = vsel %vm253, %v650, %v652
          %v663 = vsel %vm253, %v648, %v650
          %v664 = vsel %vm253, %v646, %v648
          %v665 = vsel %vm253, %v658, %v646
          %666 = vst [vmem:[#allocation2 + $0x38] sm:$0xff] %v664
          %667 = vst [vmem:[#allocation2 + $0x40] sm:$0xff] %v663
          %668 = vst [vmem:[#allocation2 + $0x48] sm:$0xff] %v662
          %669 = vst [vmem:[#allocation2 + $0x50] sm:$0xff] %v661
          %670 = vst [vmem:[#allocation2 + $0x58] sm:$0xff] %v660
          %671 = vst [vmem:[#allocation2 + $0x60] sm:$0xff] %v659
          %672 = vst [vmem:[#allocation2 + $0x68] sm:$0xff] %v665
          %673 = vrot.lane.b32.xlu0 %v627, 126
          %v674 = vpop.permute.xlu0 %673
          %675 = vrot.lane.b32.xlu0 %v628, 126
          %v676 = vpop.permute.xlu0 %675
          %677 = vrot.lane.b32.xlu0 %v629, 126
          %v678 = vpop.permute.xlu0 %677
          %679 = vrot.lane.b32.xlu0 %v630, 126
          %v680 = vpop.permute.xlu0 %679
          %681 = vrot.lane.b32.xlu0 %v631, 126
          %v682 = vpop.permute.xlu0 %681
          %683 = vrot.lane.b32.xlu0 %v632, 126
          %v684 = vpop.permute.xlu0 %683
          %685 = vrot.lane.b32.xlu0 %v633, 126
          %v686 = vpop.permute.xlu0 %685
          %v687 = vsel %vm300, %v684, %v686
          %v688 = vsel %vm300, %v682, %v684
          %v689 = vsel %vm300, %v680, %v682
          %v690 = vsel %vm300, %v678, %v680
          %v691 = vsel %vm300, %v676, %v678
          %v692 = vsel %vm300, %v674, %v676
          %v693 = vsel %vm300, %v686, %v674
          %694 = vst [vmem:[#allocation2 + $0x70] sm:$0xff] %v692
          %695 = vst [vmem:[#allocation2 + $0x78] sm:$0xff] %v691
          %696 = vst [vmem:[#allocation2 + $0x80] sm:$0xff] %v690
          %697 = vst [vmem:[#allocation2 + $0x88] sm:$0xff] %v689
          %698 = vst [vmem:[#allocation2 + $0x90] sm:$0xff] %v688
          %699 = vst [vmem:[#allocation2 + $0x98] sm:$0xff] %v687
          %700 = vst [vmem:[#allocation2 + $0xa0] sm:$0xff] %v693
          %701 = vrot.lane.b32.xlu0 %v627, 100
          %v702 = vpop.permute.xlu0 %701
          %703 = vrot.lane.b32.xlu0 %v628, 100
          %v704 = vpop.permute.xlu0 %703
          %705 = vrot.lane.b32.xlu0 %v629, 100
          %v706 = vpop.permute.xlu0 %705
          %707 = vrot.lane.b32.xlu0 %v630, 100
          %v708 = vpop.permute.xlu0 %707
          %709 = vrot.lane.b32.xlu0 %v631, 100
          %v710 = vpop.permute.xlu0 %709
          %711 = vrot.lane.b32.xlu0 %v632, 100
          %v712 = vpop.permute.xlu0 %711
          %713 = vrot.lane.b32.xlu0 %v633, 100
          %v714 = vpop.permute.xlu0 %713
          %v715 = vsel %vm347, %v712, %v714
          %v716 = vsel %vm347, %v710, %v712
          %v717 = vsel %vm347, %v708, %v710
          %v718 = vsel %vm347, %v706, %v708
          %v719 = vsel %vm347, %v704, %v706
          %v720 = vsel %vm347, %v702, %v704
          %v721 = vsel %vm347, %v714, %v702
          %722 = vst [vmem:[#allocation2 + $0xa8] sm:$0xff] %v720
          %723 = vst [vmem:[#allocation2 + $0xb0] sm:$0xff] %v719
          %724 = vst [vmem:[#allocation2 + $0xb8] sm:$0xff] %v718
          %725 = vst [vmem:[#allocation2 + $0xc0] sm:$0xff] %v717
          %726 = vst [vmem:[#allocation2 + $0xc8] sm:$0xff] %v716
          %727 = vst [vmem:[#allocation2 + $0xd0] sm:$0xff] %v715
          %728 = vst [vmem:[#allocation2 + $0xd8] sm:$0xff] %v721
          %729 = vrot.lane.b32.xlu0 %v627, 99
          %v730 = vpop.permute.xlu0 %729
          %731 = vrot.lane.b32.xlu0 %v628, 99
          %v732 = vpop.permute.xlu0 %731
          %733 = vrot.lane.b32.xlu0 %v629, 99
          %v734 = vpop.permute.xlu0 %733
          %735 = vrot.lane.b32.xlu0 %v630, 99
          %v736 = vpop.permute.xlu0 %735
          %737 = vrot.lane.b32.xlu0 %v631, 99
          %v738 = vpop.permute.xlu0 %737
          %739 = vrot.lane.b32.xlu0 %v632, 99
          %v740 = vpop.permute.xlu0 %739
          %741 = vrot.lane.b32.xlu0 %v633, 99
          %v742 = vpop.permute.xlu0 %741
          %v743 = vsel %vm394, %v740, %v742
          %v744 = vsel %vm394, %v738, %v740
          %v745 = vsel %vm394, %v736, %v738
          %v746 = vsel %vm394, %v734, %v736
          %v747 = vsel %vm394, %v732, %v734
          %v748 = vsel %vm394, %v730, %v732
          %v749 = vsel %vm394, %v742, %v730
          %750 = vst [vmem:[#allocation2 + $0xe0] sm:$0xff] %v748
          %751 = vst [vmem:[#allocation2 + $0xe8] sm:$0xff] %v747
          %752 = vst [vmem:[#allocation2 + $0xf0] sm:$0xff] %v746
          %753 = vst [vmem:[#allocation2 + $0xf8] sm:$0xff] %v745
          %754 = vst [vmem:[#allocation2 + $0x100] sm:$0xff] %v744
          %755 = vst [vmem:[#allocation2 + $0x108] sm:$0xff] %v743
          %756 = vst [vmem:[#allocation2 + $0x110] sm:$0xff] %v749
          %757 = vrot.lane.b32.xlu0 %v627, 98
          %v758 = vpop.permute.xlu0 %757
          %759 = vrot.lane.b32.xlu0 %v628, 98
          %v760 = vpop.permute.xlu0 %759
          %761 = vrot.lane.b32.xlu0 %v629, 98
          %v762 = vpop.permute.xlu0 %761
          %763 = vrot.lane.b32.xlu0 %v630, 98
          %v764 = vpop.permute.xlu0 %763
          %765 = vrot.lane.b32.xlu0 %v631, 98
          %v766 = vpop.permute.xlu0 %765
          %767 = vrot.lane.b32.xlu0 %v632, 98
          %v768 = vpop.permute.xlu0 %767
          %769 = vrot.lane.b32.xlu0 %v633, 98
          %v770 = vpop.permute.xlu0 %769
          %v771 = vsel %vm441, %v768, %v770
          %v772 = vsel %vm441, %v766, %v768
          %v773 = vsel %vm441, %v764, %v766
          %v774 = vsel %vm441, %v762, %v764
          %v775 = vsel %vm441, %v760, %v762
          %v776 = vsel %vm441, %v758, %v760
          %v777 = vsel %vm441, %v770, %v758
          %778 = vst [vmem:[#allocation2 + $0x118] sm:$0xff] %v776
          %779 = vst [vmem:[#allocation2 + $0x120] sm:$0xff] %v775
          %780 = vst [vmem:[#allocation2 + $0x128] sm:$0xff] %v774
          %781 = vst [vmem:[#allocation2 + $0x130] sm:$0xff] %v773
          %782 = vst [vmem:[#allocation2 + $0x138] sm:$0xff] %v772
          %783 = vst [vmem:[#allocation2 + $0x140] sm:$0xff] %v771
          %784 = vst [vmem:[#allocation2 + $0x148] sm:$0xff] %v777
          %785 = vrot.lane.b32.xlu0 %v627, 72
          %v786 = vpop.permute.xlu0 %785
          %787 = vrot.lane.b32.xlu0 %v628, 72
          %v788 = vpop.permute.xlu0 %787
          %789 = vrot.lane.b32.xlu0 %v629, 72
          %v790 = vpop.permute.xlu0 %789
          %791 = vrot.lane.b32.xlu0 %v630, 72
          %v792 = vpop.permute.xlu0 %791
          %793 = vrot.lane.b32.xlu0 %v631, 72
          %v794 = vpop.permute.xlu0 %793
          %795 = vrot.lane.b32.xlu0 %v632, 72
          %v796 = vpop.permute.xlu0 %795
          %797 = vrot.lane.b32.xlu0 %v633, 72
          %v798 = vpop.permute.xlu0 %797
          %v799 = vsel %vm488, %v796, %v798
          %v800 = vsel %vm488, %v794, %v796
          %v801 = vsel %vm488, %v792, %v794
          %v802 = vsel %vm488, %v790, %v792
          %v803 = vsel %vm488, %v788, %v790
          %v804 = vsel %vm488, %v786, %v788
          %v805 = vsel %vm488, %v798, %v786
          %806 = vst [vmem:[#allocation2 + $0x150] sm:$0xff] %v804
          %807 = vst [vmem:[#allocation2 + $0x158] sm:$0xff] %v803
          %808 = vst [vmem:[#allocation2 + $0x160] sm:$0xff] %v802
          %809 = vst [vmem:[#allocation2 + $0x168] sm:$0xff] %v801
          %810 = vst [vmem:[#allocation2 + $0x170] sm:$0xff] %v800
          %811 = vst [vmem:[#allocation2 + $0x178] sm:$0xff] %v799
          %812 = vst [vmem:[#allocation2 + $0x180] sm:$0xff] %v805
          %813 = vrot.lane.b32.xlu0 %v627, 71
          %v814 = vpop.permute.xlu0 %813
          %815 = vrot.lane.b32.xlu0 %v628, 71
          %v816 = vpop.permute.xlu0 %815
          %817 = vrot.lane.b32.xlu0 %v629, 71
          %v818 = vpop.permute.xlu0 %817
          %819 = vrot.lane.b32.xlu0 %v630, 71
          %v820 = vpop.permute.xlu0 %819
          %821 = vrot.lane.b32.xlu0 %v631, 71
          %v822 = vpop.permute.xlu0 %821
          %823 = vrot.lane.b32.xlu0 %v632, 71
          %v824 = vpop.permute.xlu0 %823
          %825 = vrot.lane.b32.xlu0 %v633, 71
          %v826 = vpop.permute.xlu0 %825
          %v827 = vsel %vm535, %v824, %v826
          %v828 = vsel %vm535, %v822, %v824
          %v829 = vsel %vm535, %v820, %v822
          %v830 = vsel %vm535, %v818, %v820
          %v831 = vsel %vm535, %v816, %v818
          %v832 = vsel %vm535, %v814, %v816
          %v833 = vsel %vm535, %v826, %v814
          %834 = vst [vmem:[#allocation2 + $0x188] sm:$0xff] %v832
          %835 = vst [vmem:[#allocation2 + $0x190] sm:$0xff] %v831
          %836 = vst [vmem:[#allocation2 + $0x198] sm:$0xff] %v830
          %837 = vst [vmem:[#allocation2 + $0x1a0] sm:$0xff] %v829
          %838 = vst [vmem:[#allocation2 + $0x1a8] sm:$0xff] %v828
          %839 = vst [vmem:[#allocation2 + $0x1b0] sm:$0xff] %v827
          %840 = vst [vmem:[#allocation2 + $0x1b8] sm:$0xff] %v833
          %841 = vrot.lane.b32.xlu0 %v627, 70
          %v842 = vpop.permute.xlu0 %841
          %843 = vrot.lane.b32.xlu0 %v628, 70
          %v844 = vpop.permute.xlu0 %843
          %845 = vrot.lane.b32.xlu0 %v629, 70
          %v846 = vpop.permute.xlu0 %845
          %847 = vrot.lane.b32.xlu0 %v630, 70
          %v848 = vpop.permute.xlu0 %847
          %849 = vrot.lane.b32.xlu0 %v631, 70
          %v850 = vpop.permute.xlu0 %849
          %851 = vrot.lane.b32.xlu0 %v632, 70
          %v852 = vpop.permute.xlu0 %851
          %853 = vrot.lane.b32.xlu0 %v633, 70
          %v854 = vpop.permute.xlu0 %853
          %v855 = vsel %vm582, %v852, %v854
          %v856 = vsel %vm582, %v850, %v852
          %v857 = vsel %vm582, %v848, %v850
          %v858 = vsel %vm582, %v846, %v848
          %v859 = vsel %vm582, %v844, %v846
          %v860 = vsel %vm582, %v842, %v844
          %v861 = vsel %vm582, %v854, %v842
          %862 = vst [vmem:[#allocation2 + $0x1c0] sm:$0xff] %v860
          %863 = vst [vmem:[#allocation2 + $0x1c8] sm:$0xff] %v859
          %864 = vst [vmem:[#allocation2 + $0x1d0] sm:$0xff] %v858
          %865 = vst [vmem:[#allocation2 + $0x1d8] sm:$0xff] %v857
          %866 = vst [vmem:[#allocation2 + $0x1e0] sm:$0xff] %v856
          %867 = vst [vmem:[#allocation2 + $0x1e8] sm:$0xff] %v855
          %868 = vst [vmem:[#allocation2 + $0x1f0] sm:$0xff] %v861
          %v869 = vld [vmem:[#allocation2] sm:$0xff]
          %v870 = vld [vmem:[#allocation2 + $0x8] sm:$0xff]
          %v871 = vld [vmem:[#allocation2 + $0x10] sm:$0xff]
          %v872 = vld [vmem:[#allocation2 + $0x18] sm:$0xff]
          %v873 = vld [vmem:[#allocation2 + $0x20] sm:$0xff]
          %v874 = vld [vmem:[#allocation2 + $0x28] sm:$0xff]
          %v875 = vld [vmem:[#allocation2 + $0x30] sm:$0xff]
          %v876 = vld [vmem:[#allocation2 + $0x38] sm:$0xff]
          %v877 = vld [vmem:[#allocation2 + $0x40] sm:$0xff]
          %v878 = vld [vmem:[#allocation2 + $0x48] sm:$0xff]
          %v879 = vld [vmem:[#allocation2 + $0x50] sm:$0xff]
          %v880 = vld [vmem:[#allocation2 + $0x58] sm:$0xff]
          %v881 = vld [vmem:[#allocation2 + $0x60] sm:$0xff]
          %v882 = vld [vmem:[#allocation2 + $0x68] sm:$0xff]
          %v883 = vld [vmem:[#allocation2 + $0x70] sm:$0xff]
          %v884 = vld [vmem:[#allocation2 + $0x78] sm:$0xff]
          %v885 = vld [vmem:[#allocation2 + $0x80] sm:$0xff]
          %v886 = vld [vmem:[#allocation2 + $0x88] sm:$0xff]
          %v887 = vld [vmem:[#allocation2 + $0x90] sm:$0xff]
          %v888 = vld [vmem:[#allocation2 + $0x98] sm:$0xff]
          %v889 = vld [vmem:[#allocation2 + $0xa0] sm:$0xff]
          %v890 = vld [vmem:[#allocation2 + $0xa8] sm:$0xff]
          %v891 = vld [vmem:[#allocation2 + $0xb0] sm:$0xff]
          %v892 = vld [vmem:[#allocation2 + $0xb8] sm:$0xff]
          %v893 = vld [vmem:[#allocation2 + $0xc0] sm:$0xff]
          %v894 = vld [vmem:[#allocation2 + $0xc8] sm:$0xff]
          %v895 = vld [vmem:[#allocation2 + $0xd0] sm:$0xff]
          %v896 = vld [vmem:[#allocation2 + $0xd8] sm:$0xff]
          %v897 = vld [vmem:[#allocation2 + $0xe0] sm:$0xff]
          %v898 = vld [vmem:[#allocation2 + $0xe8] sm:$0xff]
          %v899 = vld [vmem:[#allocation2 + $0xf0] sm:$0xff]
          %v900 = vld [vmem:[#allocation2 + $0xf8] sm:$0xff]
          %v901 = vld [vmem:[#allocation2 + $0x100] sm:$0xff]
          %v902 = vld [vmem:[#allocation2 + $0x108] sm:$0xff]
          %v903 = vld [vmem:[#allocation2 + $0x110] sm:$0xff]
          %v904 = vld [vmem:[#allocation2 + $0x118] sm:$0xff]
          %v905 = vld [vmem:[#allocation2 + $0x120] sm:$0xff]
          %v906 = vld [vmem:[#allocation2 + $0x128] sm:$0xff]
          %v907 = vld [vmem:[#allocation2 + $0x130] sm:$0xff]
          %v908 = vld [vmem:[#allocation2 + $0x138] sm:$0xff]
          %v909 = vld [vmem:[#allocation2 + $0x140] sm:$0xff]
          %v910 = vld [vmem:[#allocation2 + $0x148] sm:$0xff]
          %v911 = vld [vmem:[#allocation2 + $0x150] sm:$0xff]
          %v912 = vld [vmem:[#allocation2 + $0x158] sm:$0xff]
          %v913 = vld [vmem:[#allocation2 + $0x160] sm:$0xff]
          %v914 = vld [vmem:[#allocation2 + $0x168] sm:$0xff]
          %v915 = vld [vmem:[#allocation2 + $0x170] sm:$0xff]
          %v916 = vld [vmem:[#allocation2 + $0x178] sm:$0xff]
          %v917 = vld [vmem:[#allocation2 + $0x180] sm:$0xff]
          %v918 = vld [vmem:[#allocation2 + $0x188] sm:$0xff]
          %v919 = vld [vmem:[#allocation2 + $0x190] sm:$0xff]
          %v920 = vld [vmem:[#allocation2 + $0x198] sm:$0xff]
          %v921 = vld [vmem:[#allocation2 + $0x1a0] sm:$0xff]
          %v922 = vld [vmem:[#allocation2 + $0x1a8] sm:$0xff]
          %v923 = vld [vmem:[#allocation2 + $0x1b0] sm:$0xff]
          %v924 = vld [vmem:[#allocation2 + $0x1b8] sm:$0xff]
          %v925 = vld [vmem:[#allocation2 + $0x1c0] sm:$0xff]
          %v926 = vld [vmem:[#allocation2 + $0x1c8] sm:$0xff]
          %v927 = vld [vmem:[#allocation2 + $0x1d0] sm:$0xff]
          %v928 = vld [vmem:[#allocation2 + $0x1d8] sm:$0xff]
          %v929 = vld [vmem:[#allocation2 + $0x1e0] sm:$0xff]
          %v930 = vld [vmem:[#allocation2 + $0x1e8] sm:$0xff]
          %v931 = vld [vmem:[#allocation2 + $0x1f0] sm:$0xff]
          %933 = vset.pattern.permute.xlu0 0
          %934 = vperm.xlu0 %933, %v637
          %v935 = vpop.permute.xlu0 %934
          %vm937 = vcmask 588800
          %v939 = vsel %vm937, %v635, 0
          %941 = vmatpush.msra.mxu0 0.0
          %942 = vmatpush.msra.mxu0 0.0
          %943 = vmatpush.msra.mxu0 0.0
          %944 = vmatpush.msra.mxu0 0.0
          %945 = vmatpush.msra.mxu0 0.0
          %946 = vmatpush.msra.mxu0 0.0
          %947 = vmatpush.msra.mxu0 0.0
          %948 = vmatpush.msra.mxu0 %v925
          %949 = vmatpush.msra.mxu0 %v918
          %950 = vmatpush.msra.mxu0 %v911
          %951 = vmatpush.msra.mxu0 %v904
          %952 = vmatpush.msra.mxu0 %v897
          %953 = vmatpush.msra.mxu0 %v890
          %954 = vmatpush.msra.mxu0 %v883
          %955 = vmatpush.msra.mxu0 %v876
          %956 = vmatpush.msra.mxu0 %v869
          %957 = vmatmul.f32.gmra.mxu0 %v939
          %v958 = vpop.f32.mrf.mxu0
          %v959 = vadd.f32 %v935, %v958
          %960 = vdwg.mxu0
          %961 = vmatpush.msra.mxu0 0.0
          %962 = vmatpush.msra.mxu0 0.0
          %963 = vmatpush.msra.mxu0 0.0
          %964 = vmatpush.msra.mxu0 0.0
          %965 = vmatpush.msra.mxu0 0.0
          %966 = vmatpush.msra.mxu0 0.0
          %967 = vmatpush.msra.mxu0 0.0
          %968 = vmatpush.msra.mxu0 %v926
          %969 = vmatpush.msra.mxu0 %v919
          %970 = vmatpush.msra.mxu0 %v912
          %971 = vmatpush.msra.mxu0 %v905
          %972 = vmatpush.msra.mxu0 %v898
          %973 = vmatpush.msra.mxu0 %v891
          %974 = vmatpush.msra.mxu0 %v884
          %975 = vmatpush.msra.mxu0 %v877
          %976 = vmatpush.msra.mxu0 %v870
          %977 = vmatmul.f32.gmra.mxu0 %v939
          %v978 = vpop.f32.mrf.mxu0
          %v979 = vadd.f32 %v935, %v978
          %980 = vdwg.mxu0
          %981 = vmatpush.msra.mxu0 0.0
          %982 = vmatpush.msra.mxu0 0.0
          %983 = vmatpush.msra.mxu0 0.0
          %984 = vmatpush.msra.mxu0 0.0
          %985 = vmatpush.msra.mxu0 0.0
          %986 = vmatpush.msra.mxu0 0.0
          %987 = vmatpush.msra.mxu0 0.0
          %988 = vmatpush.msra.mxu0 %v927
          %989 = vmatpush.msra.mxu0 %v920
          %990 = vmatpush.msra.mxu0 %v913
          %991 = vmatpush.msra.mxu0 %v906
          %992 = vmatpush.msra.mxu0 %v899
          %993 = vmatpush.msra.mxu0 %v892
          %994 = vmatpush.msra.mxu0 %v885
          %995 = vmatpush.msra.mxu0 %v878
          %996 = vmatpush.msra.mxu0 %v871
          %997 = vmatmul.f32.gmra.mxu0 %v939
          %v998 = vpop.f32.mrf.mxu0
          %v999 = vadd.f32 %v935, %v998
          %1000 = vdwg.mxu0
          %1001 = vmatpush.msra.mxu0 0.0
          %1002 = vmatpush.msra.mxu0 0.0
          %1003 = vmatpush.msra.mxu0 0.0
          %1004 = vmatpush.msra.mxu0 0.0
          %1005 = vmatpush.msra.mxu0 0.0
          %1006 = vmatpush.msra.mxu0 0.0
          %1007 = vmatpush.msra.mxu0 0.0
          %1008 = vmatpush.msra.mxu0 %v928
          %1009 = vmatpush.msra.mxu0 %v921
          %1010 = vmatpush.msra.mxu0 %v914
          %1011 = vmatpush.msra.mxu0 %v907
          %1012 = vmatpush.msra.mxu0 %v900
          %1013 = vmatpush.msra.mxu0 %v893
          %1014 = vmatpush.msra.mxu0 %v886
          %1015 = vmatpush.msra.mxu0 %v879
          %1016 = vmatpush.msra.mxu0 %v872
          %1017 = vmatmul.f32.gmra.mxu0 %v939
          %v1018 = vpop.f32.mrf.mxu0
          %v1019 = vadd.f32 %v935, %v1018
          %1020 = vdwg.mxu0
          %1021 = vmatpush.msra.mxu0 0.0
          %1022 = vmatpush.msra.mxu0 0.0
          %1023 = vmatpush.msra.mxu0 0.0
          %1024 = vmatpush.msra.mxu0 0.0
          %1025 = vmatpush.msra.mxu0 0.0
          %1026 = vmatpush.msra.mxu0 0.0
          %1027 = vmatpush.msra.mxu0 0.0
          %1028 = vmatpush.msra.mxu0 %v929
          %1029 = vmatpush.msra.mxu0 %v922
          %1030 = vmatpush.msra.mxu0 %v915
          %1031 = vmatpush.msra.mxu0 %v908
          %1032 = vmatpush.msra.mxu0 %v901
          %1033 = vmatpush.msra.mxu0 %v894
          %1034 = vmatpush.msra.mxu0 %v887
          %1035 = vmatpush.msra.mxu0 %v880
          %1036 = vmatpush.msra.mxu0 %v873
          %1037 = vmatmul.f32.gmra.mxu0 %v939
          %v1038 = vpop.f32.mrf.mxu0
          %v1039 = vadd.f32 %v935, %v1038
          %1040 = vdwg.mxu0
          %1041 = vmatpush.msra.mxu0 0.0
          %1042 = vmatpush.msra.mxu0 0.0
          %1043 = vmatpush.msra.mxu0 0.0
          %1044 = vmatpush.msra.mxu0 0.0
          %1045 = vmatpush.msra.mxu0 0.0
          %1046 = vmatpush.msra.mxu0 0.0
          %1047 = vmatpush.msra.mxu0 0.0
          %1048 = vmatpush.msra.mxu0 %v930
          %1049 = vmatpush.msra.mxu0 %v923
          %1050 = vmatpush.msra.mxu0 %v916
          %1051 = vmatpush.msra.mxu0 %v909
          %1052 = vmatpush.msra.mxu0 %v902
          %1053 = vmatpush.msra.mxu0 %v895
          %1054 = vmatpush.msra.mxu0 %v888
          %1055 = vmatpush.msra.mxu0 %v881
          %1056 = vmatpush.msra.mxu0 %v874
          %1057 = vmatmul.f32.gmra.mxu0 %v939
          %v1058 = vpop.f32.mrf.mxu0
          %v1059 = vadd.f32 %v935, %v1058
          %1060 = vdwg.mxu0
          %1061 = vmatpush.msra.mxu0 0.0
          %1062 = vmatpush.msra.mxu0 0.0
          %1063 = vmatpush.msra.mxu0 0.0
          %1064 = vmatpush.msra.mxu0 0.0
          %1065 = vmatpush.msra.mxu0 0.0
          %1066 = vmatpush.msra.mxu0 0.0
          %1067 = vmatpush.msra.mxu0 0.0
          %1068 = vmatpush.msra.mxu0 %v931
          %1069 = vmatpush.msra.mxu0 %v924
          %1070 = vmatpush.msra.mxu0 %v917
          %1071 = vmatpush.msra.mxu0 %v910
          %1072 = vmatpush.msra.mxu0 %v903
          %1073 = vmatpush.msra.mxu0 %v896
          %1074 = vmatpush.msra.mxu0 %v889
          %1075 = vmatpush.msra.mxu0 %v882
          %1076 = vmatpush.msra.mxu0 %v875
          %1077 = vmatmul.f32.gmra.mxu0 %v939
          %v1078 = vpop.f32.mrf.mxu0
          %v1079 = vadd.f32 %v935, %v1078
          %1080 = vdwg.mxu0
          %v1081 = vmax.f32 %v959, 0.0
          %v1082 = vmax.f32 %v979, 0.0
          %v1083 = vmax.f32 %v999, 0.0
          %v1084 = vmax.f32 %v1019, 0.0
          %v1085 = vmax.f32 %v1039, 0.0
          %v1086 = vmax.f32 %v1059, 0.0
          %v1087 = vmax.f32 %v1079, 0.0
          %s1088 = scalar_lea.vmem %s2, 32
          %v1089 = vld [vmem:[%s1088] sm:$0xff]
          %v1090 = vld [vmem:[%s1088 + $0x8] sm:$0xff]
          %s1091 = scalar_lea.vmem %s3, 32
          %v1092 = vld [vmem:[%s1091] sm:$0xff]
          %v1093 = vld [vmem:[%s1091 + $0x8] sm:$0xff]
          %1094 = vst [vmem:[#allocation2] sm:$0xff] %v1081
          %1095 = vst [vmem:[#allocation2 + $0x8] sm:$0xff] %v1082
          %1096 = vst [vmem:[#allocation2 + $0x10] sm:$0xff] %v1083
          %1097 = vst [vmem:[#allocation2 + $0x18] sm:$0xff] %v1084
          %1098 = vst [vmem:[#allocation2 + $0x20] sm:$0xff] %v1085
          %1099 = vst [vmem:[#allocation2 + $0x28] sm:$0xff] %v1086
          %1100 = vst [vmem:[#allocation2 + $0x30] sm:$0xff] %v1087
          %1101 = vrot.lane.b32.xlu0 %v1081, 127
          %v1102 = vpop.permute.xlu0 %1101
          %1103 = vrot.lane.b32.xlu0 %v1082, 127
          %v1104 = vpop.permute.xlu0 %1103
          %1105 = vrot.lane.b32.xlu0 %v1083, 127
          %v1106 = vpop.permute.xlu0 %1105
          %1107 = vrot.lane.b32.xlu0 %v1084, 127
          %v1108 = vpop.permute.xlu0 %1107
          %1109 = vrot.lane.b32.xlu0 %v1085, 127
          %v1110 = vpop.permute.xlu0 %1109
          %1111 = vrot.lane.b32.xlu0 %v1086, 127
          %v1112 = vpop.permute.xlu0 %1111
          %1113 = vrot.lane.b32.xlu0 %v1087, 127
          %v1114 = vpop.permute.xlu0 %1113
          %v1115 = vsel %vm253, %v1112, %v1114
          %v1116 = vsel %vm253, %v1110, %v1112
          %v1117 = vsel %vm253, %v1108, %v1110
          %v1118 = vsel %vm253, %v1106, %v1108
          %v1119 = vsel %vm253, %v1104, %v1106
          %v1120 = vsel %vm253, %v1102, %v1104
          %v1121 = vsel %vm253, %v1114, %v1102
          %1122 = vst [vmem:[#allocation2 + $0x38] sm:$0xff] %v1120
          %1123 = vst [vmem:[#allocation2 + $0x40] sm:$0xff] %v1119
          %1124 = vst [vmem:[#allocation2 + $0x48] sm:$0xff] %v1118
          %1125 = vst [vmem:[#allocation2 + $0x50] sm:$0xff] %v1117
          %1126 = vst [vmem:[#allocation2 + $0x58] sm:$0xff] %v1116
          %1127 = vst [vmem:[#allocation2 + $0x60] sm:$0xff] %v1115
          %1128 = vst [vmem:[#allocation2 + $0x68] sm:$0xff] %v1121
          %1129 = vrot.lane.b32.xlu0 %v1081, 126
          %v1130 = vpop.permute.xlu0 %1129
          %1131 = vrot.lane.b32.xlu0 %v1082, 126
          %v1132 = vpop.permute.xlu0 %1131
          %1133 = vrot.lane.b32.xlu0 %v1083, 126
          %v1134 = vpop.permute.xlu0 %1133
          %1135 = vrot.lane.b32.xlu0 %v1084, 126
          %v1136 = vpop.permute.xlu0 %1135
          %1137 = vrot.lane.b32.xlu0 %v1085, 126
          %v1138 = vpop.permute.xlu0 %1137
          %1139 = vrot.lane.b32.xlu0 %v1086, 126
          %v1140 = vpop.permute.xlu0 %1139
          %1141 = vrot.lane.b32.xlu0 %v1087, 126
          %v1142 = vpop.permute.xlu0 %1141
          %v1143 = vsel %vm300, %v1140, %v1142
          %v1144 = vsel %vm300, %v1138, %v1140
          %v1145 = vsel %vm300, %v1136, %v1138
          %v1146 = vsel %vm300, %v1134, %v1136
          %v1147 = vsel %vm300, %v1132, %v1134
          %v1148 = vsel %vm300, %v1130, %v1132
          %v1149 = vsel %vm300, %v1142, %v1130
          %1150 = vst [vmem:[#allocation2 + $0x70] sm:$0xff] %v1148
          %1151 = vst [vmem:[#allocation2 + $0x78] sm:$0xff] %v1147
          %1152 = vst [vmem:[#allocation2 + $0x80] sm:$0xff] %v1146
          %1153 = vst [vmem:[#allocation2 + $0x88] sm:$0xff] %v1145
          %1154 = vst [vmem:[#allocation2 + $0x90] sm:$0xff] %v1144
          %1155 = vst [vmem:[#allocation2 + $0x98] sm:$0xff] %v1143
          %1156 = vst [vmem:[#allocation2 + $0xa0] sm:$0xff] %v1149
          %1157 = vrot.lane.b32.xlu0 %v1081, 100
          %v1158 = vpop.permute.xlu0 %1157
          %1159 = vrot.lane.b32.xlu0 %v1082, 100
          %v1160 = vpop.permute.xlu0 %1159
          %1161 = vrot.lane.b32.xlu0 %v1083, 100
          %v1162 = vpop.permute.xlu0 %1161
          %1163 = vrot.lane.b32.xlu0 %v1084, 100
          %v1164 = vpop.permute.xlu0 %1163
          %1165 = vrot.lane.b32.xlu0 %v1085, 100
          %v1166 = vpop.permute.xlu0 %1165
          %1167 = vrot.lane.b32.xlu0 %v1086, 100
          %v1168 = vpop.permute.xlu0 %1167
          %1169 = vrot.lane.b32.xlu0 %v1087, 100
          %v1170 = vpop.permute.xlu0 %1169
          %v1171 = vsel %vm347, %v1168, %v1170
          %v1172 = vsel %vm347, %v1166, %v1168
          %v1173 = vsel %vm347, %v1164, %v1166
          %v1174 = vsel %vm347, %v1162, %v1164
          %v1175 = vsel %vm347, %v1160, %v1162
          %v1176 = vsel %vm347, %v1158, %v1160
          %v1177 = vsel %vm347, %v1170, %v1158
          %1178 = vst [vmem:[#allocation2 + $0xa8] sm:$0xff] %v1176
          %1179 = vst [vmem:[#allocation2 + $0xb0] sm:$0xff] %v1175
          %1180 = vst [vmem:[#allocation2 + $0xb8] sm:$0xff] %v1174
          %1181 = vst [vmem:[#allocation2 + $0xc0] sm:$0xff] %v1173
          %1182 = vst [vmem:[#allocation2 + $0xc8] sm:$0xff] %v1172
          %1183 = vst [vmem:[#allocation2 + $0xd0] sm:$0xff] %v1171
          %1184 = vst [vmem:[#allocation2 + $0xd8] sm:$0xff] %v1177
          %1185 = vrot.lane.b32.xlu0 %v1081, 99
          %v1186 = vpop.permute.xlu0 %1185
          %1187 = vrot.lane.b32.xlu0 %v1082, 99
          %v1188 = vpop.permute.xlu0 %1187
          %1189 = vrot.lane.b32.xlu0 %v1083, 99
          %v1190 = vpop.permute.xlu0 %1189
          %1191 = vrot.lane.b32.xlu0 %v1084, 99
          %v1192 = vpop.permute.xlu0 %1191
          %1193 = vrot.lane.b32.xlu0 %v1085, 99
          %v1194 = vpop.permute.xlu0 %1193
          %1195 = vrot.lane.b32.xlu0 %v1086, 99
          %v1196 = vpop.permute.xlu0 %1195
          %1197 = vrot.lane.b32.xlu0 %v1087, 99
          %v1198 = vpop.permute.xlu0 %1197
          %v1199 = vsel %vm394, %v1196, %v1198
          %v1200 = vsel %vm394, %v1194, %v1196
          %v1201 = vsel %vm394, %v1192, %v1194
          %v1202 = vsel %vm394, %v1190, %v1192
          %v1203 = vsel %vm394, %v1188, %v1190
          %v1204 = vsel %vm394, %v1186, %v1188
          %v1205 = vsel %vm394, %v1198, %v1186
          %1206 = vst [vmem:[#allocation2 + $0xe0] sm:$0xff] %v1204
          %1207 = vst [vmem:[#allocation2 + $0xe8] sm:$0xff] %v1203
          %1208 = vst [vmem:[#allocation2 + $0xf0] sm:$0xff] %v1202
          %1209 = vst [vmem:[#allocation2 + $0xf8] sm:$0xff] %v1201
          %1210 = vst [vmem:[#allocation2 + $0x100] sm:$0xff] %v1200
          %1211 = vst [vmem:[#allocation2 + $0x108] sm:$0xff] %v1199
          %1212 = vst [vmem:[#allocation2 + $0x110] sm:$0xff] %v1205
          %1213 = vrot.lane.b32.xlu0 %v1081, 98
          %v1214 = vpop.permute.xlu0 %1213
          %1215 = vrot.lane.b32.xlu0 %v1082, 98
          %v1216 = vpop.permute.xlu0 %1215
          %1217 = vrot.lane.b32.xlu0 %v1083, 98
          %v1218 = vpop.permute.xlu0 %1217
          %1219 = vrot.lane.b32.xlu0 %v1084, 98
          %v1220 = vpop.permute.xlu0 %1219
          %1221 = vrot.lane.b32.xlu0 %v1085, 98
          %v1222 = vpop.permute.xlu0 %1221
          %1223 = vrot.lane.b32.xlu0 %v1086, 98
          %v1224 = vpop.permute.xlu0 %1223
          %1225 = vrot.lane.b32.xlu0 %v1087, 98
          %v1226 = vpop.permute.xlu0 %1225
          %v1227 = vsel %vm441, %v1224, %v1226
          %v1228 = vsel %vm441, %v1222, %v1224
          %v1229 = vsel %vm441, %v1220, %v1222
          %v1230 = vsel %vm441, %v1218, %v1220
          %v1231 = vsel %vm441, %v1216, %v1218
          %v1232 = vsel %vm441, %v1214, %v1216
          %v1233 = vsel %vm441, %v1226, %v1214
          %1234 = vst [vmem:[#allocation2 + $0x118] sm:$0xff] %v1232
          %1235 = vst [vmem:[#allocation2 + $0x120] sm:$0xff] %v1231
          %1236 = vst [vmem:[#allocation2 + $0x128] sm:$0xff] %v1230
          %1237 = vst [vmem:[#allocation2 + $0x130] sm:$0xff] %v1229
          %1238 = vst [vmem:[#allocation2 + $0x138] sm:$0xff] %v1228
          %1239 = vst [vmem:[#allocation2 + $0x140] sm:$0xff] %v1227
          %1240 = vst [vmem:[#allocation2 + $0x148] sm:$0xff] %v1233
          %1241 = vrot.lane.b32.xlu0 %v1081, 72
          %v1242 = vpop.permute.xlu0 %1241
          %1243 = vrot.lane.b32.xlu0 %v1082, 72
          %v1244 = vpop.permute.xlu0 %1243
          %1245 = vrot.lane.b32.xlu0 %v1083, 72
          %v1246 = vpop.permute.xlu0 %1245
          %1247 = vrot.lane.b32.xlu0 %v1084, 72
          %v1248 = vpop.permute.xlu0 %1247
          %1249 = vrot.lane.b32.xlu0 %v1085, 72
          %v1250 = vpop.permute.xlu0 %1249
          %1251 = vrot.lane.b32.xlu0 %v1086, 72
          %v1252 = vpop.permute.xlu0 %1251
          %1253 = vrot.lane.b32.xlu0 %v1087, 72
          %v1254 = vpop.permute.xlu0 %1253
          %v1255 = vsel %vm488, %v1252, %v1254
          %v1256 = vsel %vm488, %v1250, %v1252
          %v1257 = vsel %vm488, %v1248, %v1250
          %v1258 = vsel %vm488, %v1246, %v1248
          %v1259 = vsel %vm488, %v1244, %v1246
          %v1260 = vsel %vm488, %v1242, %v1244
          %v1261 = vsel %vm488, %v1254, %v1242
          %1262 = vst [vmem:[#allocation2 + $0x150] sm:$0xff] %v1260
          %1263 = vst [vmem:[#allocation2 + $0x158] sm:$0xff] %v1259
          %1264 = vst [vmem:[#allocation2 + $0x160] sm:$0xff] %v1258
          %1265 = vst [vmem:[#allocation2 + $0x168] sm:$0xff] %v1257
          %1266 = vst [vmem:[#allocation2 + $0x170] sm:$0xff] %v1256
          %1267 = vst [vmem:[#allocation2 + $0x178] sm:$0xff] %v1255
          %1268 = vst [vmem:[#allocation2 + $0x180] sm:$0xff] %v1261
          %1269 = vrot.lane.b32.xlu0 %v1081, 71
          %v1270 = vpop.permute.xlu0 %1269
          %1271 = vrot.lane.b32.xlu0 %v1082, 71
          %v1272 = vpop.permute.xlu0 %1271
          %1273 = vrot.lane.b32.xlu0 %v1083, 71
          %v1274 = vpop.permute.xlu0 %1273
          %1275 = vrot.lane.b32.xlu0 %v1084, 71
          %v1276 = vpop.permute.xlu0 %1275
          %1277 = vrot.lane.b32.xlu0 %v1085, 71
          %v1278 = vpop.permute.xlu0 %1277
          %1279 = vrot.lane.b32.xlu0 %v1086, 71
          %v1280 = vpop.permute.xlu0 %1279
          %1281 = vrot.lane.b32.xlu0 %v1087, 71
          %v1282 = vpop.permute.xlu0 %1281
          %v1283 = vsel %vm535, %v1280, %v1282
          %v1284 = vsel %vm535, %v1278, %v1280
          %v1285 = vsel %vm535, %v1276, %v1278
          %v1286 = vsel %vm535, %v1274, %v1276
          %v1287 = vsel %vm535, %v1272, %v1274
          %v1288 = vsel %vm535, %v1270, %v1272
          %v1289 = vsel %vm535, %v1282, %v1270
          %1290 = vst [vmem:[#allocation2 + $0x188] sm:$0xff] %v1288
          %1291 = vst [vmem:[#allocation2 + $0x190] sm:$0xff] %v1287
          %1292 = vst [vmem:[#allocation2 + $0x198] sm:$0xff] %v1286
          %1293 = vst [vmem:[#allocation2 + $0x1a0] sm:$0xff] %v1285
          %1294 = vst [vmem:[#allocation2 + $0x1a8] sm:$0xff] %v1284
          %1295 = vst [vmem:[#allocation2 + $0x1b0] sm:$0xff] %v1283
          %1296 = vst [vmem:[#allocation2 + $0x1b8] sm:$0xff] %v1289
          %1297 = vrot.lane.b32.xlu0 %v1081, 70
          %v1298 = vpop.permute.xlu0 %1297
          %1299 = vrot.lane.b32.xlu0 %v1082, 70
          %v1300 = vpop.permute.xlu0 %1299
          %1301 = vrot.lane.b32.xlu0 %v1083, 70
          %v1302 = vpop.permute.xlu0 %1301
          %1303 = vrot.lane.b32.xlu0 %v1084, 70
          %v1304 = vpop.permute.xlu0 %1303
          %1305 = vrot.lane.b32.xlu0 %v1085, 70
          %v1306 = vpop.permute.xlu0 %1305
          %1307 = vrot.lane.b32.xlu0 %v1086, 70
          %v1308 = vpop.permute.xlu0 %1307
          %1309 = vrot.lane.b32.xlu0 %v1087, 70
          %v1310 = vpop.permute.xlu0 %1309
          %v1311 = vsel %vm582, %v1308, %v1310
          %v1312 = vsel %vm582, %v1306, %v1308
          %v1313 = vsel %vm582, %v1304, %v1306
          %v1314 = vsel %vm582, %v1302, %v1304
          %v1315 = vsel %vm582, %v1300, %v1302
          %v1316 = vsel %vm582, %v1298, %v1300
          %v1317 = vsel %vm582, %v1310, %v1298
          %1318 = vst [vmem:[#allocation2 + $0x1c0] sm:$0xff] %v1316
          %1319 = vst [vmem:[#allocation2 + $0x1c8] sm:$0xff] %v1315
          %1320 = vst [vmem:[#allocation2 + $0x1d0] sm:$0xff] %v1314
          %1321 = vst [vmem:[#allocation2 + $0x1d8] sm:$0xff] %v1313
          %1322 = vst [vmem:[#allocation2 + $0x1e0] sm:$0xff] %v1312
          %1323 = vst [vmem:[#allocation2 + $0x1e8] sm:$0xff] %v1311
          %1324 = vst [vmem:[#allocation2 + $0x1f0] sm:$0xff] %v1317
          %v1325 = vld [vmem:[#allocation2] sm:$0xff]
          %v1326 = vld [vmem:[#allocation2 + $0x8] sm:$0xff]
          %v1327 = vld [vmem:[#allocation2 + $0x10] sm:$0xff]
          %v1328 = vld [vmem:[#allocation2 + $0x18] sm:$0xff]
          %v1329 = vld [vmem:[#allocation2 + $0x20] sm:$0xff]
          %v1330 = vld [vmem:[#allocation2 + $0x28] sm:$0xff]
          %v1331 = vld [vmem:[#allocation2 + $0x30] sm:$0xff]
          %v1332 = vld [vmem:[#allocation2 + $0x38] sm:$0xff]
          %v1333 = vld [vmem:[#allocation2 + $0x40] sm:$0xff]
          %v1334 = vld [vmem:[#allocation2 + $0x48] sm:$0xff]
          %v1335 = vld [vmem:[#allocation2 + $0x50] sm:$0xff]
          %v1336 = vld [vmem:[#allocation2 + $0x58] sm:$0xff]
          %v1337 = vld [vmem:[#allocation2 + $0x60] sm:$0xff]
          %v1338 = vld [vmem:[#allocation2 + $0x68] sm:$0xff]
          %v1339 = vld [vmem:[#allocation2 + $0x70] sm:$0xff]
          %v1340 = vld [vmem:[#allocation2 + $0x78] sm:$0xff]
          %v1341 = vld [vmem:[#allocation2 + $0x80] sm:$0xff]
          %v1342 = vld [vmem:[#allocation2 + $0x88] sm:$0xff]
          %v1343 = vld [vmem:[#allocation2 + $0x90] sm:$0xff]
          %v1344 = vld [vmem:[#allocation2 + $0x98] sm:$0xff]
          %v1345 = vld [vmem:[#allocation2 + $0xa0] sm:$0xff]
          %v1346 = vld [vmem:[#allocation2 + $0xa8] sm:$0xff]
          %v1347 = vld [vmem:[#allocation2 + $0xb0] sm:$0xff]
          %v1348 = vld [vmem:[#allocation2 + $0xb8] sm:$0xff]
          %v1349 = vld [vmem:[#allocation2 + $0xc0] sm:$0xff]
          %v1350 = vld [vmem:[#allocation2 + $0xc8] sm:$0xff]
          %v1351 = vld [vmem:[#allocation2 + $0xd0] sm:$0xff]
          %v1352 = vld [vmem:[#allocation2 + $0xd8] sm:$0xff]
          %v1353 = vld [vmem:[#allocation2 + $0xe0] sm:$0xff]
          %v1354 = vld [vmem:[#allocation2 + $0xe8] sm:$0xff]
          %v1355 = vld [vmem:[#allocation2 + $0xf0] sm:$0xff]
          %v1356 = vld [vmem:[#allocation2 + $0xf8] sm:$0xff]
          %v1357 = vld [vmem:[#allocation2 + $0x100] sm:$0xff]
          %v1358 = vld [vmem:[#allocation2 + $0x108] sm:$0xff]
          %v1359 = vld [vmem:[#allocation2 + $0x110] sm:$0xff]
          %v1360 = vld [vmem:[#allocation2 + $0x118] sm:$0xff]
          %v1361 = vld [vmem:[#allocation2 + $0x120] sm:$0xff]
          %v1362 = vld [vmem:[#allocation2 + $0x128] sm:$0xff]
          %v1363 = vld [vmem:[#allocation2 + $0x130] sm:$0xff]
          %v1364 = vld [vmem:[#allocation2 + $0x138] sm:$0xff]
          %v1365 = vld [vmem:[#allocation2 + $0x140] sm:$0xff]
          %v1366 = vld [vmem:[#allocation2 + $0x148] sm:$0xff]
          %v1367 = vld [vmem:[#allocation2 + $0x150] sm:$0xff]
          %v1368 = vld [vmem:[#allocation2 + $0x158] sm:$0xff]
          %v1369 = vld [vmem:[#allocation2 + $0x160] sm:$0xff]
          %v1370 = vld [vmem:[#allocation2 + $0x168] sm:$0xff]
          %v1371 = vld [vmem:[#allocation2 + $0x170] sm:$0xff]
          %v1372 = vld [vmem:[#allocation2 + $0x178] sm:$0xff]
          %v1373 = vld [vmem:[#allocation2 + $0x180] sm:$0xff]
          %v1374 = vld [vmem:[#allocation2 + $0x188] sm:$0xff]
          %v1375 = vld [vmem:[#allocation2 + $0x190] sm:$0xff]
          %v1376 = vld [vmem:[#allocation2 + $0x198] sm:$0xff]
          %v1377 = vld [vmem:[#allocation2 + $0x1a0] sm:$0xff]
          %v1378 = vld [vmem:[#allocation2 + $0x1a8] sm:$0xff]
          %v1379 = vld [vmem:[#allocation2 + $0x1b0] sm:$0xff]
          %v1380 = vld [vmem:[#allocation2 + $0x1b8] sm:$0xff]
          %v1381 = vld [vmem:[#allocation2 + $0x1c0] sm:$0xff]
          %v1382 = vld [vmem:[#allocation2 + $0x1c8] sm:$0xff]
          %v1383 = vld [vmem:[#allocation2 + $0x1d0] sm:$0xff]
          %v1384 = vld [vmem:[#allocation2 + $0x1d8] sm:$0xff]
          %v1385 = vld [vmem:[#allocation2 + $0x1e0] sm:$0xff]
          %v1386 = vld [vmem:[#allocation2 + $0x1e8] sm:$0xff]
          %v1387 = vld [vmem:[#allocation2 + $0x1f0] sm:$0xff]
          %1389 = vset.pattern.permute.xlu0 0
          %1390 = vperm.xlu0 %1389, %v1092
          %v1391 = vpop.permute.xlu0 %1390
          %1394 = vset.pattern.permute.xlu0 0
          %1395 = vperm.xlu0 %1394, %v1093
          %v1396 = vpop.permute.xlu0 %1395
          %v1399 = vsel %vm937, %v1089, 0
          %v1402 = vsel %vm937, %v1090, 0
          %1404 = vmatpush.msra.mxu0 0.0
          %1405 = vmatpush.msra.mxu0 0.0
          %1406 = vmatpush.msra.mxu0 0.0
          %1407 = vmatpush.msra.mxu0 0.0
          %1408 = vmatpush.msra.mxu0 0.0
          %1409 = vmatpush.msra.mxu0 0.0
          %1410 = vmatpush.msra.mxu0 0.0
          %1411 = vmatpush.msra.mxu0 %v1381
          %1412 = vmatpush.msra.mxu0 %v1374
          %1413 = vmatpush.msra.mxu0 %v1367
          %1414 = vmatpush.msra.mxu0 %v1360
          %1415 = vmatpush.msra.mxu0 %v1353
          %1416 = vmatpush.msra.mxu0 %v1346
          %1417 = vmatpush.msra.mxu0 %v1339
          %1418 = vmatpush.msra.mxu0 %v1332
          %1419 = vmatpush.msra.mxu0 %v1325
          %1420 = vmatmul.f32.gmra.mxu0 %v1399
          %v1421 = vpop.f32.mrf.mxu0
          %v1422 = vadd.f32 %v1391, %v1421
          %1423 = vmatmul.f32.gmra.mxu0 %v1402
          %v1424 = vpop.f32.mrf.mxu0
          %v1425 = vadd.f32 %v1396, %v1424
          %1426 = vdwg.mxu0
          %1427 = vmatpush.msra.mxu0 0.0
          %1428 = vmatpush.msra.mxu0 0.0
          %1429 = vmatpush.msra.mxu0 0.0
          %1430 = vmatpush.msra.mxu0 0.0
          %1431 = vmatpush.msra.mxu0 0.0
          %1432 = vmatpush.msra.mxu0 0.0
          %1433 = vmatpush.msra.mxu0 0.0
          %1434 = vmatpush.msra.mxu0 %v1382
          %1435 = vmatpush.msra.mxu0 %v1375
          %1436 = vmatpush.msra.mxu0 %v1368
          %1437 = vmatpush.msra.mxu0 %v1361
          %1438 = vmatpush.msra.mxu0 %v1354
          %1439 = vmatpush.msra.mxu0 %v1347
          %1440 = vmatpush.msra.mxu0 %v1340
          %1441 = vmatpush.msra.mxu0 %v1333
          %1442 = vmatpush.msra.mxu0 %v1326
          %1443 = vmatmul.f32.gmra.mxu0 %v1399
          %v1444 = vpop.f32.mrf.mxu0
          %v1445 = vadd.f32 %v1391, %v1444
          %1446 = vmatmul.f32.gmra.mxu0 %v1402
          %v1447 = vpop.f32.mrf.mxu0
          %v1448 = vadd.f32 %v1396, %v1447
          %1449 = vdwg.mxu0
          %1450 = vmatpush.msra.mxu0 0.0
          %1451 = vmatpush.msra.mxu0 0.0
          %1452 = vmatpush.msra.mxu0 0.0
          %1453 = vmatpush.msra.mxu0 0.0
          %1454 = vmatpush.msra.mxu0 0.0
          %1455 = vmatpush.msra.mxu0 0.0
          %1456 = vmatpush.msra.mxu0 0.0
          %1457 = vmatpush.msra.mxu0 %v1383
          %1458 = vmatpush.msra.mxu0 %v1376
          %1459 = vmatpush.msra.mxu0 %v1369
          %1460 = vmatpush.msra.mxu0 %v1362
          %1461 = vmatpush.msra.mxu0 %v1355
          %1462 = vmatpush.msra.mxu0 %v1348
          %1463 = vmatpush.msra.mxu0 %v1341
          %1464 = vmatpush.msra.mxu0 %v1334
          %1465 = vmatpush.msra.mxu0 %v1327
          %1466 = vmatmul.f32.gmra.mxu0 %v1399
          %v1467 = vpop.f32.mrf.mxu0
          %v1468 = vadd.f32 %v1391, %v1467
          %1469 = vmatmul.f32.gmra.mxu0 %v1402
          %v1470 = vpop.f32.mrf.mxu0
          %v1471 = vadd.f32 %v1396, %v1470
          %1472 = vdwg.mxu0
          %1473 = vmatpush.msra.mxu0 0.0
          %1474 = vmatpush.msra.mxu0 0.0
          %1475 = vmatpush.msra.mxu0 0.0
          %1476 = vmatpush.msra.mxu0 0.0
          %1477 = vmatpush.msra.mxu0 0.0
          %1478 = vmatpush.msra.mxu0 0.0
          %1479 = vmatpush.msra.mxu0 0.0
          %1480 = vmatpush.msra.mxu0 %v1384
          %1481 = vmatpush.msra.mxu0 %v1377
          %1482 = vmatpush.msra.mxu0 %v1370
          %1483 = vmatpush.msra.mxu0 %v1363
          %1484 = vmatpush.msra.mxu0 %v1356
          %1485 = vmatpush.msra.mxu0 %v1349
          %1486 = vmatpush.msra.mxu0 %v1342
          %1487 = vmatpush.msra.mxu0 %v1335
          %1488 = vmatpush.msra.mxu0 %v1328
          %1489 = vmatmul.f32.gmra.mxu0 %v1399
          %v1490 = vpop.f32.mrf.mxu0
          %v1491 = vadd.f32 %v1391, %v1490
          %1492 = vmatmul.f32.gmra.mxu0 %v1402
          %v1493 = vpop.f32.mrf.mxu0
          %v1494 = vadd.f32 %v1396, %v1493
          %1495 = vdwg.mxu0
          %1496 = vmatpush.msra.mxu0 0.0
          %1497 = vmatpush.msra.mxu0 0.0
          %1498 = vmatpush.msra.mxu0 0.0
          %1499 = vmatpush.msra.mxu0 0.0
          %1500 = vmatpush.msra.mxu0 0.0
          %1501 = vmatpush.msra.mxu0 0.0
          %1502 = vmatpush.msra.mxu0 0.0
          %1503 = vmatpush.msra.mxu0 %v1385
          %1504 = vmatpush.msra.mxu0 %v1378
          %1505 = vmatpush.msra.mxu0 %v1371
          %1506 = vmatpush.msra.mxu0 %v1364
          %1507 = vmatpush.msra.mxu0 %v1357
          %1508 = vmatpush.msra.mxu0 %v1350
          %1509 = vmatpush.msra.mxu0 %v1343
          %1510 = vmatpush.msra.mxu0 %v1336
          %1511 = vmatpush.msra.mxu0 %v1329
          %1512 = vmatmul.f32.gmra.mxu0 %v1399
          %v1513 = vpop.f32.mrf.mxu0
          %v1514 = vadd.f32 %v1391, %v1513
          %1515 = vmatmul.f32.gmra.mxu0 %v1402
          %v1516 = vpop.f32.mrf.mxu0
          %v1517 = vadd.f32 %v1396, %v1516
          %1518 = vdwg.mxu0
          %1519 = vmatpush.msra.mxu0 0.0
          %1520 = vmatpush.msra.mxu0 0.0
          %1521 = vmatpush.msra.mxu0 0.0
          %1522 = vmatpush.msra.mxu0 0.0
          %1523 = vmatpush.msra.mxu0 0.0
          %1524 = vmatpush.msra.mxu0 0.0
          %1525 = vmatpush.msra.mxu0 0.0
          %1526 = vmatpush.msra.mxu0 %v1386
          %1527 = vmatpush.msra.mxu0 %v1379
          %1528 = vmatpush.msra.mxu0 %v1372
          %1529 = vmatpush.msra.mxu0 %v1365
          %1530 = vmatpush.msra.mxu0 %v1358
          %1531 = vmatpush.msra.mxu0 %v1351
          %1532 = vmatpush.msra.mxu0 %v1344
          %1533 = vmatpush.msra.mxu0 %v1337
          %1534 = vmatpush.msra.mxu0 %v1330
          %1535 = vmatmul.f32.gmra.mxu0 %v1399
          %v1536 = vpop.f32.mrf.mxu0
          %v1537 = vadd.f32 %v1391, %v1536
          %1538 = vmatmul.f32.gmra.mxu0 %v1402
          %v1539 = vpop.f32.mrf.mxu0
          %v1540 = vadd.f32 %v1396, %v1539
          %1541 = vdwg.mxu0
          %1542 = vmatpush.msra.mxu0 0.0
          %1543 = vmatpush.msra.mxu0 0.0
          %1544 = vmatpush.msra.mxu0 0.0
          %1545 = vmatpush.msra.mxu0 0.0
          %1546 = vmatpush.msra.mxu0 0.0
          %1547 = vmatpush.msra.mxu0 0.0
          %1548 = vmatpush.msra.mxu0 0.0
          %1549 = vmatpush.msra.mxu0 %v1387
          %1550 = vmatpush.msra.mxu0 %v1380
          %1551 = vmatpush.msra.mxu0 %v1373
          %1552 = vmatpush.msra.mxu0 %v1366
          %1553 = vmatpush.msra.mxu0 %v1359
          %1554 = vmatpush.msra.mxu0 %v1352
          %1555 = vmatpush.msra.mxu0 %v1345
          %1556 = vmatpush.msra.mxu0 %v1338
          %1557 = vmatpush.msra.mxu0 %v1331
          %1558 = vmatmul.f32.gmra.mxu0 %v1399
          %v1559 = vpop.f32.mrf.mxu0
          %v1560 = vadd.f32 %v1391, %v1559
          %1561 = vmatmul.f32.gmra.mxu0 %v1402
          %v1562 = vpop.f32.mrf.mxu0
          %v1563 = vadd.f32 %v1396, %v1562
          %1564 = vdwg.mxu0
          %v1565 = vmax.f32 %v1422, 0.0
          %v1566 = vmax.f32 %v1445, 0.0
          %v1567 = vmax.f32 %v1468, 0.0
          %v1568 = vmax.f32 %v1491, 0.0
          %v1569 = vmax.f32 %v1514, 0.0
          %v1570 = vmax.f32 %v1537, 0.0
          %v1571 = vmax.f32 %v1560, 0.0
          %v1572 = vmax.f32 %v1425, 0.0
          %v1573 = vmax.f32 %v1448, 0.0
          %v1574 = vmax.f32 %v1471, 0.0
          %v1575 = vmax.f32 %v1494, 0.0
          %v1576 = vmax.f32 %v1517, 0.0
          %v1577 = vmax.f32 %v1540, 0.0
          %v1578 = vmax.f32 %v1563, 0.0
          %1579 = vrot.lane.b32.xlu0 %v1565, 127
          %v1580 = vpop.permute.xlu0 %1579
          %1581 = vrot.lane.b32.xlu0 %v1572, 127
          %v1582 = vpop.permute.xlu0 %1581
          %1583 = vrot.lane.b32.xlu0 %v1566, 127
          %v1584 = vpop.permute.xlu0 %1583
          %1585 = vrot.lane.b32.xlu0 %v1573, 127
          %v1586 = vpop.permute.xlu0 %1585
          %1587 = vrot.lane.b32.xlu0 %v1567, 127
          %v1588 = vpop.permute.xlu0 %1587
          %1589 = vrot.lane.b32.xlu0 %v1574, 127
          %v1590 = vpop.permute.xlu0 %1589
          %1591 = vrot.lane.b32.xlu0 %v1568, 127
          %v1592 = vpop.permute.xlu0 %1591
          %1593 = vrot.lane.b32.xlu0 %v1575, 127
          %v1594 = vpop.permute.xlu0 %1593
          %1595 = vrot.lane.b32.xlu0 %v1569, 127
          %v1596 = vpop.permute.xlu0 %1595
          %1597 = vrot.lane.b32.xlu0 %v1576, 127
          %v1598 = vpop.permute.xlu0 %1597
          %1599 = vrot.lane.b32.xlu0 %v1570, 127
          %v1600 = vpop.permute.xlu0 %1599
          %1601 = vrot.lane.b32.xlu0 %v1577, 127
          %v1602 = vpop.permute.xlu0 %1601
          %1603 = vrot.lane.b32.xlu0 %v1571, 127
          %v1604 = vpop.permute.xlu0 %1603
          %1605 = vrot.lane.b32.xlu0 %v1578, 127
          %v1606 = vpop.permute.xlu0 %1605
          %v1607 = vsel %vm253, %v1600, %v1604
          %v1608 = vsel %vm253, %v1602, %v1606
          %v1609 = vsel %vm253, %v1596, %v1600
          %v1610 = vsel %vm253, %v1598, %v1602
          %v1611 = vsel %vm253, %v1592, %v1596
          %v1612 = vsel %vm253, %v1594, %v1598
          %v1613 = vsel %vm253, %v1588, %v1592
          %v1614 = vsel %vm253, %v1590, %v1594
          %v1615 = vsel %vm253, %v1584, %v1588
          %v1616 = vsel %vm253, %v1586, %v1590
          %v1617 = vsel %vm253, %v1580, %v1584
          %v1618 = vsel %vm253, %v1582, %v1586
          %v1619 = vsel %vm253, %v1604, %v1580
          %v1620 = vsel %vm253, %v1606, %v1582
          %v1621 = vmax.f32 %v1565, %v1617
          %v1622 = vmax.f32 %v1566, %v1615
          %v1623 = vmax.f32 %v1567, %v1613
          %v1624 = vmax.f32 %v1568, %v1611
          %v1625 = vmax.f32 %v1569, %v1609
          %v1626 = vmax.f32 %v1570, %v1607
          %v1627 = vmax.f32 %v1571, %v1619
          %v1628 = vmax.f32 %v1572, %v1618
          %v1629 = vmax.f32 %v1573, %v1616
          %v1630 = vmax.f32 %v1574, %v1614
          %v1631 = vmax.f32 %v1575, %v1612
          %v1632 = vmax.f32 %v1576, %v1610
          %v1633 = vmax.f32 %v1577, %v1608
          %v1634 = vmax.f32 %v1578, %v1620
          %1635 = vrot.lane.b32.xlu0 %v1565, 100
          %v1636 = vpop.permute.xlu0 %1635
          %1637 = vrot.lane.b32.xlu0 %v1572, 100
          %v1638 = vpop.permute.xlu0 %1637
          %1639 = vrot.lane.b32.xlu0 %v1566, 100
          %v1640 = vpop.permute.xlu0 %1639
          %1641 = vrot.lane.b32.xlu0 %v1573, 100
          %v1642 = vpop.permute.xlu0 %1641
          %1643 = vrot.lane.b32.xlu0 %v1567, 100
          %v1644 = vpop.permute.xlu0 %1643
          %1645 = vrot.lane.b32.xlu0 %v1574, 100
          %v1646 = vpop.permute.xlu0 %1645
          %1647 = vrot.lane.b32.xlu0 %v1568, 100
          %v1648 = vpop.permute.xlu0 %1647
          %1649 = vrot.lane.b32.xlu0 %v1575, 100
          %v1650 = vpop.permute.xlu0 %1649
          %1651 = vrot.lane.b32.xlu0 %v1569, 100
          %v1652 = vpop.permute.xlu0 %1651
          %1653 = vrot.lane.b32.xlu0 %v1576, 100
          %v1654 = vpop.permute.xlu0 %1653
          %1655 = vrot.lane.b32.xlu0 %v1570, 100
          %v1656 = vpop.permute.xlu0 %1655
          %1657 = vrot.lane.b32.xlu0 %v1577, 100
          %v1658 = vpop.permute.xlu0 %1657
          %1659 = vrot.lane.b32.xlu0 %v1571, 100
          %v1660 = vpop.permute.xlu0 %1659
          %1661 = vrot.lane.b32.xlu0 %v1578, 100
          %v1662 = vpop.permute.xlu0 %1661
          %v1663 = vsel %vm347, %v1656, %v1660
          %v1664 = vsel %vm347, %v1658, %v1662
          %v1665 = vsel %vm347, %v1652, %v1656
          %v1666 = vsel %vm347, %v1654, %v1658
          %v1667 = vsel %vm347, %v1648, %v1652
          %v1668 = vsel %vm347, %v1650, %v1654
          %v1669 = vsel %vm347, %v1644, %v1648
          %v1670 = vsel %vm347, %v1646, %v1650
          %v1671 = vsel %vm347, %v1640, %v1644
          %v1672 = vsel %vm347, %v1642, %v1646
          %v1673 = vsel %vm347, %v1636, %v1640
          %v1674 = vsel %vm347, %v1638, %v1642
          %v1675 = vsel %vm347, %v1660, %v1636
          %v1676 = vsel %vm347, %v1662, %v1638
          %v1677 = vmax.f32 %v1621, %v1673
          %v1678 = vmax.f32 %v1622, %v1671
          %v1679 = vmax.f32 %v1623, %v1669
          %v1680 = vmax.f32 %v1624, %v1667
          %v1681 = vmax.f32 %v1625, %v1665
          %v1682 = vmax.f32 %v1626, %v1663
          %v1683 = vmax.f32 %v1627, %v1675
          %v1684 = vmax.f32 %v1628, %v1674
          %v1685 = vmax.f32 %v1629, %v1672
          %v1686 = vmax.f32 %v1630, %v1670
          %v1687 = vmax.f32 %v1631, %v1668
          %v1688 = vmax.f32 %v1632, %v1666
          %v1689 = vmax.f32 %v1633, %v1664
          %v1690 = vmax.f32 %v1634, %v1676
          %1691 = vrot.lane.b32.xlu0 %v1565, 99
          %v1692 = vpop.permute.xlu0 %1691
          %1693 = vrot.lane.b32.xlu0 %v1572, 99
          %v1694 = vpop.permute.xlu0 %1693
          %1695 = vrot.lane.b32.xlu0 %v1566, 99
          %v1696 = vpop.permute.xlu0 %1695
          %1697 = vrot.lane.b32.xlu0 %v1573, 99
          %v1698 = vpop.permute.xlu0 %1697
          %1699 = vrot.lane.b32.xlu0 %v1567, 99
          %v1700 = vpop.permute.xlu0 %1699
          %1701 = vrot.lane.b32.xlu0 %v1574, 99
          %v1702 = vpop.permute.xlu0 %1701
          %1703 = vrot.lane.b32.xlu0 %v1568, 99
          %v1704 = vpop.permute.xlu0 %1703
          %1705 = vrot.lane.b32.xlu0 %v1575, 99
          %v1706 = vpop.permute.xlu0 %1705
          %1707 = vrot.lane.b32.xlu0 %v1569, 99
          %v1708 = vpop.permute.xlu0 %1707
          %1709 = vrot.lane.b32.xlu0 %v1576, 99
          %v1710 = vpop.permute.xlu0 %1709
          %1711 = vrot.lane.b32.xlu0 %v1570, 99
          %v1712 = vpop.permute.xlu0 %1711
          %1713 = vrot.lane.b32.xlu0 %v1577, 99
          %v1714 = vpop.permute.xlu0 %1713
          %1715 = vrot.lane.b32.xlu0 %v1571, 99
          %v1716 = vpop.permute.xlu0 %1715
          %1717 = vrot.lane.b32.xlu0 %v1578, 99
          %v1718 = vpop.permute.xlu0 %1717
          %v1719 = vsel %vm394, %v1712, %v1716
          %v1720 = vsel %vm394, %v1714, %v1718
          %v1721 = vsel %vm394, %v1708, %v1712
          %v1722 = vsel %vm394, %v1710, %v1714
          %v1723 = vsel %vm394, %v1704, %v1708
          %v1724 = vsel %vm394, %v1706, %v1710
          %v1725 = vsel %vm394, %v1700, %v1704
          %v1726 = vsel %vm394, %v1702, %v1706
          %v1727 = vsel %vm394, %v1696, %v1700
          %v1728 = vsel %vm394, %v1698, %v1702
          %v1729 = vsel %vm394, %v1692, %v1696
          %v1730 = vsel %vm394, %v1694, %v1698
          %v1731 = vsel %vm394, %v1716, %v1692
          %v1732 = vsel %vm394, %v1718, %v1694
          %v1733 = vmax.f32 %v1677, %v1729
          %v1734 = vmax.f32 %v1678, %v1727
          %v1735 = vmax.f32 %v1679, %v1725
          %v1736 = vmax.f32 %v1680, %v1723
          %v1737 = vmax.f32 %v1681, %v1721
          %v1738 = vmax.f32 %v1682, %v1719
          %v1739 = vmax.f32 %v1683, %v1731
          %v1740 = vmax.f32 %v1684, %v1730
          %v1741 = vmax.f32 %v1685, %v1728
          %v1742 = vmax.f32 %v1686, %v1726
          %v1743 = vmax.f32 %v1687, %v1724
          %v1744 = vmax.f32 %v1688, %v1722
          %v1745 = vmax.f32 %v1689, %v1720
          %v1746 = vmax.f32 %v1690, %v1732
          %s1747 = scalar_lea.vmem %s2, 48
          %v1748 = vld [vmem:[%s1747] sm:$0xff]
          %s1749 = scalar_lea.vmem %s3, 48
          %v1750 = vld [vmem:[%s1749] sm:$0xff]
          %1752 = vset.pattern.permute.xlu0 0
          %1753 = vperm.xlu0 %1752, %v1750
          %v1754 = vpop.permute.xlu0 %1753
          %vm1756 = vcmask 130048
          %v1758 = vsel %vm1756, %v1748, 0
          %1760 = vmatpush.msra.mxu0 0.0
          %1761 = vmatpush.msra.mxu0 0.0
          %1762 = vmatpush.msra.mxu0 0.0
          %1763 = vmatpush.msra.mxu0 0.0
          %1764 = vmatpush.msra.mxu0 0.0
          %1765 = vmatpush.msra.mxu0 0.0
          %1766 = vmatpush.msra.mxu0 0.0
          %1767 = vmatpush.msra.mxu0 0.0
          %1768 = vmatpush.msra.mxu0 0.0
          %1769 = vmatpush.msra.mxu0 0.0
          %1770 = vmatpush.msra.mxu0 0.0
          %1771 = vmatpush.msra.mxu0 0.0
          %1772 = vmatpush.msra.mxu0 0.0
          %1773 = vmatpush.msra.mxu0 0.0
          %1774 = vmatpush.msra.mxu0 %v1740
          %1775 = vmatpush.msra.mxu0 %v1733
          %1776 = vmatmul.f32.gmra.mxu0 %v1758
          %v1777 = vpop.f32.mrf.mxu0
          %v1778 = vadd.f32 %v1754, %v1777
          %1779 = vdwg.mxu0
          %1780 = vmatpush.msra.mxu0 0.0
          %1781 = vmatpush.msra.mxu0 0.0
          %1782 = vmatpush.msra.mxu0 0.0
          %1783 = vmatpush.msra.mxu0 0.0
          %1784 = vmatpush.msra.mxu0 0.0
          %1785 = vmatpush.msra.mxu0 0.0
          %1786 = vmatpush.msra.mxu0 0.0
          %1787 = vmatpush.msra.mxu0 0.0
          %1788 = vmatpush.msra.mxu0 0.0
          %1789 = vmatpush.msra.mxu0 0.0
          %1790 = vmatpush.msra.mxu0 0.0
          %1791 = vmatpush.msra.mxu0 0.0
          %1792 = vmatpush.msra.mxu0 0.0
          %1793 = vmatpush.msra.mxu0 0.0
          %1794 = vmatpush.msra.mxu0 %v1741
          %1795 = vmatpush.msra.mxu0 %v1734
          %1796 = vmatmul.f32.gmra.mxu0 %v1758
          %v1797 = vpop.f32.mrf.mxu0
          %v1798 = vadd.f32 %v1754, %v1797
          %1799 = vdwg.mxu0
          %1800 = vmatpush.msra.mxu0 0.0
          %1801 = vmatpush.msra.mxu0 0.0
          %1802 = vmatpush.msra.mxu0 0.0
          %1803 = vmatpush.msra.mxu0 0.0
          %1804 = vmatpush.msra.mxu0 0.0
          %1805 = vmatpush.msra.mxu0 0.0
          %1806 = vmatpush.msra.mxu0 0.0
          %1807 = vmatpush.msra.mxu0 0.0
          %1808 = vmatpush.msra.mxu0 0.0
          %1809 = vmatpush.msra.mxu0 0.0
          %1810 = vmatpush.msra.mxu0 0.0
          %1811 = vmatpush.msra.mxu0 0.0
          %1812 = vmatpush.msra.mxu0 0.0
          %1813 = vmatpush.msra.mxu0 0.0
          %1814 = vmatpush.msra.mxu0 %v1742
          %1815 = vmatpush.msra.mxu0 %v1735
          %1816 = vmatmul.f32.gmra.mxu0 %v1758
          %v1817 = vpop.f32.mrf.mxu0
          %v1818 = vadd.f32 %v1754, %v1817
          %1819 = vdwg.mxu0
          %1820 = vmatpush.msra.mxu0 0.0
          %1821 = vmatpush.msra.mxu0 0.0
          %1822 = vmatpush.msra.mxu0 0.0
          %1823 = vmatpush.msra.mxu0 0.0
          %1824 = vmatpush.msra.mxu0 0.0
          %1825 = vmatpush.msra.mxu0 0.0
          %1826 = vmatpush.msra.mxu0 0.0
          %1827 = vmatpush.msra.mxu0 0.0
          %1828 = vmatpush.msra.mxu0 0.0
          %1829 = vmatpush.msra.mxu0 0.0
          %1830 = vmatpush.msra.mxu0 0.0
          %1831 = vmatpush.msra.mxu0 0.0
          %1832 = vmatpush.msra.mxu0 0.0
          %1833 = vmatpush.msra.mxu0 0.0
          %1834 = vmatpush.msra.mxu0 %v1743
          %1835 = vmatpush.msra.mxu0 %v1736
          %1836 = vmatmul.f32.gmra.mxu0 %v1758
          %v1837 = vpop.f32.mrf.mxu0
          %v1838 = vadd.f32 %v1754, %v1837
          %1839 = vdwg.mxu0
          %1840 = vmatpush.msra.mxu0 0.0
          %1841 = vmatpush.msra.mxu0 0.0
          %1842 = vmatpush.msra.mxu0 0.0
          %1843 = vmatpush.msra.mxu0 0.0
          %1844 = vmatpush.msra.mxu0 0.0
          %1845 = vmatpush.msra.mxu0 0.0
          %1846 = vmatpush.msra.mxu0 0.0
          %1847 = vmatpush.msra.mxu0 0.0
          %1848 = vmatpush.msra.mxu0 0.0
          %1849 = vmatpush.msra.mxu0 0.0
          %1850 = vmatpush.msra.mxu0 0.0
          %1851 = vmatpush.msra.mxu0 0.0
          %1852 = vmatpush.msra.mxu0 0.0
          %1853 = vmatpush.msra.mxu0 0.0
          %1854 = vmatpush.msra.mxu0 %v1744
          %1855 = vmatpush.msra.mxu0 %v1737
          %1856 = vmatmul.f32.gmra.mxu0 %v1758
          %v1857 = vpop.f32.mrf.mxu0
          %v1858 = vadd.f32 %v1754, %v1857
          %1859 = vdwg.mxu0
          %1860 = vmatpush.msra.mxu0 0.0
          %1861 = vmatpush.msra.mxu0 0.0
          %1862 = vmatpush.msra.mxu0 0.0
          %1863 = vmatpush.msra.mxu0 0.0
          %1864 = vmatpush.msra.mxu0 0.0
          %1865 = vmatpush.msra.mxu0 0.0
          %1866 = vmatpush.msra.mxu0 0.0
          %1867 = vmatpush.msra.mxu0 0.0
          %1868 = vmatpush.msra.mxu0 0.0
          %1869 = vmatpush.msra.mxu0 0.0
          %1870 = vmatpush.msra.mxu0 0.0
          %1871 = vmatpush.msra.mxu0 0.0
          %1872 = vmatpush.msra.mxu0 0.0
          %1873 = vmatpush.msra.mxu0 0.0
          %1874 = vmatpush.msra.mxu0 %v1745
          %1875 = vmatpush.msra.mxu0 %v1738
          %1876 = vmatmul.f32.gmra.mxu0 %v1758
          %v1877 = vpop.f32.mrf.mxu0
          %v1878 = vadd.f32 %v1754, %v1877
          %1879 = vdwg.mxu0
          %1880 = vmatpush.msra.mxu0 0.0
          %1881 = vmatpush.msra.mxu0 0.0
          %1882 = vmatpush.msra.mxu0 0.0
          %1883 = vmatpush.msra.mxu0 0.0
          %1884 = vmatpush.msra.mxu0 0.0
          %1885 = vmatpush.msra.mxu0 0.0
          %1886 = vmatpush.msra.mxu0 0.0
          %1887 = vmatpush.msra.mxu0 0.0
          %1888 = vmatpush.msra.mxu0 0.0
          %1889 = vmatpush.msra.mxu0 0.0
          %1890 = vmatpush.msra.mxu0 0.0
          %1891 = vmatpush.msra.mxu0 0.0
          %1892 = vmatpush.msra.mxu0 0.0
          %1893 = vmatpush.msra.mxu0 0.0
          %1894 = vmatpush.msra.mxu0 %v1746
          %1895 = vmatpush.msra.mxu0 %v1739
          %1896 = vmatmul.f32.gmra.mxu0 %v1758
          %v1897 = vpop.f32.mrf.mxu0
          %v1898 = vadd.f32 %v1754, %v1897
          %1899 = vdwg.mxu0
          %v1900 = vmax.f32 %v1778, 0.0
          %v1901 = vmax.f32 %v1798, 0.0
          %v1902 = vmax.f32 %v1818, 0.0
          %v1903 = vmax.f32 %v1838, 0.0
          %v1904 = vmax.f32 %v1858, 0.0
          %v1905 = vmax.f32 %v1878, 0.0
          %v1906 = vmax.f32 %v1898, 0.0
          %s1907 = scalar_lea.vmem %s2, 64
          %v1908 = vld [vmem:[%s1907] sm:$0xff]
          %s1909 = scalar_lea.vmem %s3, 64
          %v1910 = vld [vmem:[%s1909] sm:$0xff]
          %1911 = vst [vmem:[#allocation2] sm:$0xff] %v1900
          %1912 = vst [vmem:[#allocation2 + $0x8] sm:$0xff] %v1901
          %1913 = vst [vmem:[#allocation2 + $0x10] sm:$0xff] %v1902
          %1914 = vst [vmem:[#allocation2 + $0x18] sm:$0xff] %v1903
          %1915 = vst [vmem:[#allocation2 + $0x20] sm:$0xff] %v1904
          %1916 = vst [vmem:[#allocation2 + $0x28] sm:$0xff] %v1905
          %1917 = vst [vmem:[#allocation2 + $0x30] sm:$0xff] %v1906
          %1918 = vrot.lane.b32.xlu0 %v1900, 126
          %v1919 = vpop.permute.xlu0 %1918
          %1920 = vrot.lane.b32.xlu0 %v1901, 126
          %v1921 = vpop.permute.xlu0 %1920
          %1922 = vrot.lane.b32.xlu0 %v1902, 126
          %v1923 = vpop.permute.xlu0 %1922
          %1924 = vrot.lane.b32.xlu0 %v1903, 126
          %v1925 = vpop.permute.xlu0 %1924
          %1926 = vrot.lane.b32.xlu0 %v1904, 126
          %v1927 = vpop.permute.xlu0 %1926
          %1928 = vrot.lane.b32.xlu0 %v1905, 126
          %v1929 = vpop.permute.xlu0 %1928
          %1930 = vrot.lane.b32.xlu0 %v1906, 126
          %v1931 = vpop.permute.xlu0 %1930
          %v1932 = vsel %vm300, %v1929, %v1931
          %v1933 = vsel %vm300, %v1927, %v1929
          %v1934 = vsel %vm300, %v1925, %v1927
          %v1935 = vsel %vm300, %v1923, %v1925
          %v1936 = vsel %vm300, %v1921, %v1923
          %v1937 = vsel %vm300, %v1919, %v1921
          %v1938 = vsel %vm300, %v1931, %v1919
          %1939 = vst [vmem:[#allocation2 + $0x38] sm:$0xff] %v1937
          %1940 = vst [vmem:[#allocation2 + $0x40] sm:$0xff] %v1936
          %1941 = vst [vmem:[#allocation2 + $0x48] sm:$0xff] %v1935
          %1942 = vst [vmem:[#allocation2 + $0x50] sm:$0xff] %v1934
          %1943 = vst [vmem:[#allocation2 + $0x58] sm:$0xff] %v1933
          %1944 = vst [vmem:[#allocation2 + $0x60] sm:$0xff] %v1932
          %1945 = vst [vmem:[#allocation2 + $0x68] sm:$0xff] %v1938
          %1946 = vrot.lane.b32.xlu0 %v1900, 124
          %v1947 = vpop.permute.xlu0 %1946
          %1948 = vrot.lane.b32.xlu0 %v1901, 124
          %v1949 = vpop.permute.xlu0 %1948
          %1950 = vrot.lane.b32.xlu0 %v1902, 124
          %v1951 = vpop.permute.xlu0 %1950
          %1952 = vrot.lane.b32.xlu0 %v1903, 124
          %v1953 = vpop.permute.xlu0 %1952
          %1954 = vrot.lane.b32.xlu0 %v1904, 124
          %v1955 = vpop.permute.xlu0 %1954
          %1956 = vrot.lane.b32.xlu0 %v1905, 124
          %v1957 = vpop.permute.xlu0 %1956
          %1958 = vrot.lane.b32.xlu0 %v1906, 124
          %v1959 = vpop.permute.xlu0 %1958
          %vm1960 = vcmp.lt.s32.totalorder %v252, 124
          %v1961 = vsel %vm1960, %v1957, %v1959
          %v1962 = vsel %vm1960, %v1955, %v1957
          %v1963 = vsel %vm1960, %v1953, %v1955
          %v1964 = vsel %vm1960, %v1951, %v1953
          %v1965 = vsel %vm1960, %v1949, %v1951
          %v1966 = vsel %vm1960, %v1947, %v1949
          %v1967 = vsel %vm1960, %v1959, %v1947
          %1968 = vst [vmem:[#allocation2 + $0x70] sm:$0xff] %v1966
          %1969 = vst [vmem:[#allocation2 + $0x78] sm:$0xff] %v1965
          %1970 = vst [vmem:[#allocation2 + $0x80] sm:$0xff] %v1964
          %1971 = vst [vmem:[#allocation2 + $0x88] sm:$0xff] %v1963
          %1972 = vst [vmem:[#allocation2 + $0x90] sm:$0xff] %v1962
          %1973 = vst [vmem:[#allocation2 + $0x98] sm:$0xff] %v1961
          %1974 = vst [vmem:[#allocation2 + $0xa0] sm:$0xff] %v1967
          %1975 = vrot.lane.b32.xlu0 %v1900, 72
          %v1976 = vpop.permute.xlu0 %1975
          %1977 = vrot.lane.b32.xlu0 %v1901, 72
          %v1978 = vpop.permute.xlu0 %1977
          %1979 = vrot.lane.b32.xlu0 %v1902, 72
          %v1980 = vpop.permute.xlu0 %1979
          %1981 = vrot.lane.b32.xlu0 %v1903, 72
          %v1982 = vpop.permute.xlu0 %1981
          %1983 = vrot.lane.b32.xlu0 %v1904, 72
          %v1984 = vpop.permute.xlu0 %1983
          %1985 = vrot.lane.b32.xlu0 %v1905, 72
          %v1986 = vpop.permute.xlu0 %1985
          %1987 = vrot.lane.b32.xlu0 %v1906, 72
          %v1988 = vpop.permute.xlu0 %1987
          %v1989 = vsel %vm488, %v1986, %v1988
          %v1990 = vsel %vm488, %v1984, %v1986
          %v1991 = vsel %vm488, %v1982, %v1984
          %v1992 = vsel %vm488, %v1980, %v1982
          %v1993 = vsel %vm488, %v1978, %v1980
          %v1994 = vsel %vm488, %v1976, %v1978
          %v1995 = vsel %vm488, %v1988, %v1976
          %1996 = vst [vmem:[#allocation2 + $0xa8] sm:$0xff] %v1994
          %1997 = vst [vmem:[#allocation2 + $0xb0] sm:$0xff] %v1993
          %1998 = vst [vmem:[#allocation2 + $0xb8] sm:$0xff] %v1992
          %1999 = vst [vmem:[#allocation2 + $0xc0] sm:$0xff] %v1991
          %2000 = vst [vmem:[#allocation2 + $0xc8] sm:$0xff] %v1990
          %2001 = vst [vmem:[#allocation2 + $0xd0] sm:$0xff] %v1989
          %2002 = vst [vmem:[#allocation2 + $0xd8] sm:$0xff] %v1995
          %2003 = vrot.lane.b32.xlu0 %v1900, 70
          %v2004 = vpop.permute.xlu0 %2003
          %2005 = vrot.lane.b32.xlu0 %v1901, 70
          %v2006 = vpop.permute.xlu0 %2005
          %2007 = vrot.lane.b32.xlu0 %v1902, 70
          %v2008 = vpop.permute.xlu0 %2007
          %2009 = vrot.lane.b32.xlu0 %v1903, 70
          %v2010 = vpop.permute.xlu0 %2009
          %2011 = vrot.lane.b32.xlu0 %v1904, 70
          %v2012 = vpop.permute.xlu0 %2011
          %2013 = vrot.lane.b32.xlu0 %v1905, 70
          %v2014 = vpop.permute.xlu0 %2013
          %2015 = vrot.lane.b32.xlu0 %v1906, 70
          %v2016 = vpop.permute.xlu0 %2015
          %v2017 = vsel %vm582, %v2014, %v2016
          %v2018 = vsel %vm582, %v2012, %v2014
          %v2019 = vsel %vm582, %v2010, %v2012
          %v2020 = vsel %vm582, %v2008, %v2010
          %v2021 = vsel %vm582, %v2006, %v2008
          %v2022 = vsel %vm582, %v2004, %v2006
          %v2023 = vsel %vm582, %v2016, %v2004
          %2024 = vst [vmem:[#allocation2 + $0xe0] sm:$0xff] %v2022
          %2025 = vst [vmem:[#allocation2 + $0xe8] sm:$0xff] %v2021
          %2026 = vst [vmem:[#allocation2 + $0xf0] sm:$0xff] %v2020
          %2027 = vst [vmem:[#allocation2 + $0xf8] sm:$0xff] %v2019
          %2028 = vst [vmem:[#allocation2 + $0x100] sm:$0xff] %v2018
          %2029 = vst [vmem:[#allocation2 + $0x108] sm:$0xff] %v2017
          %2030 = vst [vmem:[#allocation2 + $0x110] sm:$0xff] %v2023
          %2031 = vrot.lane.b32.xlu0 %v1900, 68
          %v2032 = vpop.permute.xlu0 %2031
          %2033 = vrot.lane.b32.xlu0 %v1901, 68
          %v2034 = vpop.permute.xlu0 %2033
          %2035 = vrot.lane.b32.xlu0 %v1902, 68
          %v2036 = vpop.permute.xlu0 %2035
          %2037 = vrot.lane.b32.xlu0 %v1903, 68
          %v2038 = vpop.permute.xlu0 %2037
          %2039 = vrot.lane.b32.xlu0 %v1904, 68
          %v2040 = vpop.permute.xlu0 %2039
          %2041 = vrot.lane.b32.xlu0 %v1905, 68
          %v2042 = vpop.permute.xlu0 %2041
          %2043 = vrot.lane.b32.xlu0 %v1906, 68
          %v2044 = vpop.permute.xlu0 %2043
          %vm2045 = vcmp.lt.s32.totalorder %v252, 68
          %v2046 = vsel %vm2045, %v2042, %v2044
          %v2047 = vsel %vm2045, %v2040, %v2042
          %v2048 = vsel %vm2045, %v2038, %v2040
          %v2049 = vsel %vm2045, %v2036, %v2038
          %v2050 = vsel %vm2045, %v2034, %v2036
          %v2051 = vsel %vm2045, %v2032, %v2034
          %v2052 = vsel %vm2045, %v2044, %v2032
          %2053 = vst [vmem:[#allocation2 + $0x118] sm:$0xff] %v2051
          %2054 = vst [vmem:[#allocation2 + $0x120] sm:$0xff] %v2050
          %2055 = vst [vmem:[#allocation2 + $0x128] sm:$0xff] %v2049
          %2056 = vst [vmem:[#allocation2 + $0x130] sm:$0xff] %v2048
          %2057 = vst [vmem:[#allocation2 + $0x138] sm:$0xff] %v2047
          %2058 = vst [vmem:[#allocation2 + $0x140] sm:$0xff] %v2046
          %2059 = vst [vmem:[#allocation2 + $0x148] sm:$0xff] %v2052
          %2060 = vrot.lane.b32.xlu0 %v1900, 16
          %v2061 = vpop.permute.xlu0 %2060
          %2062 = vrot.lane.b32.xlu0 %v1901, 16
          %v2063 = vpop.permute.xlu0 %2062
          %2064 = vrot.lane.b32.xlu0 %v1902, 16
          %v2065 = vpop.permute.xlu0 %2064
          %2066 = vrot.lane.b32.xlu0 %v1903, 16
          %v2067 = vpop.permute.xlu0 %2066
          %2068 = vrot.lane.b32.xlu0 %v1904, 16
          %v2069 = vpop.permute.xlu0 %2068
          %2070 = vrot.lane.b32.xlu0 %v1905, 16
          %v2071 = vpop.permute.xlu0 %2070
          %2072 = vrot.lane.b32.xlu0 %v1906, 16
          %v2073 = vpop.permute.xlu0 %2072
          %vm2074 = vcmp.lt.s32.totalorder %v252, 16
          %v2075 = vsel %vm2074, %v2071, %v2073
          %v2076 = vsel %vm2074, %v2069, %v2071
          %v2077 = vsel %vm2074, %v2067, %v2069
          %v2078 = vsel %vm2074, %v2065, %v2067
          %v2079 = vsel %vm2074, %v2063, %v2065
          %v2080 = vsel %vm2074, %v2061, %v2063
          %v2081 = vsel %vm2074, %v2073, %v2061
          %2082 = vst [vmem:[#allocation2 + $0x150] sm:$0xff] %v2080
          %2083 = vst [vmem:[#allocation2 + $0x158] sm:$0xff] %v2079
          %2084 = vst [vmem:[#allocation2 + $0x160] sm:$0xff] %v2078
          %2085 = vst [vmem:[#allocation2 + $0x168] sm:$0xff] %v2077
          %2086 = vst [vmem:[#allocation2 + $0x170] sm:$0xff] %v2076
          %2087 = vst [vmem:[#allocation2 + $0x178] sm:$0xff] %v2075
          %2088 = vst [vmem:[#allocation2 + $0x180] sm:$0xff] %v2081
          %2089 = vrot.lane.b32.xlu0 %v1900, 14
          %v2090 = vpop.permute.xlu0 %2089
          %2091 = vrot.lane.b32.xlu0 %v1901, 14
          %v2092 = vpop.permute.xlu0 %2091
          %2093 = vrot.lane.b32.xlu0 %v1902, 14
          %v2094 = vpop.permute.xlu0 %2093
          %2095 = vrot.lane.b32.xlu0 %v1903, 14
          %v2096 = vpop.permute.xlu0 %2095
          %2097 = vrot.lane.b32.xlu0 %v1904, 14
          %v2098 = vpop.permute.xlu0 %2097
          %2099 = vrot.lane.b32.xlu0 %v1905, 14
          %v2100 = vpop.permute.xlu0 %2099
          %2101 = vrot.lane.b32.xlu0 %v1906, 14
          %v2102 = vpop.permute.xlu0 %2101
          %vm2103 = vcmp.lt.s32.totalorder %v252, 14
          %v2104 = vsel %vm2103, %v2100, %v2102
          %v2105 = vsel %vm2103, %v2098, %v2100
          %v2106 = vsel %vm2103, %v2096, %v2098
          %v2107 = vsel %vm2103, %v2094, %v2096
          %v2108 = vsel %vm2103, %v2092, %v2094
          %v2109 = vsel %vm2103, %v2090, %v2092
          %v2110 = vsel %vm2103, %v2102, %v2090
          %2111 = vst [vmem:[#allocation2 + $0x188] sm:$0xff] %v2109
          %2112 = vst [vmem:[#allocation2 + $0x190] sm:$0xff] %v2108
          %2113 = vst [vmem:[#allocation2 + $0x198] sm:$0xff] %v2107
          %2114 = vst [vmem:[#allocation2 + $0x1a0] sm:$0xff] %v2106
          %2115 = vst [vmem:[#allocation2 + $0x1a8] sm:$0xff] %v2105
          %2116 = vst [vmem:[#allocation2 + $0x1b0] sm:$0xff] %v2104
          %2117 = vst [vmem:[#allocation2 + $0x1b8] sm:$0xff] %v2110
          %2118 = vrot.lane.b32.xlu0 %v1900, 12
          %v2119 = vpop.permute.xlu0 %2118
          %2120 = vrot.lane.b32.xlu0 %v1901, 12
          %v2121 = vpop.permute.xlu0 %2120
          %2122 = vrot.lane.b32.xlu0 %v1902, 12
          %v2123 = vpop.permute.xlu0 %2122
          %2124 = vrot.lane.b32.xlu0 %v1903, 12
          %v2125 = vpop.permute.xlu0 %2124
          %2126 = vrot.lane.b32.xlu0 %v1904, 12
          %v2127 = vpop.permute.xlu0 %2126
          %2128 = vrot.lane.b32.xlu0 %v1905, 12
          %v2129 = vpop.permute.xlu0 %2128
          %2130 = vrot.lane.b32.xlu0 %v1906, 12
          %v2131 = vpop.permute.xlu0 %2130
          %vm2132 = vcmp.lt.s32.totalorder %v252, 12
          %v2133 = vsel %vm2132, %v2129, %v2131
          %v2134 = vsel %vm2132, %v2127, %v2129
          %v2135 = vsel %vm2132, %v2125, %v2127
          %v2136 = vsel %vm2132, %v2123, %v2125
          %v2137 = vsel %vm2132, %v2121, %v2123
          %v2138 = vsel %vm2132, %v2119, %v2121
          %v2139 = vsel %vm2132, %v2131, %v2119
          %2140 = vst [vmem:[#allocation2 + $0x1c0] sm:$0xff] %v2138
          %2141 = vst [vmem:[#allocation2 + $0x1c8] sm:$0xff] %v2137
          %2142 = vst [vmem:[#allocation2 + $0x1d0] sm:$0xff] %v2136
          %2143 = vst [vmem:[#allocation2 + $0x1d8] sm:$0xff] %v2135
          %2144 = vst [vmem:[#allocation2 + $0x1e0] sm:$0xff] %v2134
          %2145 = vst [vmem:[#allocation2 + $0x1e8] sm:$0xff] %v2133
          %2146 = vst [vmem:[#allocation2 + $0x1f0] sm:$0xff] %v2139
          %v2147 = vld [vmem:[#allocation2] sm:$0xff]
          %v2148 = vld [vmem:[#allocation2 + $0x8] sm:$0xff]
          %v2149 = vld [vmem:[#allocation2 + $0x10] sm:$0xff]
          %v2150 = vld [vmem:[#allocation2 + $0x18] sm:$0xff]
          %v2151 = vld [vmem:[#allocation2 + $0x20] sm:$0xff]
          %v2152 = vld [vmem:[#allocation2 + $0x28] sm:$0xff]
          %v2153 = vld [vmem:[#allocation2 + $0x30] sm:$0xff]
          %v2154 = vld [vmem:[#allocation2 + $0x38] sm:$0xff]
          %v2155 = vld [vmem:[#allocation2 + $0x40] sm:$0xff]
          %v2156 = vld [vmem:[#allocation2 + $0x48] sm:$0xff]
          %v2157 = vld [vmem:[#allocation2 + $0x50] sm:$0xff]
          %v2158 = vld [vmem:[#allocation2 + $0x58] sm:$0xff]
          %v2159 = vld [vmem:[#allocation2 + $0x60] sm:$0xff]
          %v2160 = vld [vmem:[#allocation2 + $0x68] sm:$0xff]
          %v2161 = vld [vmem:[#allocation2 + $0x70] sm:$0xff]
          %v2162 = vld [vmem:[#allocation2 + $0x78] sm:$0xff]
          %v2163 = vld [vmem:[#allocation2 + $0x80] sm:$0xff]
          %v2164 = vld [vmem:[#allocation2 + $0x88] sm:$0xff]
          %v2165 = vld [vmem:[#allocation2 + $0x90] sm:$0xff]
          %v2166 = vld [vmem:[#allocation2 + $0x98] sm:$0xff]
          %v2167 = vld [vmem:[#allocation2 + $0xa0] sm:$0xff]
          %v2168 = vld [vmem:[#allocation2 + $0xa8] sm:$0xff]
          %v2169 = vld [vmem:[#allocation2 + $0xb0] sm:$0xff]
          %v2170 = vld [vmem:[#allocation2 + $0xb8] sm:$0xff]
          %v2171 = vld [vmem:[#allocation2 + $0xc0] sm:$0xff]
          %v2172 = vld [vmem:[#allocation2 + $0xc8] sm:$0xff]
          %v2173 = vld [vmem:[#allocation2 + $0xd0] sm:$0xff]
          %v2174 = vld [vmem:[#allocation2 + $0xd8] sm:$0xff]
          %v2175 = vld [vmem:[#allocation2 + $0xe0] sm:$0xff]
          %v2176 = vld [vmem:[#allocation2 + $0xe8] sm:$0xff]
          %v2177 = vld [vmem:[#allocation2 + $0xf0] sm:$0xff]
          %v2178 = vld [vmem:[#allocation2 + $0xf8] sm:$0xff]
          %v2179 = vld [vmem:[#allocation2 + $0x100] sm:$0xff]
          %v2180 = vld [vmem:[#allocation2 + $0x108] sm:$0xff]
          %v2181 = vld [vmem:[#allocation2 + $0x110] sm:$0xff]
          %v2182 = vld [vmem:[#allocation2 + $0x118] sm:$0xff]
          %v2183 = vld [vmem:[#allocation2 + $0x120] sm:$0xff]
          %v2184 = vld [vmem:[#allocation2 + $0x128] sm:$0xff]
          %v2185 = vld [vmem:[#allocation2 + $0x130] sm:$0xff]
          %v2186 = vld [vmem:[#allocation2 + $0x138] sm:$0xff]
          %v2187 = vld [vmem:[#allocation2 + $0x140] sm:$0xff]
          %v2188 = vld [vmem:[#allocation2 + $0x148] sm:$0xff]
          %v2189 = vld [vmem:[#allocation2 + $0x150] sm:$0xff]
          %v2190 = vld [vmem:[#allocation2 + $0x158] sm:$0xff]
          %v2191 = vld [vmem:[#allocation2 + $0x160] sm:$0xff]
          %v2192 = vld [vmem:[#allocation2 + $0x168] sm:$0xff]
          %v2193 = vld [vmem:[#allocation2 + $0x170] sm:$0xff]
          %v2194 = vld [vmem:[#allocation2 + $0x178] sm:$0xff]
          %v2195 = vld [vmem:[#allocation2 + $0x180] sm:$0xff]
          %v2196 = vld [vmem:[#allocation2 + $0x188] sm:$0xff]
          %v2197 = vld [vmem:[#allocation2 + $0x190] sm:$0xff]
          %v2198 = vld [vmem:[#allocation2 + $0x198] sm:$0xff]
          %v2199 = vld [vmem:[#allocation2 + $0x1a0] sm:$0xff]
          %v2200 = vld [vmem:[#allocation2 + $0x1a8] sm:$0xff]
          %v2201 = vld [vmem:[#allocation2 + $0x1b0] sm:$0xff]
          %v2202 = vld [vmem:[#allocation2 + $0x1b8] sm:$0xff]
          %v2203 = vld [vmem:[#allocation2 + $0x1c0] sm:$0xff]
          %v2204 = vld [vmem:[#allocation2 + $0x1c8] sm:$0xff]
          %v2205 = vld [vmem:[#allocation2 + $0x1d0] sm:$0xff]
          %v2206 = vld [vmem:[#allocation2 + $0x1d8] sm:$0xff]
          %v2207 = vld [vmem:[#allocation2 + $0x1e0] sm:$0xff]
          %v2208 = vld [vmem:[#allocation2 + $0x1e8] sm:$0xff]
          %v2209 = vld [vmem:[#allocation2 + $0x1f0] sm:$0xff]
          %2211 = vset.pattern.permute.xlu0 0
          %2212 = vperm.xlu0 %2211, %v1910
          %v2213 = vpop.permute.xlu0 %2212
          %v2216 = vsel %vm937, %v1908, 0
          %2218 = vmatpush.msra.mxu0 0.0
          %2219 = vmatpush.msra.mxu0 0.0
          %2220 = vmatpush.msra.mxu0 0.0
          %2221 = vmatpush.msra.mxu0 0.0
          %2222 = vmatpush.msra.mxu0 0.0
          %2223 = vmatpush.msra.mxu0 0.0
          %2224 = vmatpush.msra.mxu0 0.0
          %2225 = vmatpush.msra.mxu0 %v2203
          %2226 = vmatpush.msra.mxu0 %v2196
          %2227 = vmatpush.msra.mxu0 %v2189
          %2228 = vmatpush.msra.mxu0 %v2182
          %2229 = vmatpush.msra.mxu0 %v2175
          %2230 = vmatpush.msra.mxu0 %v2168
          %2231 = vmatpush.msra.mxu0 %v2161
          %2232 = vmatpush.msra.mxu0 %v2154
          %2233 = vmatpush.msra.mxu0 %v2147
          %2234 = vmatmul.f32.gmra.mxu0 %v2216
          %v2235 = vpop.f32.mrf.mxu0
          %v2236 = vadd.f32 %v2213, %v2235
          %2237 = vdwg.mxu0
          %2238 = vmatpush.msra.mxu0 0.0
          %2239 = vmatpush.msra.mxu0 0.0
          %2240 = vmatpush.msra.mxu0 0.0
          %2241 = vmatpush.msra.mxu0 0.0
          %2242 = vmatpush.msra.mxu0 0.0
          %2243 = vmatpush.msra.mxu0 0.0
          %2244 = vmatpush.msra.mxu0 0.0
          %2245 = vmatpush.msra.mxu0 %v2204
          %2246 = vmatpush.msra.mxu0 %v2197
          %2247 = vmatpush.msra.mxu0 %v2190
          %2248 = vmatpush.msra.mxu0 %v2183
          %2249 = vmatpush.msra.mxu0 %v2176
          %2250 = vmatpush.msra.mxu0 %v2169
          %2251 = vmatpush.msra.mxu0 %v2162
          %2252 = vmatpush.msra.mxu0 %v2155
          %2253 = vmatpush.msra.mxu0 %v2148
          %2254 = vmatmul.f32.gmra.mxu0 %v2216
          %v2255 = vpop.f32.mrf.mxu0
          %v2256 = vadd.f32 %v2213, %v2255
          %2257 = vdwg.mxu0
          %2258 = vmatpush.msra.mxu0 0.0
          %2259 = vmatpush.msra.mxu0 0.0
          %2260 = vmatpush.msra.mxu0 0.0
          %2261 = vmatpush.msra.mxu0 0.0
          %2262 = vmatpush.msra.mxu0 0.0
          %2263 = vmatpush.msra.mxu0 0.0
          %2264 = vmatpush.msra.mxu0 0.0
          %2265 = vmatpush.msra.mxu0 %v2205
          %2266 = vmatpush.msra.mxu0 %v2198
          %2267 = vmatpush.msra.mxu0 %v2191
          %2268 = vmatpush.msra.mxu0 %v2184
          %2269 = vmatpush.msra.mxu0 %v2177
          %2270 = vmatpush.msra.mxu0 %v2170
          %2271 = vmatpush.msra.mxu0 %v2163
          %2272 = vmatpush.msra.mxu0 %v2156
          %2273 = vmatpush.msra.mxu0 %v2149
          %2274 = vmatmul.f32.gmra.mxu0 %v2216
          %v2275 = vpop.f32.mrf.mxu0
          %v2276 = vadd.f32 %v2213, %v2275
          %2277 = vdwg.mxu0
          %2278 = vmatpush.msra.mxu0 0.0
          %2279 = vmatpush.msra.mxu0 0.0
          %2280 = vmatpush.msra.mxu0 0.0
          %2281 = vmatpush.msra.mxu0 0.0
          %2282 = vmatpush.msra.mxu0 0.0
          %2283 = vmatpush.msra.mxu0 0.0
          %2284 = vmatpush.msra.mxu0 0.0
          %2285 = vmatpush.msra.mxu0 %v2206
          %2286 = vmatpush.msra.mxu0 %v2199
          %2287 = vmatpush.msra.mxu0 %v2192
          %2288 = vmatpush.msra.mxu0 %v2185
          %2289 = vmatpush.msra.mxu0 %v2178
          %2290 = vmatpush.msra.mxu0 %v2171
          %2291 = vmatpush.msra.mxu0 %v2164
          %2292 = vmatpush.msra.mxu0 %v2157
          %2293 = vmatpush.msra.mxu0 %v2150
          %2294 = vmatmul.f32.gmra.mxu0 %v2216
          %v2295 = vpop.f32.mrf.mxu0
          %v2296 = vadd.f32 %v2213, %v2295
          %2297 = vdwg.mxu0
          %2298 = vmatpush.msra.mxu0 0.0
          %2299 = vmatpush.msra.mxu0 0.0
          %2300 = vmatpush.msra.mxu0 0.0
          %2301 = vmatpush.msra.mxu0 0.0
          %2302 = vmatpush.msra.mxu0 0.0
          %2303 = vmatpush.msra.mxu0 0.0
          %2304 = vmatpush.msra.mxu0 0.0
          %2305 = vmatpush.msra.mxu0 %v2207
          %2306 = vmatpush.msra.mxu0 %v2200
          %2307 = vmatpush.msra.mxu0 %v2193
          %2308 = vmatpush.msra.mxu0 %v2186
          %2309 = vmatpush.msra.mxu0 %v2179
          %2310 = vmatpush.msra.mxu0 %v2172
          %2311 = vmatpush.msra.mxu0 %v2165
          %2312 = vmatpush.msra.mxu0 %v2158
          %2313 = vmatpush.msra.mxu0 %v2151
          %2314 = vmatmul.f32.gmra.mxu0 %v2216
          %v2315 = vpop.f32.mrf.mxu0
          %v2316 = vadd.f32 %v2213, %v2315
          %2317 = vdwg.mxu0
          %2318 = vmatpush.msra.mxu0 0.0
          %2319 = vmatpush.msra.mxu0 0.0
          %2320 = vmatpush.msra.mxu0 0.0
          %2321 = vmatpush.msra.mxu0 0.0
          %2322 = vmatpush.msra.mxu0 0.0
          %2323 = vmatpush.msra.mxu0 0.0
          %2324 = vmatpush.msra.mxu0 0.0
          %2325 = vmatpush.msra.mxu0 %v2208
          %2326 = vmatpush.msra.mxu0 %v2201
          %2327 = vmatpush.msra.mxu0 %v2194
          %2328 = vmatpush.msra.mxu0 %v2187
          %2329 = vmatpush.msra.mxu0 %v2180
          %2330 = vmatpush.msra.mxu0 %v2173
          %2331 = vmatpush.msra.mxu0 %v2166
          %2332 = vmatpush.msra.mxu0 %v2159
          %2333 = vmatpush.msra.mxu0 %v2152
          %2334 = vmatmul.f32.gmra.mxu0 %v2216
          %v2335 = vpop.f32.mrf.mxu0
          %v2336 = vadd.f32 %v2213, %v2335
          %2337 = vdwg.mxu0
          %2338 = vmatpush.msra.mxu0 0.0
          %2339 = vmatpush.msra.mxu0 0.0
          %2340 = vmatpush.msra.mxu0 0.0
          %2341 = vmatpush.msra.mxu0 0.0
          %2342 = vmatpush.msra.mxu0 0.0
          %2343 = vmatpush.msra.mxu0 0.0
          %2344 = vmatpush.msra.mxu0 0.0
          %2345 = vmatpush.msra.mxu0 %v2209
          %2346 = vmatpush.msra.mxu0 %v2202
          %2347 = vmatpush.msra.mxu0 %v2195
          %2348 = vmatpush.msra.mxu0 %v2188
          %2349 = vmatpush.msra.mxu0 %v2181
          %2350 = vmatpush.msra.mxu0 %v2174
          %2351 = vmatpush.msra.mxu0 %v2167
          %2352 = vmatpush.msra.mxu0 %v2160
          %2353 = vmatpush.msra.mxu0 %v2153
          %2354 = vmatmul.f32.gmra.mxu0 %v2216
          %v2355 = vpop.f32.mrf.mxu0
          %v2356 = vadd.f32 %v2213, %v2355
          %2357 = vdwg.mxu0
          %v2358 = vmax.f32 %v2236, 0.0
          %v2359 = vmax.f32 %v2256, 0.0
          %v2360 = vmax.f32 %v2276, 0.0
          %v2361 = vmax.f32 %v2296, 0.0
          %v2362 = vmax.f32 %v2316, 0.0
          %v2363 = vmax.f32 %v2336, 0.0
          %v2364 = vmax.f32 %v2356, 0.0
          %s2365 = scalar_lea.vmem %s2, 80
          %v2366 = vld [vmem:[%s2365] sm:$0xff]
          %v2367 = vld [vmem:[%s2365 + $0x8] sm:$0xff]
          %s2368 = scalar_lea.vmem %s3, 80
          %v2369 = vld [vmem:[%s2368] sm:$0xff]
          %v2370 = vld [vmem:[%s2368 + $0x8] sm:$0xff]
          %2371 = vst [vmem:[#allocation2] sm:$0xff] %v2358
          %2372 = vst [vmem:[#allocation2 + $0x8] sm:$0xff] %v2359
          %2373 = vst [vmem:[#allocation2 + $0x10] sm:$0xff] %v2360
          %2374 = vst [vmem:[#allocation2 + $0x18] sm:$0xff] %v2361
          %2375 = vst [vmem:[#allocation2 + $0x20] sm:$0xff] %v2362
          %2376 = vst [vmem:[#allocation2 + $0x28] sm:$0xff] %v2363
          %2377 = vst [vmem:[#allocation2 + $0x30] sm:$0xff] %v2364
          %2378 = vrot.lane.b32.xlu0 %v2358, 126
          %v2379 = vpop.permute.xlu0 %2378
          %2380 = vrot.lane.b32.xlu0 %v2359, 126
          %v2381 = vpop.permute.xlu0 %2380
          %2382 = vrot.lane.b32.xlu0 %v2360, 126
          %v2383 = vpop.permute.xlu0 %2382
          %2384 = vrot.lane.b32.xlu0 %v2361, 126
          %v2385 = vpop.permute.xlu0 %2384
          %2386 = vrot.lane.b32.xlu0 %v2362, 126
          %v2387 = vpop.permute.xlu0 %2386
          %2388 = vrot.lane.b32.xlu0 %v2363, 126
          %v2389 = vpop.permute.xlu0 %2388
          %2390 = vrot.lane.b32.xlu0 %v2364, 126
          %v2391 = vpop.permute.xlu0 %2390
          %v2392 = vsel %vm300, %v2389, %v2391
          %v2393 = vsel %vm300, %v2387, %v2389
          %v2394 = vsel %vm300, %v2385, %v2387
          %v2395 = vsel %vm300, %v2383, %v2385
          %v2396 = vsel %vm300, %v2381, %v2383
          %v2397 = vsel %vm300, %v2379, %v2381
          %v2398 = vsel %vm300, %v2391, %v2379
          %2399 = vst [vmem:[#allocation2 + $0x38] sm:$0xff] %v2397
          %2400 = vst [vmem:[#allocation2 + $0x40] sm:$0xff] %v2396
          %2401 = vst [vmem:[#allocation2 + $0x48] sm:$0xff] %v2395
          %2402 = vst [vmem:[#allocation2 + $0x50] sm:$0xff] %v2394
          %2403 = vst [vmem:[#allocation2 + $0x58] sm:$0xff] %v2393
          %2404 = vst [vmem:[#allocation2 + $0x60] sm:$0xff] %v2392
          %2405 = vst [vmem:[#allocation2 + $0x68] sm:$0xff] %v2398
          %2406 = vrot.lane.b32.xlu0 %v2358, 124
          %v2407 = vpop.permute.xlu0 %2406
          %2408 = vrot.lane.b32.xlu0 %v2359, 124
          %v2409 = vpop.permute.xlu0 %2408
          %2410 = vrot.lane.b32.xlu0 %v2360, 124
          %v2411 = vpop.permute.xlu0 %2410
          %2412 = vrot.lane.b32.xlu0 %v2361, 124
          %v2413 = vpop.permute.xlu0 %2412
          %2414 = vrot.lane.b32.xlu0 %v2362, 124
          %v2415 = vpop.permute.xlu0 %2414
          %2416 = vrot.lane.b32.xlu0 %v2363, 124
          %v2417 = vpop.permute.xlu0 %2416
          %2418 = vrot.lane.b32.xlu0 %v2364, 124
          %v2419 = vpop.permute.xlu0 %2418
          %v2420 = vsel %vm1960, %v2417, %v2419
          %v2421 = vsel %vm1960, %v2415, %v2417
          %v2422 = vsel %vm1960, %v2413, %v2415
          %v2423 = vsel %vm1960, %v2411, %v2413
          %v2424 = vsel %vm1960, %v2409, %v2411
          %v2425 = vsel %vm1960, %v2407, %v2409
          %v2426 = vsel %vm1960, %v2419, %v2407
          %2427 = vst [vmem:[#allocation2 + $0x70] sm:$0xff] %v2425
          %2428 = vst [vmem:[#allocation2 + $0x78] sm:$0xff] %v2424
          %2429 = vst [vmem:[#allocation2 + $0x80] sm:$0xff] %v2423
          %2430 = vst [vmem:[#allocation2 + $0x88] sm:$0xff] %v2422
          %2431 = vst [vmem:[#allocation2 + $0x90] sm:$0xff] %v2421
          %2432 = vst [vmem:[#allocation2 + $0x98] sm:$0xff] %v2420
          %2433 = vst [vmem:[#allocation2 + $0xa0] sm:$0xff] %v2426
          %2434 = vrot.lane.b32.xlu0 %v2358, 72
          %v2435 = vpop.permute.xlu0 %2434
          %2436 = vrot.lane.b32.xlu0 %v2359, 72
          %v2437 = vpop.permute.xlu0 %2436
          %2438 = vrot.lane.b32.xlu0 %v2360, 72
          %v2439 = vpop.permute.xlu0 %2438
          %2440 = vrot.lane.b32.xlu0 %v2361, 72
          %v2441 = vpop.permute.xlu0 %2440
          %2442 = vrot.lane.b32.xlu0 %v2362, 72
          %v2443 = vpop.permute.xlu0 %2442
          %2444 = vrot.lane.b32.xlu0 %v2363, 72
          %v2445 = vpop.permute.xlu0 %2444
          %2446 = vrot.lane.b32.xlu0 %v2364, 72
          %v2447 = vpop.permute.xlu0 %2446
          %v2448 = vsel %vm488, %v2445, %v2447
          %v2449 = vsel %vm488, %v2443, %v2445
          %v2450 = vsel %vm488, %v2441, %v2443
          %v2451 = vsel %vm488, %v2439, %v2441
          %v2452 = vsel %vm488, %v2437, %v2439
          %v2453 = vsel %vm488, %v2435, %v2437
          %v2454 = vsel %vm488, %v2447, %v2435
          %2455 = vst [vmem:[#allocation2 + $0xa8] sm:$0xff] %v2453
          %2456 = vst [vmem:[#allocation2 + $0xb0] sm:$0xff] %v2452
          %2457 = vst [vmem:[#allocation2 + $0xb8] sm:$0xff] %v2451
          %2458 = vst [vmem:[#allocation2 + $0xc0] sm:$0xff] %v2450
          %2459 = vst [vmem:[#allocation2 + $0xc8] sm:$0xff] %v2449
          %2460 = vst [vmem:[#allocation2 + $0xd0] sm:$0xff] %v2448
          %2461 = vst [vmem:[#allocation2 + $0xd8] sm:$0xff] %v2454
          %2462 = vrot.lane.b32.xlu0 %v2358, 70
          %v2463 = vpop.permute.xlu0 %2462
          %2464 = vrot.lane.b32.xlu0 %v2359, 70
          %v2465 = vpop.permute.xlu0 %2464
          %2466 = vrot.lane.b32.xlu0 %v2360, 70
          %v2467 = vpop.permute.xlu0 %2466
          %2468 = vrot.lane.b32.xlu0 %v2361, 70
          %v2469 = vpop.permute.xlu0 %2468
          %2470 = vrot.lane.b32.xlu0 %v2362, 70
          %v2471 = vpop.permute.xlu0 %2470
          %2472 = vrot.lane.b32.xlu0 %v2363, 70
          %v2473 = vpop.permute.xlu0 %2472
          %2474 = vrot.lane.b32.xlu0 %v2364, 70
          %v2475 = vpop.permute.xlu0 %2474
          %v2476 = vsel %vm582, %v2473, %v2475
          %v2477 = vsel %vm582, %v2471, %v2473
          %v2478 = vsel %vm582, %v2469, %v2471
          %v2479 = vsel %vm582, %v2467, %v2469
          %v2480 = vsel %vm582, %v2465, %v2467
          %v2481 = vsel %vm582, %v2463, %v2465
          %v2482 = vsel %vm582, %v2475, %v2463
          %2483 = vst [vmem:[#allocation2 + $0xe0] sm:$0xff] %v2481
          %2484 = vst [vmem:[#allocation2 + $0xe8] sm:$0xff] %v2480
          %2485 = vst [vmem:[#allocation2 + $0xf0] sm:$0xff] %v2479
          %2486 = vst [vmem:[#allocation2 + $0xf8] sm:$0xff] %v2478
          %2487 = vst [vmem:[#allocation2 + $0x100] sm:$0xff] %v2477
          %2488 = vst [vmem:[#allocation2 + $0x108] sm:$0xff] %v2476
          %2489 = vst [vmem:[#allocation2 + $0x110] sm:$0xff] %v2482
          %2490 = vrot.lane.b32.xlu0 %v2358, 68
          %v2491 = vpop.permute.xlu0 %2490
          %2492 = vrot.lane.b32.xlu0 %v2359, 68
          %v2493 = vpop.permute.xlu0 %2492
          %2494 = vrot.lane.b32.xlu0 %v2360, 68
          %v2495 = vpop.permute.xlu0 %2494
          %2496 = vrot.lane.b32.xlu0 %v2361, 68
          %v2497 = vpop.permute.xlu0 %2496
          %2498 = vrot.lane.b32.xlu0 %v2362, 68
          %v2499 = vpop.permute.xlu0 %2498
          %2500 = vrot.lane.b32.xlu0 %v2363, 68
          %v2501 = vpop.permute.xlu0 %2500
          %2502 = vrot.lane.b32.xlu0 %v2364, 68
          %v2503 = vpop.permute.xlu0 %2502
          %v2504 = vsel %vm2045, %v2501, %v2503
          %v2505 = vsel %vm2045, %v2499, %v2501
          %v2506 = vsel %vm2045, %v2497, %v2499
          %v2507 = vsel %vm2045, %v2495, %v2497
          %v2508 = vsel %vm2045, %v2493, %v2495
          %v2509 = vsel %vm2045, %v2491, %v2493
          %v2510 = vsel %vm2045, %v2503, %v2491
          %2511 = vst [vmem:[#allocation2 + $0x118] sm:$0xff] %v2509
          %2512 = vst [vmem:[#allocation2 + $0x120] sm:$0xff] %v2508
          %2513 = vst [vmem:[#allocation2 + $0x128] sm:$0xff] %v2507
          %2514 = vst [vmem:[#allocation2 + $0x130] sm:$0xff] %v2506
          %2515 = vst [vmem:[#allocation2 + $0x138] sm:$0xff] %v2505
          %2516 = vst [vmem:[#allocation2 + $0x140] sm:$0xff] %v2504
          %2517 = vst [vmem:[#allocation2 + $0x148] sm:$0xff] %v2510
          %2518 = vrot.lane.b32.xlu0 %v2358, 16
          %v2519 = vpop.permute.xlu0 %2518
          %2520 = vrot.lane.b32.xlu0 %v2359, 16
          %v2521 = vpop.permute.xlu0 %2520
          %2522 = vrot.lane.b32.xlu0 %v2360, 16
          %v2523 = vpop.permute.xlu0 %2522
          %2524 = vrot.lane.b32.xlu0 %v2361, 16
          %v2525 = vpop.permute.xlu0 %2524
          %2526 = vrot.lane.b32.xlu0 %v2362, 16
          %v2527 = vpop.permute.xlu0 %2526
          %2528 = vrot.lane.b32.xlu0 %v2363, 16
          %v2529 = vpop.permute.xlu0 %2528
          %2530 = vrot.lane.b32.xlu0 %v2364, 16
          %v2531 = vpop.permute.xlu0 %2530
          %v2532 = vsel %vm2074, %v2529, %v2531
          %v2533 = vsel %vm2074, %v2527, %v2529
          %v2534 = vsel %vm2074, %v2525, %v2527
          %v2535 = vsel %vm2074, %v2523, %v2525
          %v2536 = vsel %vm2074, %v2521, %v2523
          %v2537 = vsel %vm2074, %v2519, %v2521
          %v2538 = vsel %vm2074, %v2531, %v2519
          %2539 = vst [vmem:[#allocation2 + $0x150] sm:$0xff] %v2537
          %2540 = vst [vmem:[#allocation2 + $0x158] sm:$0xff] %v2536
          %2541 = vst [vmem:[#allocation2 + $0x160] sm:$0xff] %v2535
          %2542 = vst [vmem:[#allocation2 + $0x168] sm:$0xff] %v2534
          %2543 = vst [vmem:[#allocation2 + $0x170] sm:$0xff] %v2533
          %2544 = vst [vmem:[#allocation2 + $0x178] sm:$0xff] %v2532
          %2545 = vst [vmem:[#allocation2 + $0x180] sm:$0xff] %v2538
          %2546 = vrot.lane.b32.xlu0 %v2358, 14
          %v2547 = vpop.permute.xlu0 %2546
          %2548 = vrot.lane.b32.xlu0 %v2359, 14
          %v2549 = vpop.permute.xlu0 %2548
          %2550 = vrot.lane.b32.xlu0 %v2360, 14
          %v2551 = vpop.permute.xlu0 %2550
          %2552 = vrot.lane.b32.xlu0 %v2361, 14
          %v2553 = vpop.permute.xlu0 %2552
          %2554 = vrot.lane.b32.xlu0 %v2362, 14
          %v2555 = vpop.permute.xlu0 %2554
          %2556 = vrot.lane.b32.xlu0 %v2363, 14
          %v2557 = vpop.permute.xlu0 %2556
          %2558 = vrot.lane.b32.xlu0 %v2364, 14
          %v2559 = vpop.permute.xlu0 %2558
          %v2560 = vsel %vm2103, %v2557, %v2559
          %v2561 = vsel %vm2103, %v2555, %v2557
          %v2562 = vsel %vm2103, %v2553, %v2555
          %v2563 = vsel %vm2103, %v2551, %v2553
          %v2564 = vsel %vm2103, %v2549, %v2551
          %v2565 = vsel %vm2103, %v2547, %v2549
          %v2566 = vsel %vm2103, %v2559, %v2547
          %2567 = vst [vmem:[#allocation2 + $0x188] sm:$0xff] %v2565
          %2568 = vst [vmem:[#allocation2 + $0x190] sm:$0xff] %v2564
          %2569 = vst [vmem:[#allocation2 + $0x198] sm:$0xff] %v2563
          %2570 = vst [vmem:[#allocation2 + $0x1a0] sm:$0xff] %v2562
          %2571 = vst [vmem:[#allocation2 + $0x1a8] sm:$0xff] %v2561
          %2572 = vst [vmem:[#allocation2 + $0x1b0] sm:$0xff] %v2560
          %2573 = vst [vmem:[#allocation2 + $0x1b8] sm:$0xff] %v2566
          %2574 = vrot.lane.b32.xlu0 %v2358, 12
          %v2575 = vpop.permute.xlu0 %2574
          %2576 = vrot.lane.b32.xlu0 %v2359, 12
          %v2577 = vpop.permute.xlu0 %2576
          %2578 = vrot.lane.b32.xlu0 %v2360, 12
          %v2579 = vpop.permute.xlu0 %2578
          %2580 = vrot.lane.b32.xlu0 %v2361, 12
          %v2581 = vpop.permute.xlu0 %2580
          %2582 = vrot.lane.b32.xlu0 %v2362, 12
          %v2583 = vpop.permute.xlu0 %2582
          %2584 = vrot.lane.b32.xlu0 %v2363, 12
          %v2585 = vpop.permute.xlu0 %2584
          %2586 = vrot.lane.b32.xlu0 %v2364, 12
          %v2587 = vpop.permute.xlu0 %2586
          %v2588 = vsel %vm2132, %v2585, %v2587
          %v2589 = vsel %vm2132, %v2583, %v2585
          %v2590 = vsel %vm2132, %v2581, %v2583
          %v2591 = vsel %vm2132, %v2579, %v2581
          %v2592 = vsel %vm2132, %v2577, %v2579
          %v2593 = vsel %vm2132, %v2575, %v2577
          %v2594 = vsel %vm2132, %v2587, %v2575
          %2595 = vst [vmem:[#allocation2 + $0x1c0] sm:$0xff] %v2593
          %2596 = vst [vmem:[#allocation2 + $0x1c8] sm:$0xff] %v2592
          %2597 = vst [vmem:[#allocation2 + $0x1d0] sm:$0xff] %v2591
          %2598 = vst [vmem:[#allocation2 + $0x1d8] sm:$0xff] %v2590
          %2599 = vst [vmem:[#allocation2 + $0x1e0] sm:$0xff] %v2589
          %2600 = vst [vmem:[#allocation2 + $0x1e8] sm:$0xff] %v2588
          %2601 = vst [vmem:[#allocation2 + $0x1f0] sm:$0xff] %v2594
          %v2602 = vld [vmem:[#allocation2] sm:$0xff]
          %v2603 = vld [vmem:[#allocation2 + $0x8] sm:$0xff]
          %v2604 = vld [vmem:[#allocation2 + $0x10] sm:$0xff]
          %v2605 = vld [vmem:[#allocation2 + $0x18] sm:$0xff]
          %v2606 = vld [vmem:[#allocation2 + $0x20] sm:$0xff]
          %v2607 = vld [vmem:[#allocation2 + $0x28] sm:$0xff]
          %v2608 = vld [vmem:[#allocation2 + $0x30] sm:$0xff]
          %v2609 = vld [vmem:[#allocation2 + $0x38] sm:$0xff]
          %v2610 = vld [vmem:[#allocation2 + $0x40] sm:$0xff]
          %v2611 = vld [vmem:[#allocation2 + $0x48] sm:$0xff]
          %v2612 = vld [vmem:[#allocation2 + $0x50] sm:$0xff]
          %v2613 = vld [vmem:[#allocation2 + $0x58] sm:$0xff]
          %v2614 = vld [vmem:[#allocation2 + $0x60] sm:$0xff]
          %v2615 = vld [vmem:[#allocation2 + $0x68] sm:$0xff]
          %v2616 = vld [vmem:[#allocation2 + $0x70] sm:$0xff]
          %v2617 = vld [vmem:[#allocation2 + $0x78] sm:$0xff]
          %v2618 = vld [vmem:[#allocation2 + $0x80] sm:$0xff]
          %v2619 = vld [vmem:[#allocation2 + $0x88] sm:$0xff]
          %v2620 = vld [vmem:[#allocation2 + $0x90] sm:$0xff]
          %v2621 = vld [vmem:[#allocation2 + $0x98] sm:$0xff]
          %v2622 = vld [vmem:[#allocation2 + $0xa0] sm:$0xff]
          %v2623 = vld [vmem:[#allocation2 + $0xa8] sm:$0xff]
          %v2624 = vld [vmem:[#allocation2 + $0xb0] sm:$0xff]
          %v2625 = vld [vmem:[#allocation2 + $0xb8] sm:$0xff]
          %v2626 = vld [vmem:[#allocation2 + $0xc0] sm:$0xff]
          %v2627 = vld [vmem:[#allocation2 + $0xc8] sm:$0xff]
          %v2628 = vld [vmem:[#allocation2 + $0xd0] sm:$0xff]
          %v2629 = vld [vmem:[#allocation2 + $0xd8] sm:$0xff]
          %v2630 = vld [vmem:[#allocation2 + $0xe0] sm:$0xff]
          %v2631 = vld [vmem:[#allocation2 + $0xe8] sm:$0xff]
          %v2632 = vld [vmem:[#allocation2 + $0xf0] sm:$0xff]
          %v2633 = vld [vmem:[#allocation2 + $0xf8] sm:$0xff]
          %v2634 = vld [vmem:[#allocation2 + $0x100] sm:$0xff]
          %v2635 = vld [vmem:[#allocation2 + $0x108] sm:$0xff]
          %v2636 = vld [vmem:[#allocation2 + $0x110] sm:$0xff]
          %v2637 = vld [vmem:[#allocation2 + $0x118] sm:$0xff]
          %v2638 = vld [vmem:[#allocation2 + $0x120] sm:$0xff]
          %v2639 = vld [vmem:[#allocation2 + $0x128] sm:$0xff]
          %v2640 = vld [vmem:[#allocation2 + $0x130] sm:$0xff]
          %v2641 = vld [vmem:[#allocation2 + $0x138] sm:$0xff]
          %v2642 = vld [vmem:[#allocation2 + $0x140] sm:$0xff]
          %v2643 = vld [vmem:[#allocation2 + $0x148] sm:$0xff]
          %v2644 = vld [vmem:[#allocation2 + $0x150] sm:$0xff]
          %v2645 = vld [vmem:[#allocation2 + $0x158] sm:$0xff]
          %v2646 = vld [vmem:[#allocation2 + $0x160] sm:$0xff]
          %v2647 = vld [vmem:[#allocation2 + $0x168] sm:$0xff]
          %v2648 = vld [vmem:[#allocation2 + $0x170] sm:$0xff]
          %v2649 = vld [vmem:[#allocation2 + $0x178] sm:$0xff]
          %v2650 = vld [vmem:[#allocation2 + $0x180] sm:$0xff]
          %v2651 = vld [vmem:[#allocation2 + $0x188] sm:$0xff]
          %v2652 = vld [vmem:[#allocation2 + $0x190] sm:$0xff]
          %v2653 = vld [vmem:[#allocation2 + $0x198] sm:$0xff]
          %v2654 = vld [vmem:[#allocation2 + $0x1a0] sm:$0xff]
          %v2655 = vld [vmem:[#allocation2 + $0x1a8] sm:$0xff]
          %v2656 = vld [vmem:[#allocation2 + $0x1b0] sm:$0xff]
          %v2657 = vld [vmem:[#allocation2 + $0x1b8] sm:$0xff]
          %v2658 = vld [vmem:[#allocation2 + $0x1c0] sm:$0xff]
          %v2659 = vld [vmem:[#allocation2 + $0x1c8] sm:$0xff]
          %v2660 = vld [vmem:[#allocation2 + $0x1d0] sm:$0xff]
          %v2661 = vld [vmem:[#allocation2 + $0x1d8] sm:$0xff]
          %v2662 = vld [vmem:[#allocation2 + $0x1e0] sm:$0xff]
          %v2663 = vld [vmem:[#allocation2 + $0x1e8] sm:$0xff]
          %v2664 = vld [vmem:[#allocation2 + $0x1f0] sm:$0xff]
          %2666 = vset.pattern.permute.xlu0 0
          %2667 = vperm.xlu0 %2666, %v2369
          %v2668 = vpop.permute.xlu0 %2667
          %2671 = vset.pattern.permute.xlu0 0
          %2672 = vperm.xlu0 %2671, %v2370
          %v2673 = vpop.permute.xlu0 %2672
          %v2676 = vsel %vm937, %v2366, 0
          %v2679 = vsel %vm937, %v2367, 0
          %2681 = vmatpush.msra.mxu0 0.0
          %2682 = vmatpush.msra.mxu0 0.0
          %2683 = vmatpush.msra.mxu0 0.0
          %2684 = vmatpush.msra.mxu0 0.0
          %2685 = vmatpush.msra.mxu0 0.0
          %2686 = vmatpush.msra.mxu0 0.0
          %2687 = vmatpush.msra.mxu0 0.0
          %2688 = vmatpush.msra.mxu0 %v2658
          %2689 = vmatpush.msra.mxu0 %v2651
          %2690 = vmatpush.msra.mxu0 %v2644
          %2691 = vmatpush.msra.mxu0 %v2637
          %2692 = vmatpush.msra.mxu0 %v2630
          %2693 = vmatpush.msra.mxu0 %v2623
          %2694 = vmatpush.msra.mxu0 %v2616
          %2695 = vmatpush.msra.mxu0 %v2609
          %2696 = vmatpush.msra.mxu0 %v2602
          %2697 = vmatmul.f32.gmra.mxu0 %v2676
          %v2698 = vpop.f32.mrf.mxu0
          %v2699 = vadd.f32 %v2668, %v2698
          %2700 = vmatmul.f32.gmra.mxu0 %v2679
          %v2701 = vpop.f32.mrf.mxu0
          %v2702 = vadd.f32 %v2673, %v2701
          %2703 = vdwg.mxu0
          %2704 = vmatpush.msra.mxu0 0.0
          %2705 = vmatpush.msra.mxu0 0.0
          %2706 = vmatpush.msra.mxu0 0.0
          %2707 = vmatpush.msra.mxu0 0.0
          %2708 = vmatpush.msra.mxu0 0.0
          %2709 = vmatpush.msra.mxu0 0.0
          %2710 = vmatpush.msra.mxu0 0.0
          %2711 = vmatpush.msra.mxu0 %v2659
          %2712 = vmatpush.msra.mxu0 %v2652
          %2713 = vmatpush.msra.mxu0 %v2645
          %2714 = vmatpush.msra.mxu0 %v2638
          %2715 = vmatpush.msra.mxu0 %v2631
          %2716 = vmatpush.msra.mxu0 %v2624
          %2717 = vmatpush.msra.mxu0 %v2617
          %2718 = vmatpush.msra.mxu0 %v2610
          %2719 = vmatpush.msra.mxu0 %v2603
          %2720 = vmatmul.f32.gmra.mxu0 %v2676
          %v2721 = vpop.f32.mrf.mxu0
          %v2722 = vadd.f32 %v2668, %v2721
          %2723 = vmatmul.f32.gmra.mxu0 %v2679
          %v2724 = vpop.f32.mrf.mxu0
          %v2725 = vadd.f32 %v2673, %v2724
          %2726 = vdwg.mxu0
          %2727 = vmatpush.msra.mxu0 0.0
          %2728 = vmatpush.msra.mxu0 0.0
          %2729 = vmatpush.msra.mxu0 0.0
          %2730 = vmatpush.msra.mxu0 0.0
          %2731 = vmatpush.msra.mxu0 0.0
          %2732 = vmatpush.msra.mxu0 0.0
          %2733 = vmatpush.msra.mxu0 0.0
          %2734 = vmatpush.msra.mxu0 %v2660
          %2735 = vmatpush.msra.mxu0 %v2653
          %2736 = vmatpush.msra.mxu0 %v2646
          %2737 = vmatpush.msra.mxu0 %v2639
          %2738 = vmatpush.msra.mxu0 %v2632
          %2739 = vmatpush.msra.mxu0 %v2625
          %2740 = vmatpush.msra.mxu0 %v2618
          %2741 = vmatpush.msra.mxu0 %v2611
          %2742 = vmatpush.msra.mxu0 %v2604
          %2743 = vmatmul.f32.gmra.mxu0 %v2676
          %v2744 = vpop.f32.mrf.mxu0
          %v2745 = vadd.f32 %v2668, %v2744
          %2746 = vmatmul.f32.gmra.mxu0 %v2679
          %v2747 = vpop.f32.mrf.mxu0
          %v2748 = vadd.f32 %v2673, %v2747
          %2749 = vdwg.mxu0
          %2750 = vmatpush.msra.mxu0 0.0
          %2751 = vmatpush.msra.mxu0 0.0
          %2752 = vmatpush.msra.mxu0 0.0
          %2753 = vmatpush.msra.mxu0 0.0
          %2754 = vmatpush.msra.mxu0 0.0
          %2755 = vmatpush.msra.mxu0 0.0
          %2756 = vmatpush.msra.mxu0 0.0
          %2757 = vmatpush.msra.mxu0 %v2661
          %2758 = vmatpush.msra.mxu0 %v2654
          %2759 = vmatpush.msra.mxu0 %v2647
          %2760 = vmatpush.msra.mxu0 %v2640
          %2761 = vmatpush.msra.mxu0 %v2633
          %2762 = vmatpush.msra.mxu0 %v2626
          %2763 = vmatpush.msra.mxu0 %v2619
          %2764 = vmatpush.msra.mxu0 %v2612
          %2765 = vmatpush.msra.mxu0 %v2605
          %2766 = vmatmul.f32.gmra.mxu0 %v2676
          %v2767 = vpop.f32.mrf.mxu0
          %v2768 = vadd.f32 %v2668, %v2767
          %2769 = vmatmul.f32.gmra.mxu0 %v2679
          %v2770 = vpop.f32.mrf.mxu0
          %v2771 = vadd.f32 %v2673, %v2770
          %2772 = vdwg.mxu0
          %2773 = vmatpush.msra.mxu0 0.0
          %2774 = vmatpush.msra.mxu0 0.0
          %2775 = vmatpush.msra.mxu0 0.0
          %2776 = vmatpush.msra.mxu0 0.0
          %2777 = vmatpush.msra.mxu0 0.0
          %2778 = vmatpush.msra.mxu0 0.0
          %2779 = vmatpush.msra.mxu0 0.0
          %2780 = vmatpush.msra.mxu0 %v2662
          %2781 = vmatpush.msra.mxu0 %v2655
          %2782 = vmatpush.msra.mxu0 %v2648
          %2783 = vmatpush.msra.mxu0 %v2641
          %2784 = vmatpush.msra.mxu0 %v2634
          %2785 = vmatpush.msra.mxu0 %v2627
          %2786 = vmatpush.msra.mxu0 %v2620
          %2787 = vmatpush.msra.mxu0 %v2613
          %2788 = vmatpush.msra.mxu0 %v2606
          %2789 = vmatmul.f32.gmra.mxu0 %v2676
          %v2790 = vpop.f32.mrf.mxu0
          %v2791 = vadd.f32 %v2668, %v2790
          %2792 = vmatmul.f32.gmra.mxu0 %v2679
          %v2793 = vpop.f32.mrf.mxu0
          %v2794 = vadd.f32 %v2673, %v2793
          %2795 = vdwg.mxu0
          %2796 = vmatpush.msra.mxu0 0.0
          %2797 = vmatpush.msra.mxu0 0.0
          %2798 = vmatpush.msra.mxu0 0.0
          %2799 = vmatpush.msra.mxu0 0.0
          %2800 = vmatpush.msra.mxu0 0.0
          %2801 = vmatpush.msra.mxu0 0.0
          %2802 = vmatpush.msra.mxu0 0.0
          %2803 = vmatpush.msra.mxu0 %v2663
          %2804 = vmatpush.msra.mxu0 %v2656
          %2805 = vmatpush.msra.mxu0 %v2649
          %2806 = vmatpush.msra.mxu0 %v2642
          %2807 = vmatpush.msra.mxu0 %v2635
          %2808 = vmatpush.msra.mxu0 %v2628
          %2809 = vmatpush.msra.mxu0 %v2621
          %2810 = vmatpush.msra.mxu0 %v2614
          %2811 = vmatpush.msra.mxu0 %v2607
          %2812 = vmatmul.f32.gmra.mxu0 %v2676
          %v2813 = vpop.f32.mrf.mxu0
          %v2814 = vadd.f32 %v2668, %v2813
          %2815 = vmatmul.f32.gmra.mxu0 %v2679
          %v2816 = vpop.f32.mrf.mxu0
          %v2817 = vadd.f32 %v2673, %v2816
          %2818 = vdwg.mxu0
          %2819 = vmatpush.msra.mxu0 0.0
          %2820 = vmatpush.msra.mxu0 0.0
          %2821 = vmatpush.msra.mxu0 0.0
          %2822 = vmatpush.msra.mxu0 0.0
          %2823 = vmatpush.msra.mxu0 0.0
          %2824 = vmatpush.msra.mxu0 0.0
          %2825 = vmatpush.msra.mxu0 0.0
          %2826 = vmatpush.msra.mxu0 %v2664
          %2827 = vmatpush.msra.mxu0 %v2657
          %2828 = vmatpush.msra.mxu0 %v2650
          %2829 = vmatpush.msra.mxu0 %v2643
          %2830 = vmatpush.msra.mxu0 %v2636
          %2831 = vmatpush.msra.mxu0 %v2629
          %2832 = vmatpush.msra.mxu0 %v2622
          %2833 = vmatpush.msra.mxu0 %v2615
          %2834 = vmatpush.msra.mxu0 %v2608
          %2835 = vmatmul.f32.gmra.mxu0 %v2676
          %v2836 = vpop.f32.mrf.mxu0
          %v2837 = vadd.f32 %v2668, %v2836
          %2838 = vmatmul.f32.gmra.mxu0 %v2679
          %v2839 = vpop.f32.mrf.mxu0
          %v2840 = vadd.f32 %v2673, %v2839
          %2841 = vdwg.mxu0
          %v2842 = vmax.f32 %v2699, 0.0
          %v2843 = vmax.f32 %v2722, 0.0
          %v2844 = vmax.f32 %v2745, 0.0
          %v2845 = vmax.f32 %v2768, 0.0
          %v2846 = vmax.f32 %v2791, 0.0
          %v2847 = vmax.f32 %v2814, 0.0
          %v2848 = vmax.f32 %v2837, 0.0
          %v2849 = vmax.f32 %v2702, 0.0
          %v2850 = vmax.f32 %v2725, 0.0
          %v2851 = vmax.f32 %v2748, 0.0
          %v2852 = vmax.f32 %v2771, 0.0
          %v2853 = vmax.f32 %v2794, 0.0
          %v2854 = vmax.f32 %v2817, 0.0
          %v2855 = vmax.f32 %v2840, 0.0
          %s2856 = scalar_lea.vmem %s2, 96
          %v2857 = vld [vmem:[%s2856] sm:$0xff]
          %v2858 = vld [vmem:[%s2856 + $0x8] sm:$0xff]
          %s2859 = scalar_lea.vmem %s3, 96
          %v2860 = vld [vmem:[%s2859] sm:$0xff]
          %v2861 = vld [vmem:[%s2859 + $0x8] sm:$0xff]
          %2863 = vset.pattern.permute.xlu0 0
          %2864 = vperm.xlu0 %2863, %v2860
          %v2865 = vpop.permute.xlu0 %2864
          %2868 = vset.pattern.permute.xlu0 0
          %2869 = vperm.xlu0 %2868, %v2861
          %v2870 = vpop.permute.xlu0 %2869
          %v2873 = vsel %vm1756, %v2857, 0
          %v2876 = vsel %vm1756, %v2858, 0
          %2878 = vmatpush.msra.mxu0 0.0
          %2879 = vmatpush.msra.mxu0 0.0
          %2880 = vmatpush.msra.mxu0 0.0
          %2881 = vmatpush.msra.mxu0 0.0
          %2882 = vmatpush.msra.mxu0 0.0
          %2883 = vmatpush.msra.mxu0 0.0
          %2884 = vmatpush.msra.mxu0 0.0
          %2885 = vmatpush.msra.mxu0 0.0
          %2886 = vmatpush.msra.mxu0 0.0
          %2887 = vmatpush.msra.mxu0 0.0
          %2888 = vmatpush.msra.mxu0 0.0
          %2889 = vmatpush.msra.mxu0 0.0
          %2890 = vmatpush.msra.mxu0 0.0
          %2891 = vmatpush.msra.mxu0 0.0
          %2892 = vmatpush.msra.mxu0 %v2849
          %2893 = vmatpush.msra.mxu0 %v2842
          %2894 = vmatmul.f32.gmra.mxu0 %v2873
          %v2895 = vpop.f32.mrf.mxu0
          %v2896 = vadd.f32 %v2865, %v2895
          %2897 = vmatmul.f32.gmra.mxu0 %v2876
          %v2898 = vpop.f32.mrf.mxu0
          %v2899 = vadd.f32 %v2870, %v2898
          %2900 = vdwg.mxu0
          %2901 = vmatpush.msra.mxu0 0.0
          %2902 = vmatpush.msra.mxu0 0.0
          %2903 = vmatpush.msra.mxu0 0.0
          %2904 = vmatpush.msra.mxu0 0.0
          %2905 = vmatpush.msra.mxu0 0.0
          %2906 = vmatpush.msra.mxu0 0.0
          %2907 = vmatpush.msra.mxu0 0.0
          %2908 = vmatpush.msra.mxu0 0.0
          %2909 = vmatpush.msra.mxu0 0.0
          %2910 = vmatpush.msra.mxu0 0.0
          %2911 = vmatpush.msra.mxu0 0.0
          %2912 = vmatpush.msra.mxu0 0.0
          %2913 = vmatpush.msra.mxu0 0.0
          %2914 = vmatpush.msra.mxu0 0.0
          %2915 = vmatpush.msra.mxu0 %v2850
          %2916 = vmatpush.msra.mxu0 %v2843
          %2917 = vmatmul.f32.gmra.mxu0 %v2873
          %v2918 = vpop.f32.mrf.mxu0
          %v2919 = vadd.f32 %v2865, %v2918
          %2920 = vmatmul.f32.gmra.mxu0 %v2876
          %v2921 = vpop.f32.mrf.mxu0
          %v2922 = vadd.f32 %v2870, %v2921
          %2923 = vdwg.mxu0
          %2924 = vmatpush.msra.mxu0 0.0
          %2925 = vmatpush.msra.mxu0 0.0
          %2926 = vmatpush.msra.mxu0 0.0
          %2927 = vmatpush.msra.mxu0 0.0
          %2928 = vmatpush.msra.mxu0 0.0
          %2929 = vmatpush.msra.mxu0 0.0
          %2930 = vmatpush.msra.mxu0 0.0
          %2931 = vmatpush.msra.mxu0 0.0
          %2932 = vmatpush.msra.mxu0 0.0
          %2933 = vmatpush.msra.mxu0 0.0
          %2934 = vmatpush.msra.mxu0 0.0
          %2935 = vmatpush.msra.mxu0 0.0
          %2936 = vmatpush.msra.mxu0 0.0
          %2937 = vmatpush.msra.mxu0 0.0
          %2938 = vmatpush.msra.mxu0 %v2851
          %2939 = vmatpush.msra.mxu0 %v2844
          %2940 = vmatmul.f32.gmra.mxu0 %v2873
          %v2941 = vpop.f32.mrf.mxu0
          %v2942 = vadd.f32 %v2865, %v2941
          %2943 = vmatmul.f32.gmra.mxu0 %v2876
          %v2944 = vpop.f32.mrf.mxu0
          %v2945 = vadd.f32 %v2870, %v2944
          %2946 = vdwg.mxu0
          %2947 = vmatpush.msra.mxu0 0.0
          %2948 = vmatpush.msra.mxu0 0.0
          %2949 = vmatpush.msra.mxu0 0.0
          %2950 = vmatpush.msra.mxu0 0.0
          %2951 = vmatpush.msra.mxu0 0.0
          %2952 = vmatpush.msra.mxu0 0.0
          %2953 = vmatpush.msra.mxu0 0.0
          %2954 = vmatpush.msra.mxu0 0.0
          %2955 = vmatpush.msra.mxu0 0.0
          %2956 = vmatpush.msra.mxu0 0.0
          %2957 = vmatpush.msra.mxu0 0.0
          %2958 = vmatpush.msra.mxu0 0.0
          %2959 = vmatpush.msra.mxu0 0.0
          %2960 = vmatpush.msra.mxu0 0.0
          %2961 = vmatpush.msra.mxu0 %v2852
          %2962 = vmatpush.msra.mxu0 %v2845
          %2963 = vmatmul.f32.gmra.mxu0 %v2873
          %v2964 = vpop.f32.mrf.mxu0
          %v2965 = vadd.f32 %v2865, %v2964
          %2966 = vmatmul.f32.gmra.mxu0 %v2876
          %v2967 = vpop.f32.mrf.mxu0
          %v2968 = vadd.f32 %v2870, %v2967
          %2969 = vdwg.mxu0
          %2970 = vmatpush.msra.mxu0 0.0
          %2971 = vmatpush.msra.mxu0 0.0
          %2972 = vmatpush.msra.mxu0 0.0
          %2973 = vmatpush.msra.mxu0 0.0
          %2974 = vmatpush.msra.mxu0 0.0
          %2975 = vmatpush.msra.mxu0 0.0
          %2976 = vmatpush.msra.mxu0 0.0
          %2977 = vmatpush.msra.mxu0 0.0
          %2978 = vmatpush.msra.mxu0 0.0
          %2979 = vmatpush.msra.mxu0 0.0
          %2980 = vmatpush.msra.mxu0 0.0
          %2981 = vmatpush.msra.mxu0 0.0
          %2982 = vmatpush.msra.mxu0 0.0
          %2983 = vmatpush.msra.mxu0 0.0
          %2984 = vmatpush.msra.mxu0 %v2853
          %2985 = vmatpush.msra.mxu0 %v2846
          %2986 = vmatmul.f32.gmra.mxu0 %v2873
          %v2987 = vpop.f32.mrf.mxu0
          %v2988 = vadd.f32 %v2865, %v2987
          %2989 = vmatmul.f32.gmra.mxu0 %v2876
          %v2990 = vpop.f32.mrf.mxu0
          %v2991 = vadd.f32 %v2870, %v2990
          %2992 = vdwg.mxu0
          %2993 = vmatpush.msra.mxu0 0.0
          %2994 = vmatpush.msra.mxu0 0.0
          %2995 = vmatpush.msra.mxu0 0.0
          %2996 = vmatpush.msra.mxu0 0.0
          %2997 = vmatpush.msra.mxu0 0.0
          %2998 = vmatpush.msra.mxu0 0.0
          %2999 = vmatpush.msra.mxu0 0.0
          %3000 = vmatpush.msra.mxu0 0.0
          %3001 = vmatpush.msra.mxu0 0.0
          %3002 = vmatpush.msra.mxu0 0.0
          %3003 = vmatpush.msra.mxu0 0.0
          %3004 = vmatpush.msra.mxu0 0.0
          %3005 = vmatpush.msra.mxu0 0.0
          %3006 = vmatpush.msra.mxu0 0.0
          %3007 = vmatpush.msra.mxu0 %v2854
          %3008 = vmatpush.msra.mxu0 %v2847
          %3009 = vmatmul.f32.gmra.mxu0 %v2873
          %v3010 = vpop.f32.mrf.mxu0
          %v3011 = vadd.f32 %v2865, %v3010
          %3012 = vmatmul.f32.gmra.mxu0 %v2876
          %v3013 = vpop.f32.mrf.mxu0
          %v3014 = vadd.f32 %v2870, %v3013
          %3015 = vdwg.mxu0
          %3016 = vmatpush.msra.mxu0 0.0
          %3017 = vmatpush.msra.mxu0 0.0
          %3018 = vmatpush.msra.mxu0 0.0
          %3019 = vmatpush.msra.mxu0 0.0
          %3020 = vmatpush.msra.mxu0 0.0
          %3021 = vmatpush.msra.mxu0 0.0
          %3022 = vmatpush.msra.mxu0 0.0
          %3023 = vmatpush.msra.mxu0 0.0
          %3024 = vmatpush.msra.mxu0 0.0
          %3025 = vmatpush.msra.mxu0 0.0
          %3026 = vmatpush.msra.mxu0 0.0
          %3027 = vmatpush.msra.mxu0 0.0
          %3028 = vmatpush.msra.mxu0 0.0
          %3029 = vmatpush.msra.mxu0 0.0
          %3030 = vmatpush.msra.mxu0 %v2855
          %3031 = vmatpush.msra.mxu0 %v2848
          %3032 = vmatmul.f32.gmra.mxu0 %v2873
          %v3033 = vpop.f32.mrf.mxu0
          %v3034 = vadd.f32 %v2865, %v3033
          %3035 = vmatmul.f32.gmra.mxu0 %v2876
          %v3036 = vpop.f32.mrf.mxu0
          %v3037 = vadd.f32 %v2870, %v3036
          %3038 = vdwg.mxu0
          %v3039 = vmax.f32 %v2896, 0.0
          %v3040 = vmax.f32 %v2919, 0.0
          %v3041 = vmax.f32 %v2942, 0.0
          %v3042 = vmax.f32 %v2965, 0.0
          %v3043 = vmax.f32 %v2988, 0.0
          %v3044 = vmax.f32 %v3011, 0.0
          %v3045 = vmax.f32 %v3034, 0.0
          %v3046 = vmax.f32 %v2899, 0.0
          %v3047 = vmax.f32 %v2922, 0.0
          %v3048 = vmax.f32 %v2945, 0.0
          %v3049 = vmax.f32 %v2968, 0.0
          %v3050 = vmax.f32 %v2991, 0.0
          %v3051 = vmax.f32 %v3014, 0.0
          %v3052 = vmax.f32 %v3037, 0.0
          %v3053 = vld [vmem:[%s1] sm:$0xff]
          %v3055 = vperm.slane %v3053, 0
          %v3056 = vperm.slane %v3053, 1
          %v3057 = vperm.slane %v3053, 2
          %v3058 = vperm.slane %v3053, 3
          %v3059 = vperm.slane %v3053, 4
          %v3060 = vperm.slane %v3053, 5
          %v3061 = vperm.slane %v3053, 6
          %3069 = vmatpush.xpose.msra.mxu0 0.0
          %3070 = vmatpush.xpose.msra.mxu0 0.0
          %3071 = vmatpush.xpose.msra.mxu0 0.0
          %3072 = vmatpush.xpose.msra.mxu0 0.0
          %3073 = vmatpush.xpose.msra.mxu0 0.0
          %3074 = vmatpush.xpose.msra.mxu0 0.0
          %3075 = vmatpush.xpose.msra.mxu0 0.0
          %3076 = vmatpush.xpose.msra.mxu0 0.0
          %3077 = vmatpush.xpose.msra.mxu0 0.0
          %3078 = vmatpush.xpose.msra.mxu0 0.0
          %3079 = vmatpush.xpose.msra.mxu0 0.0
          %3080 = vmatpush.xpose.msra.mxu0 0.0
          %3081 = vmatpush.xpose.msra.mxu0 0.0
          %3082 = vmatpush.xpose.msra.mxu0 0.0
          %3083 = vmatpush.xpose.msra.mxu0 %v3046
          %3084 = vmatpush.xpose.msra.mxu0 %v3039
          %3085 = vmatmul.f32.gmra.mxu0 %v3055
          %v3086 = vpop.f32.mrf.mxu0
          %v3087 = vadd.f32 0.0, %v3086
          %3088 = vdwg.mxu0
          %3089 = vmatpush.xpose.msra.mxu0 0.0
          %3090 = vmatpush.xpose.msra.mxu0 0.0
          %3091 = vmatpush.xpose.msra.mxu0 0.0
          %3092 = vmatpush.xpose.msra.mxu0 0.0
          %3093 = vmatpush.xpose.msra.mxu0 0.0
          %3094 = vmatpush.xpose.msra.mxu0 0.0
          %3095 = vmatpush.xpose.msra.mxu0 0.0
          %3096 = vmatpush.xpose.msra.mxu0 0.0
          %3097 = vmatpush.xpose.msra.mxu0 0.0
          %3098 = vmatpush.xpose.msra.mxu0 0.0
          %3099 = vmatpush.xpose.msra.mxu0 0.0
          %3100 = vmatpush.xpose.msra.mxu0 0.0
          %3101 = vmatpush.xpose.msra.mxu0 0.0
          %3102 = vmatpush.xpose.msra.mxu0 0.0
          %3103 = vmatpush.xpose.msra.mxu0 %v3047
          %3104 = vmatpush.xpose.msra.mxu0 %v3040
          %3105 = vmatmul.f32.gmra.mxu0 %v3056
          %v3106 = vpop.f32.mrf.mxu0
          %v3107 = vadd.f32 %v3087, %v3106
          %3108 = vdwg.mxu0
          %3109 = vmatpush.xpose.msra.mxu0 0.0
          %3110 = vmatpush.xpose.msra.mxu0 0.0
          %3111 = vmatpush.xpose.msra.mxu0 0.0
          %3112 = vmatpush.xpose.msra.mxu0 0.0
          %3113 = vmatpush.xpose.msra.mxu0 0.0
          %3114 = vmatpush.xpose.msra.mxu0 0.0
          %3115 = vmatpush.xpose.msra.mxu0 0.0
          %3116 = vmatpush.xpose.msra.mxu0 0.0
          %3117 = vmatpush.xpose.msra.mxu0 0.0
          %3118 = vmatpush.xpose.msra.mxu0 0.0
          %3119 = vmatpush.xpose.msra.mxu0 0.0
          %3120 = vmatpush.xpose.msra.mxu0 0.0
          %3121 = vmatpush.xpose.msra.mxu0 0.0
          %3122 = vmatpush.xpose.msra.mxu0 0.0
          %3123 = vmatpush.xpose.msra.mxu0 %v3048
          %3124 = vmatpush.xpose.msra.mxu0 %v3041
          %3125 = vmatmul.f32.gmra.mxu0 %v3057
          %v3126 = vpop.f32.mrf.mxu0
          %v3127 = vadd.f32 %v3107, %v3126
          %3128 = vdwg.mxu0
          %3129 = vmatpush.xpose.msra.mxu0 0.0
          %3130 = vmatpush.xpose.msra.mxu0 0.0
          %3131 = vmatpush.xpose.msra.mxu0 0.0
          %3132 = vmatpush.xpose.msra.mxu0 0.0
          %3133 = vmatpush.xpose.msra.mxu0 0.0
          %3134 = vmatpush.xpose.msra.mxu0 0.0
          %3135 = vmatpush.xpose.msra.mxu0 0.0
          %3136 = vmatpush.xpose.msra.mxu0 0.0
          %3137 = vmatpush.xpose.msra.mxu0 0.0
          %3138 = vmatpush.xpose.msra.mxu0 0.0
          %3139 = vmatpush.xpose.msra.mxu0 0.0
          %3140 = vmatpush.xpose.msra.mxu0 0.0
          %3141 = vmatpush.xpose.msra.mxu0 0.0
          %3142 = vmatpush.xpose.msra.mxu0 0.0
          %3143 = vmatpush.xpose.msra.mxu0 %v3049
          %3144 = vmatpush.xpose.msra.mxu0 %v3042
          %3145 = vmatmul.f32.gmra.mxu0 %v3058
          %v3146 = vpop.f32.mrf.mxu0
          %v3147 = vadd.f32 %v3127, %v3146
          %3148 = vdwg.mxu0
          %3149 = vmatpush.xpose.msra.mxu0 0.0
          %3150 = vmatpush.xpose.msra.mxu0 0.0
          %3151 = vmatpush.xpose.msra.mxu0 0.0
          %3152 = vmatpush.xpose.msra.mxu0 0.0
          %3153 = vmatpush.xpose.msra.mxu0 0.0
          %3154 = vmatpush.xpose.msra.mxu0 0.0
          %3155 = vmatpush.xpose.msra.mxu0 0.0
          %3156 = vmatpush.xpose.msra.mxu0 0.0
          %3157 = vmatpush.xpose.msra.mxu0 0.0
          %3158 = vmatpush.xpose.msra.mxu0 0.0
          %3159 = vmatpush.xpose.msra.mxu0 0.0
          %3160 = vmatpush.xpose.msra.mxu0 0.0
          %3161 = vmatpush.xpose.msra.mxu0 0.0
          %3162 = vmatpush.xpose.msra.mxu0 0.0
          %3163 = vmatpush.xpose.msra.mxu0 %v3050
          %3164 = vmatpush.xpose.msra.mxu0 %v3043
          %3165 = vmatmul.f32.gmra.mxu0 %v3059
          %v3166 = vpop.f32.mrf.mxu0
          %v3167 = vadd.f32 %v3147, %v3166
          %3168 = vdwg.mxu0
          %3169 = vmatpush.xpose.msra.mxu0 0.0
          %3170 = vmatpush.xpose.msra.mxu0 0.0
          %3171 = vmatpush.xpose.msra.mxu0 0.0
          %3172 = vmatpush.xpose.msra.mxu0 0.0
          %3173 = vmatpush.xpose.msra.mxu0 0.0
          %3174 = vmatpush.xpose.msra.mxu0 0.0
          %3175 = vmatpush.xpose.msra.mxu0 0.0
          %3176 = vmatpush.xpose.msra.mxu0 0.0
          %3177 = vmatpush.xpose.msra.mxu0 0.0
          %3178 = vmatpush.xpose.msra.mxu0 0.0
          %3179 = vmatpush.xpose.msra.mxu0 0.0
          %3180 = vmatpush.xpose.msra.mxu0 0.0
          %3181 = vmatpush.xpose.msra.mxu0 0.0
          %3182 = vmatpush.xpose.msra.mxu0 0.0
          %3183 = vmatpush.xpose.msra.mxu0 %v3051
          %3184 = vmatpush.xpose.msra.mxu0 %v3044
          %3185 = vmatmul.f32.gmra.mxu0 %v3060
          %v3186 = vpop.f32.mrf.mxu0
          %v3187 = vadd.f32 %v3167, %v3186
          %3188 = vdwg.mxu0
          %3189 = vmatpush.xpose.msra.mxu0 0.0
          %3190 = vmatpush.xpose.msra.mxu0 0.0
          %3191 = vmatpush.xpose.msra.mxu0 0.0
          %3192 = vmatpush.xpose.msra.mxu0 0.0
          %3193 = vmatpush.xpose.msra.mxu0 0.0
          %3194 = vmatpush.xpose.msra.mxu0 0.0
          %3195 = vmatpush.xpose.msra.mxu0 0.0
          %3196 = vmatpush.xpose.msra.mxu0 0.0
          %3197 = vmatpush.xpose.msra.mxu0 0.0
          %3198 = vmatpush.xpose.msra.mxu0 0.0
          %3199 = vmatpush.xpose.msra.mxu0 0.0
          %3200 = vmatpush.xpose.msra.mxu0 0.0
          %3201 = vmatpush.xpose.msra.mxu0 0.0
          %3202 = vmatpush.xpose.msra.mxu0 0.0
          %3203 = vmatpush.xpose.msra.mxu0 %v3052
          %3204 = vmatpush.xpose.msra.mxu0 %v3045
          %3205 = vmatmul.f32.gmra.mxu0 %v3061
          %v3206 = vpop.f32.mrf.mxu0
          %v3207 = vadd.f32 %v3187, %v3206
          %3208 = vdwg.mxu0
          %vm3209 = vcmask 73728
          %v3210 = vsel %vm3209, %v3207, -inf
          %3211 = vmax.xlane.f32.xlu0 %v3210
          %v3212 = vpop.xlane.xlu0 %3211
          %v3213 = vsub.f32 %v3207, %v3212
          %v3214 = vmul.f32 %v3213, 1.442695
          %v3215 = vpow.pop %v3214
          %v3216 = vsel %vm3209, %v3215, 0.0
          %3217 = vadd.xlane.f32.xlu0 %v3216
          %v3218 = vpop.xlane.xlu0 %3217
          %v3219 = vlog2.pop %v3218
          %v3220 = vmul.f32 %v3219, 0.6931472
          %v3221 = vsub.f32 %v3213, %v3220
          %s3222 = scalar_lea.vmem %s191, %s200 [#allocation3]
          %3223 = vst.msk [vmem:[%s3222] sm:$0x1] %vm3209, %v3221
        $region41: #{_lambda_.1} parent=35 // loop_footer
          %s204 = sadd.s32 1, %s200
        $region42: #{_lambda_.1} parent=35 // loop_footer_branch
          %199 = sbr.rel target = $region38
        $region43: #{_lambda_.1} parent=35 // loop_exit
          _
        %s3224 = sand.u32 %s115, 1
        %s3225 = scalar_lea.sflag [#allocation4], %s3224
        %s3226 = sand.u32 %s115, 1
        %s3227 = smul.addr %s3226, 4
        %s3228 = scalar_lea.vmem [#allocation3], %s3227
        // Predicated region
        $region44: #{_lambda_.1} parent=35 // pred_check
          %p3229 = pneg %p125
        $region45: #{_lambda_.1} parent=35 // pred_check_branch
          %3231 = sbr.rel (%p3229) target = $region47
        $region46: #{_lambda_.1} parent=35 // pred_region
          %s3232 = smul.u32 4, %s18
          %3234 = vsyncadd %s3225, 0
          %s3235 = scalar_lea.hbm %s4, %s3232
          %s3236 = sshll.u32 %s3228, 4
          %s3237 = int_to_ptr.vmem [resolvable:$true] %s3236
          %s3238 = sshll.u32 %s3235, 4
          %s3239 = int_to_ptr.hbm [resolvable:$true] %s3238
          %3244 = dma.vmem_to_hbm [thread:$0]  %s3237, 64, %s3239, %s3225, 16, 16, 1
        $region47: #{_lambda_.1} parent=35 // pred_fallthru
          _
      $region36: #{_lambda_.1} parent=5 // pred_fallthru
        _
      %p3245 = scmp.le.s32.totalorder 2, %s13
      // Predicated region
      $region48: #{_lambda_.1} parent=5 // pred_check
        %p3246 = pneg %p3245
      $region49: #{_lambda_.1} parent=5 // pred_check_branch
        %3248 = sbr.rel (%p3246) target = $region51
      $region50: #{_lambda_.1} parent=5 // pred_region
        %s3249 = ssub.s32 %s13, 2
        // Predicated region
        $region52: #{_lambda_.1} parent=50 // pred_check
          %p3250 = pneg %p131
        $region53: #{_lambda_.1} parent=50 // pred_check_branch
          %3252 = sbr.rel (%p3250) target = $region55
        $region54: #{_lambda_.1} parent=50 // pred_region
          %s3253 = sand.u32 %s116, 1
          %s3254 = scalar_lea.sflag [#allocation4], %s3253
          %s3255 = sand.u32 %s116, 1
          %s3256 = smul.addr %s3255, 4
          %s3257 = scalar_lea.vmem [#allocation3], %s3256
          %3259 = dma.done %s3254, 64
        $region55: #{_lambda_.1} parent=50 // pred_fallthru
          _
      $region51: #{_lambda_.1} parent=5 // pred_fallthru
        _
    $region6: #{_lambda_.1} parent=1 // loop_footer
      %s17 = sadd.s32 1, %s13
    $region7: #{_lambda_.1} parent=1 // loop_footer_branch
      %12 = sbr.rel target = $region3
    $region8: #{_lambda_.1} parent=1 // loop_exit
      _
    %3260 = vsyncpa [#allocation4], 1
    %s3261 = scalar_lea.sflag [#allocation4], 1
    %3262 = vsyncpa %s3261, 1

</llo_original>
